<compile_context>
chip_gen: v7x
topology: tpu7x:2x2x1
jax: 0.10.0
libtpu: 0.0.40
codegen_flags: <defaults>
</compile_context>

<pallas_src>
import numpy as np
import jax
import jax.numpy as jnp
from jax.experimental import pallas as pl
from jax.experimental.pallas import tpu as pltpu

# ---------------- small config (consistent with the module's forward) ----------------
B = 2            # batch
S = 8            # encoder sequence length (feature-map width)
C_IN = 32        # backbone_out
ENC_HS = 16      # encoder hidden size (per direction)
C_E = 2 * ENC_HS # bidirectional encoder output channels (Decoder's enc_hs)
DEC_HS = 32      # decoder hidden size
ATTN = 32        # attention size
EMB = 16         # embedding size
ALPHABET = ['ś'] + [chr(ord('a') + i) for i in range(11)]
C2I = {c: i for i, c in enumerate(ALPHABET)}
V = len(ALPHABET)        # alphabet size = 12
SOS_IDX = C2I['ś']       # = 0
T_MAX = 6                # text_max_len

# weight-slab row offsets (bf16 slab, 128 lanes wide)
R_WIHF = 0                        # (C_IN, 128)  fwd input proj, scattered into fused layout
R_WIHB = R_WIHF + C_IN            # (C_IN, 128)  bwd input proj
R_WHH  = R_WIHB + C_IN            # (2*ENC_HS, 128) block-diag recurrent (fused fwd|bwd)
R_DECW = R_WHH + 2 * ENC_HS       # (C_E+DEC_HS, 128) decoder [W_ih_ctx; W_hh]
R_EMBD = R_DECW + (C_E + DEC_HS)  # (V, 128) embedding folded into gate weight (pad to 16 rows)
R_WENC = R_EMBD + 16              # (C_E, 128) encoder_conv weight^T (lanes 0:ATTN used)
R_OWDL = R_WENC + C_E             # (DEC_HS, 128) [att_wdl | out_w] (lanes 0:ATTN+V used)
W_ROWS = R_OWDL + DEC_HS          # 240


# ---------------- deterministic parameter init ----------------
def init_params(key):
    ks = jax.random.split(key, 19)
    nrm = lambda k, shape, s=0.2: s * jax.random.normal(k, shape, dtype=jnp.float32)
    p = {}
    # Encoder: 1-layer bidirectional LSTM (input C_IN, hidden ENC_HS); gate order i,f,g,o
    p['enc_wih_f'] = nrm(ks[0], (C_IN, 4 * ENC_HS))
    p['enc_whh_f'] = nrm(ks[1], (ENC_HS, 4 * ENC_HS))
    p['enc_b_f']   = nrm(ks[2], (1, 4 * ENC_HS))        # b_ih + b_hh folded
    p['enc_wih_b'] = nrm(ks[3], (C_IN, 4 * ENC_HS))
    p['enc_whh_b'] = nrm(ks[4], (ENC_HS, 4 * ENC_HS))
    p['enc_b_b']   = nrm(ks[5], (1, 4 * ENC_HS))
    # BahdanauAttention.encoder_conv : Conv1d(C_E -> ATTN, k=1)
    p['att_wenc']  = nrm(ks[6], (ATTN, C_E))
    p['att_benc']  = nrm(ks[7], (ATTN, 1))
    # BahdanauAttention.decoder_linear : Linear(DEC_HS -> ATTN) (dropout identity in eval)
    p['att_wdl']   = nrm(ks[8], (DEC_HS, ATTN))
    p['att_bdl']   = nrm(ks[9], (1, ATTN))
    # BahdanauAttention.energy_layer : Conv1d(ATTN -> 1, k=1)
    p['att_wen']   = nrm(ks[10], (ATTN, 1))
    p['att_ben']   = nrm(ks[11], (1, 1))   # scalar energy bias: softmax-shift-invariant, unused
    # Decoder embedding
    p['emb']       = nrm(ks[12], (V, EMB))
    # Decoder LSTM: input = [emb, context] (EMB + C_E) -> DEC_HS
    p['dec_wih_e'] = nrm(ks[13], (EMB, 4 * DEC_HS))
    p['dec_wih_c'] = nrm(ks[14], (C_E, 4 * DEC_HS))
    p['dec_whh']   = nrm(ks[15], (DEC_HS, 4 * DEC_HS))
    p['dec_b']     = nrm(ks[16], (1, 4 * DEC_HS))
    # Decoder output Linear(DEC_HS -> V)
    p['out_w']     = nrm(ks[17], (DEC_HS, V))
    p['out_b']     = nrm(ks[18], (1, V))
    return p


# ---------------- gate-column permutations (pure relabeling; same math) ----------------
def _perm_ifog(h):
    # PyTorch column order [i, f, g, o] -> [i, f, o, g]: one sigmoid over 3h + one tanh.
    return np.concatenate([np.arange(0, h), np.arange(h, 2 * h),
                           np.arange(3 * h, 4 * h), np.arange(2 * h, 3 * h)])


def _perm_enc(h):
    # fused fwd|bwd layout [i_f f_f g_f o_f | i_b f_b g_b o_b]
    #   -> [i_f i_b | f_f f_b | o_f o_b | g_f g_b]  (aligns with c = [c_f | c_b])
    base = {'i': 0, 'f': 1, 'g': 2, 'o': 3}

    def blk(d, g):
        s = d * 4 * h + base[g] * h
        return np.arange(s, s + h)

    return np.concatenate([blk(d, g) for g in ('i', 'f', 'o', 'g') for d in (0, 1)])


def _pad_lanes(w, n=128):
    return jnp.pad(w, ((0, 0), (0, n - w.shape[1])))


def pack_params(p):
    eperm = _perm_enc(ENC_HS)
    dperm = _perm_ifog(DEC_HS)

    # encoder input projections scattered into the fused interleaved layout
    zcol = jnp.zeros((C_IN, 4 * ENC_HS), jnp.float32)
    wihf = jnp.concatenate([p['enc_wih_f'], zcol], axis=1)[:, eperm]   # bwd lanes = 0
    wihb = jnp.concatenate([zcol, p['enc_wih_b']], axis=1)[:, eperm]   # fwd lanes = 0
    # block-diagonal recurrent weight: [h_f | h_b] -> all 8 gates in one dot
    whh = jnp.zeros((2 * ENC_HS, 8 * ENC_HS), jnp.float32)
    whh = whh.at[:ENC_HS, :4 * ENC_HS].set(p['enc_whh_f'])
    whh = whh.at[ENC_HS:, 4 * ENC_HS:].set(p['enc_whh_b'])
    whh = whh[:, eperm]
    # decoder: embedding folded into the gate weight; [context, h] fused weight
    decw = jnp.concatenate([p['dec_wih_c'], p['dec_whh']], axis=0)[:, dperm]
    embd = jnp.dot(p['emb'], p['dec_wih_e'])[:, dperm]                 # (V, 4*DEC_HS)
    # output head fused with next-step attention projection
    owdl = jnp.concatenate([p['att_wdl'], p['out_w']], axis=1)         # (DEC_HS, ATTN+V)

    w_slab = jnp.concatenate([
        wihf, wihb, whh, decw,
        jnp.pad(embd, ((0, 16 - V), (0, 0))),
        _pad_lanes(jnp.transpose(p['att_wenc'])),
        _pad_lanes(owdl),
    ], axis=0).astype(jnp.bfloat16)                                    # (240, 128)

    enc_b = jnp.concatenate([p['enc_b_f'], p['enc_b_b']], axis=1)[:, eperm]
    dec_b = p['dec_b'][:, dperm]
    comb_b = jnp.concatenate([p['att_bdl'], p['out_b']], axis=1)       # (1, ATTN+V)
    b_slab = jnp.concatenate([
        enc_b,                                         # row 0
        dec_b,                                         # row 1
        _pad_lanes(jnp.transpose(p['att_benc'])),      # row 2: encoder_conv bias
        _pad_lanes(jnp.transpose(p['att_wen'])),       # row 3: energy weight
        _pad_lanes(p['att_bdl']),                      # row 4: decoder_linear bias
        _pad_lanes(comb_b),                            # row 5: [bdl | out_b]
        jnp.zeros((2, 128), jnp.float32),              # pad to 8 rows
    ], axis=0)                                         # (8, 128) f32
    return w_slab, b_slab


# ---------------- fused kernel: BiLSTM encoder + attention conv + decoder loop ----------------
def fused_kernel(feat_ref, w_ref, b_ref, logp_ref, attn_ref, enc_scr):
    f32 = jnp.float32
    bf16 = jnp.bfloat16
    HH = 2 * ENC_HS   # fused (fwd|bwd) gate-chunk width = 32

    # hoisted weight / bias views (loaded once, static slices are free)
    wihf = w_ref[R_WIHF:R_WIHF + C_IN, :]
    wihb = w_ref[R_WIHB:R_WIHB + C_IN, :]
    whh = w_ref[R_WHH:R_WHH + 2 * ENC_HS, :]
    decw = w_ref[R_DECW:R_DECW + C_E + DEC_HS, :]
    embd = w_ref[R_EMBD:R_EMBD + V, :]
    wencT = w_ref[R_WENC:R_WENC + C_E, 0:ATTN]
    owdl = w_ref[R_OWDL:R_OWDL + DEC_HS, 0:ATTN + V]

    enc_b = b_ref[0:1, :]
    dec_b = b_ref[1:2, :]
    benc = b_ref[2:3, 0:ATTN]
    wen3 = b_ref[3:4, 0:ATTN][None]                 # (1,1,ATTN)
    bdl = b_ref[4:5, 0:ATTN]
    comb_b = b_ref[5:6, 0:ATTN + V]

    # ---------- encoder: hoisted input projections + fused fwd/bwd recurrence ----------
    feat_flat = feat_ref[...].reshape(S * B, C_IN).astype(bf16)
    xf = jnp.dot(feat_flat, wihf, preferred_element_type=f32).reshape(S, B, 4 * HH)
    xb = jnp.dot(feat_flat, wihb, preferred_element_type=f32).reshape(S, B, 4 * HH)

    hc = jnp.zeros((B, HH), f32)   # [h_f | h_b]
    cc = jnp.zeros((B, HH), f32)   # [c_f | c_b]
    for t in range(S):
        gates = (xf[t] + xb[S - 1 - t] + enc_b
                 + jnp.dot(hc.astype(bf16), whh, preferred_element_type=f32))
        sig = jax.nn.sigmoid(gates[:, 0:3 * HH])               # one EUP push: i, f, o
        i_g = sig[:, 0:HH]
        f_g = sig[:, HH:2 * HH]
        o_g = sig[:, 2 * HH:3 * HH]
        g_g = jnp.tanh(gates[:, 3 * HH:4 * HH])
        cc = f_g * cc + i_g * g_g
        hc = o_g * jnp.tanh(cc)
        # fwd hidden belongs to time t, bwd hidden to time S-1-t (PyTorch bidir semantics)
        enc_scr[:, t, 0:ENC_HS] = hc[:, 0:ENC_HS]
        enc_scr[:, S - 1 - t, ENC_HS:C_E] = hc[:, ENC_HS:C_E]

    enc_bsc = enc_scr[...]                                      # (B, S, C_E) f32
    # attention.encoder_conv (k=1 conv == matmul), time-invariant
    weo = (jnp.dot(enc_bsc.reshape(B * S, C_E).astype(bf16), wencT,
                   preferred_element_type=f32) + benc).reshape(B, S, ATTN)

    # ---------- decoder loop, fully unrolled over T_MAX ----------
    iota_v = jax.lax.broadcasted_iota(jnp.int32, (B, V), 1).astype(f32)
    h = jnp.zeros((B, DEC_HS), f32)
    c = jnp.zeros((B, DEC_HS), f32)
    wdec = jnp.broadcast_to(bdl, (B, ATTN))                     # decoder_linear(h0=0) = bdl
    # <sos> gate contribution from the folded embedding
    gin_emb = jnp.broadcast_to(embd[SOS_IDX:SOS_IDX + 1, :], (B, 4 * DEC_HS)).astype(f32)

    for step in range(T_MAX):
        # ---- Bahdanau attention (energy scalar bias dropped: softmax shift-invariant) ----
        pre = jnp.tanh(weo + wdec[:, None, :])                  # (B, S, ATTN)
        scores = jnp.sum(pre * wen3, axis=-1)                   # (B, S)
        m = jnp.max(scores, axis=-1, keepdims=True)
        e = jnp.exp(scores - m)
        alphas = e / jnp.sum(e, axis=-1, keepdims=True)         # (B, S)
        context = jnp.sum(enc_bsc * alphas[:, :, None], axis=1) # (B, C_E)

        # ---- decoder LSTM step: folded-embedding contribution + [context, h] gate dot ----
        ch = jnp.concatenate([context, h], axis=1).astype(bf16)
        gates = gin_emb + jnp.dot(ch, decw, preferred_element_type=f32) + dec_b
        sig = jax.nn.sigmoid(gates[:, 0:3 * DEC_HS])
        i_g = sig[:, 0:DEC_HS]
        f_g = sig[:, DEC_HS:2 * DEC_HS]
        o_g = sig[:, 2 * DEC_HS:3 * DEC_HS]
        g_g = jnp.tanh(gates[:, 3 * DEC_HS:4 * DEC_HS])
        c = f_g * c + i_g * g_g
        h = o_g * jnp.tanh(c)

        # ---- fused output head + next-step attention projection ----
        comb = jnp.dot(h.astype(bf16), owdl, preferred_element_type=f32) + comb_b  # (B, ATTN+V)
        logits = comb[:, ATTN:ATTN + V]
        lm = jnp.max(logits, axis=-1, keepdims=True)
        lse = lm + jnp.log(jnp.sum(jnp.exp(logits - lm), axis=-1, keepdims=True))
        logp = logits - lse

        logp_ref[:, step, :] = logp
        attn_ref[:, step, :] = alphas

        if step + 1 < T_MAX:
            wdec = comb[:, 0:ATTN]
            # greedy next token (first maximal index), fed back via one-hot gate gather
            # TODO(synk): training-time teacher forcing (np.random + target_seq) not implemented.
            maxv = jnp.max(logp, axis=-1, keepdims=True)
            idx = jnp.min(jnp.where(logp >= maxv, iota_v, float(V)), axis=-1, keepdims=True)
            onehot = (iota_v == idx).astype(bf16)
            gin_emb = jnp.dot(onehot, embd, preferred_element_type=f32)


# ---------------- full forward (backbone identity -> fused Pallas kernel) ----------------
def seq2seq_forward(x, p):
    # TODO(synk): ConvNet6 backbone definition is not provided in the source module;
    # the feature extractor is treated as identity on pre-extracted features (B, C, 1, S).
    feat = jnp.squeeze(x, axis=2)                 # (B, C_IN, S)
    feat_tbc = jnp.transpose(feat, (2, 0, 1))     # (S, B, C_IN) time-major
    w_slab, b_slab = pack_params(p)               # one bf16 weight slab + one f32 bias slab

    logp, attn = pl.pallas_call(
        fused_kernel,
        out_shape=(jax.ShapeDtypeStruct((B, T_MAX, V), jnp.float32),
                   jax.ShapeDtypeStruct((B, T_MAX, S), jnp.float32)),
        scratch_shapes=[pltpu.VMEM((B, S, C_E), jnp.float32)],   # encoder hidden states
    )(feat_tbc, w_slab, b_slab)

    logs_probs = logp                                       # (B, T, V)
    preds = jnp.argmax(logp, axis=-1).astype(jnp.int32)     # (B, T)
    attentions = attn                                       # (B, T, S)
    return logs_probs, preds, attentions


if __name__ == "__main__":
    key = jax.random.PRNGKey(0)
    pkey, xkey = jax.random.split(key)
    params = init_params(pkey)
    x = jax.random.normal(xkey, (B, C_IN, 1, S), dtype=jnp.float32)

    logs_probs, preds, attentions = jax.jit(seq2seq_forward)(x, params)
    jax.block_until_ready((logs_probs, preds, attentions))

    assert logs_probs.shape == (B, T_MAX, V)
    assert preds.shape == (B, T_MAX)
    assert attentions.shape == (B, T_MAX, S)
    assert bool(jnp.all(jnp.isfinite(logs_probs)))
    assert bool(jnp.allclose(jnp.sum(jnp.exp(logs_probs), axis=-1), 1.0, atol=1e-4))
    assert bool(jnp.allclose(jnp.sum(attentions, axis=-1), 1.0, atol=1e-4))
    print("KERNEL_OK")
</pallas_src>

<mosaic_0001>
module attributes {stable_mosaic.version = 11 : i64} {
  func.func @fused_kernel(%arg0: memref<8x2x32xf32, #tpu.memory_space<vmem>>, %arg1: memref<240x128xbf16, #tpu.memory_space<vmem>>, %arg2: memref<8x128xf32, #tpu.memory_space<vmem>>, %arg3: memref<2x6x12xf32, #tpu.memory_space<vmem>>, %arg4: memref<2x6x8xf32, #tpu.memory_space<vmem>>, %arg5: memref<2x8x32xf32, #tpu.memory_space<vmem>>) attributes {dimension_semantics = [], scalar_prefetch = 0 : i64, scratch_operands = 1 : i64, tpu.core_type = #tpu.core_type<tc>} {
    %c0 = arith.constant 0 : index
    %c0_0 = arith.constant 0 : index
    %0 = vector.load %arg1[%c0, %c0_0] : memref<240x128xbf16, #tpu.memory_space<vmem>>, vector<32x128xbf16>
    %c32 = arith.constant 32 : index
    %c0_1 = arith.constant 0 : index
    %1 = vector.load %arg1[%c32, %c0_1] : memref<240x128xbf16, #tpu.memory_space<vmem>>, vector<32x128xbf16>
    %c64 = arith.constant 64 : index
    %c0_2 = arith.constant 0 : index
    %2 = vector.load %arg1[%c64, %c0_2] : memref<240x128xbf16, #tpu.memory_space<vmem>>, vector<32x128xbf16>
    %c96 = arith.constant 96 : index
    %c0_3 = arith.constant 0 : index
    %3 = vector.load %arg1[%c96, %c0_3] : memref<240x128xbf16, #tpu.memory_space<vmem>>, vector<64x128xbf16>
    %c160 = arith.constant 160 : index
    %c0_4 = arith.constant 0 : index
    %4 = vector.load %arg1[%c160, %c0_4] : memref<240x128xbf16, #tpu.memory_space<vmem>>, vector<12x128xbf16>
    %c176 = arith.constant 176 : index
    %c0_5 = arith.constant 0 : index
    %5 = vector.load %arg1[%c176, %c0_5] : memref<240x128xbf16, #tpu.memory_space<vmem>>, vector<32x32xbf16>
    %c208 = arith.constant 208 : index
    %c0_6 = arith.constant 0 : index
    %6 = vector.load %arg1[%c208, %c0_6] : memref<240x128xbf16, #tpu.memory_space<vmem>>, vector<32x44xbf16>
    %c0_7 = arith.constant 0 : index
    %c0_8 = arith.constant 0 : index
    %7 = vector.load %arg2[%c0_7, %c0_8] : memref<8x128xf32, #tpu.memory_space<vmem>>, vector<1x128xf32>
    %c1 = arith.constant 1 : index
    %c0_9 = arith.constant 0 : index
    %8 = vector.load %arg2[%c1, %c0_9] : memref<8x128xf32, #tpu.memory_space<vmem>>, vector<1x128xf32>
    %c2 = arith.constant 2 : index
    %c0_10 = arith.constant 0 : index
    %9 = vector.load %arg2[%c2, %c0_10] : memref<8x128xf32, #tpu.memory_space<vmem>>, vector<1x32xf32>
    %c3 = arith.constant 3 : index
    %c0_11 = arith.constant 0 : index
    %10 = vector.load %arg2[%c3, %c0_11] : memref<8x128xf32, #tpu.memory_space<vmem>>, vector<1x32xf32>
    %11 = vector.shape_cast %10 : vector<1x32xf32> to vector<1x1x32xf32>
    %c4 = arith.constant 4 : index
    %c0_12 = arith.constant 0 : index
    %12 = vector.load %arg2[%c4, %c0_12] : memref<8x128xf32, #tpu.memory_space<vmem>>, vector<1x32xf32>
    %c5 = arith.constant 5 : index
    %c0_13 = arith.constant 0 : index
    %13 = vector.load %arg2[%c5, %c0_13] : memref<8x128xf32, #tpu.memory_space<vmem>>, vector<1x44xf32>
    %c0_14 = arith.constant 0 : index
    %c0_15 = arith.constant 0 : index
    %c0_16 = arith.constant 0 : index
    %14 = vector.load %arg0[%c0_14, %c0_15, %c0_16] : memref<8x2x32xf32, #tpu.memory_space<vmem>>, vector<8x2x32xf32>
    %15 = vector.shape_cast %14 : vector<8x2x32xf32> to vector<16x32xf32>
    %16 = arith.truncf %15 : vector<16x32xf32> to vector<16x32xbf16>
    %cst = arith.constant dense<0.000000e+00> : vector<16x128xf32>
    %17 = tpu.matmul %16, %0, %cst {dimension_numbers = #tpu.dot_dimension_numbers<[1], [0], [0], [1], [0, 0, 1, 1], [], []>} : vector<16x32xbf16>, vector<32x128xbf16>, vector<16x128xf32> -> vector<16x128xf32>
    %18 = vector.shape_cast %17 : vector<16x128xf32> to vector<8x2x128xf32>
    %cst_17 = arith.constant dense<0.000000e+00> : vector<16x128xf32>
    %19 = tpu.matmul %16, %1, %cst_17 {dimension_numbers = #tpu.dot_dimension_numbers<[1], [0], [0], [1], [0, 0, 1, 1], [], []>} : vector<16x32xbf16>, vector<32x128xbf16>, vector<16x128xf32> -> vector<16x128xf32>
    %20 = vector.shape_cast %19 : vector<16x128xf32> to vector<8x2x128xf32>
    %cst_18 = arith.constant 0.000000e+00 : f32
    %21 = vector.broadcast %cst_18 : f32 to vector<2x32xf32>
    %cst_19 = arith.constant 0.000000e+00 : f32
    %22 = vector.broadcast %cst_19 : f32 to vector<2x32xf32>
    %23 = vector.extract_strided_slice %18 {offsets = [0, 0, 0], sizes = [1, 2, 128], strides = [1, 1, 1]} : vector<8x2x128xf32> to vector<1x2x128xf32>
    %24 = vector.shape_cast %23 : vector<1x2x128xf32> to vector<2x128xf32>
    %25 = vector.extract_strided_slice %20 {offsets = [7, 0, 0], sizes = [1, 2, 128], strides = [1, 1, 1]} : vector<8x2x128xf32> to vector<1x2x128xf32>
    %26 = vector.shape_cast %25 : vector<1x2x128xf32> to vector<2x128xf32>
    %27 = arith.addf %24, %26 : vector<2x128xf32>
    %28 = vector.broadcast %7 : vector<1x128xf32> to vector<2x128xf32>
    %29 = arith.addf %27, %28 : vector<2x128xf32>
    %30 = arith.truncf %21 : vector<2x32xf32> to vector<2x32xbf16>
    %cst_20 = arith.constant dense<0.000000e+00> : vector<2x128xf32>
    %31 = tpu.matmul %30, %2, %cst_20 {dimension_numbers = #tpu.dot_dimension_numbers<[1], [0], [0], [1], [0, 0, 1, 1], [], []>} : vector<2x32xbf16>, vector<32x128xbf16>, vector<2x128xf32> -> vector<2x128xf32>
    %32 = arith.addf %29, %31 : vector<2x128xf32>
    %33 = vector.extract_strided_slice %32 {offsets = [0, 0], sizes = [2, 96], strides = [1, 1]} : vector<2x128xf32> to vector<2x96xf32>
    %34 = arith.negf %33 : vector<2x96xf32>
    %35 = math.exp %34 : vector<2x96xf32>
    %cst_21 = arith.constant 1.000000e+00 : f32
    %36 = vector.broadcast %cst_21 : f32 to vector<2x96xf32>
    %37 = arith.addf %36, %35 : vector<2x96xf32>
    %38 = arith.divf %36, %37 : vector<2x96xf32>
    %39 = vector.extract_strided_slice %38 {offsets = [0, 0], sizes = [2, 32], strides = [1, 1]} : vector<2x96xf32> to vector<2x32xf32>
    %40 = vector.extract_strided_slice %38 {offsets = [0, 32], sizes = [2, 32], strides = [1, 1]} : vector<2x96xf32> to vector<2x32xf32>
    %41 = vector.extract_strided_slice %38 {offsets = [0, 64], sizes = [2, 32], strides = [1, 1]} : vector<2x96xf32> to vector<2x32xf32>
    %42 = vector.extract_strided_slice %32 {offsets = [0, 96], sizes = [2, 32], strides = [1, 1]} : vector<2x128xf32> to vector<2x32xf32>
    %43 = math.tanh %42 : vector<2x32xf32>
    %44 = arith.mulf %40, %22 : vector<2x32xf32>
    %45 = arith.mulf %39, %43 : vector<2x32xf32>
    %46 = arith.addf %44, %45 : vector<2x32xf32>
    %47 = math.tanh %46 : vector<2x32xf32>
    %48 = arith.mulf %41, %47 : vector<2x32xf32>
    %49 = vector.extract_strided_slice %48 {offsets = [0, 0], sizes = [2, 16], strides = [1, 1]} : vector<2x32xf32> to vector<2x16xf32>
    %c0_22 = arith.constant 0 : index
    %c0_23 = arith.constant 0 : index
    %c0_24 = arith.constant 0 : index
    %50 = vector.load %arg5[%c0_22, %c0_23, %c0_24] : memref<2x8x32xf32, #tpu.memory_space<vmem>>, vector<2x1x16xf32>
    %51 = vector.shape_cast %50 : vector<2x1x16xf32> to vector<2x16xf32>
    %52 = vector.shape_cast %49 : vector<2x16xf32> to vector<2x1x16xf32>
    tpu.vector_store %arg5[%c0_22, %c0_23, %c0_24], %52 {strides = array<i32>} : memref<2x8x32xf32, #tpu.memory_space<vmem>>, vector<2x1x16xf32>,
    %53 = vector.extract_strided_slice %48 {offsets = [0, 16], sizes = [2, 16], strides = [1, 1]} : vector<2x32xf32> to vector<2x16xf32>
    %c0_25 = arith.constant 0 : index
    %c7 = arith.constant 7 : index
    %c16 = arith.constant 16 : index
    %54 = vector.load %arg5[%c0_25, %c7, %c16] : memref<2x8x32xf32, #tpu.memory_space<vmem>>, vector<2x1x16xf32>
    %55 = vector.shape_cast %54 : vector<2x1x16xf32> to vector<2x16xf32>
    %56 = vector.shape_cast %53 : vector<2x16xf32> to vector<2x1x16xf32>
    tpu.vector_store %arg5[%c0_25, %c7, %c16], %56 {strides = array<i32>} : memref<2x8x32xf32, #tpu.memory_space<vmem>>, vector<2x1x16xf32>,
    %57 = vector.extract_strided_slice %18 {offsets = [1, 0, 0], sizes = [1, 2, 128], strides = [1, 1, 1]} : vector<8x2x128xf32> to vector<1x2x128xf32>
    %58 = vector.shape_cast %57 : vector<1x2x128xf32> to vector<2x128xf32>
    %59 = vector.extract_strided_slice %20 {offsets = [6, 0, 0], sizes = [1, 2, 128], strides = [1, 1, 1]} : vector<8x2x128xf32> to vector<1x2x128xf32>
    %60 = vector.shape_cast %59 : vector<1x2x128xf32> to vector<2x128xf32>
    %61 = arith.addf %58, %60 : vector<2x128xf32>
    %62 = vector.broadcast %7 : vector<1x128xf32> to vector<2x128xf32>
    %63 = arith.addf %61, %62 : vector<2x128xf32>
    %64 = arith.truncf %48 : vector<2x32xf32> to vector<2x32xbf16>
    %cst_26 = arith.constant dense<0.000000e+00> : vector<2x128xf32>
    %65 = tpu.matmul %64, %2, %cst_26 {dimension_numbers = #tpu.dot_dimension_numbers<[1], [0], [0], [1], [0, 0, 1, 1], [], []>} : vector<2x32xbf16>, vector<32x128xbf16>, vector<2x128xf32> -> vector<2x128xf32>
    %66 = arith.addf %63, %65 : vector<2x128xf32>
    %67 = vector.extract_strided_slice %66 {offsets = [0, 0], sizes = [2, 96], strides = [1, 1]} : vector<2x128xf32> to vector<2x96xf32>
    %68 = arith.negf %67 : vector<2x96xf32>
    %69 = math.exp %68 : vector<2x96xf32>
    %cst_27 = arith.constant 1.000000e+00 : f32
    %70 = vector.broadcast %cst_27 : f32 to vector<2x96xf32>
    %71 = arith.addf %70, %69 : vector<2x96xf32>
    %72 = arith.divf %70, %71 : vector<2x96xf32>
    %73 = vector.extract_strided_slice %72 {offsets = [0, 0], sizes = [2, 32], strides = [1, 1]} : vector<2x96xf32> to vector<2x32xf32>
    %74 = vector.extract_strided_slice %72 {offsets = [0, 32], sizes = [2, 32], strides = [1, 1]} : vector<2x96xf32> to vector<2x32xf32>
    %75 = vector.extract_strided_slice %72 {offsets = [0, 64], sizes = [2, 32], strides = [1, 1]} : vector<2x96xf32> to vector<2x32xf32>
    %76 = vector.extract_strided_slice %66 {offsets = [0, 96], sizes = [2, 32], strides = [1, 1]} : vector<2x128xf32> to vector<2x32xf32>
    %77 = math.tanh %76 : vector<2x32xf32>
    %78 = arith.mulf %74, %46 : vector<2x32xf32>
    %79 = arith.mulf %73, %77 : vector<2x32xf32>
    %80 = arith.addf %78, %79 : vector<2x32xf32>
    %81 = math.tanh %80 : vector<2x32xf32>
    %82 = arith.mulf %75, %81 : vector<2x32xf32>
    %83 = vector.extract_strided_slice %82 {offsets = [0, 0], sizes = [2, 16], strides = [1, 1]} : vector<2x32xf32> to vector<2x16xf32>
    %c0_28 = arith.constant 0 : index
    %c1_29 = arith.constant 1 : index
    %c0_30 = arith.constant 0 : index
    %84 = vector.load %arg5[%c0_28, %c1_29, %c0_30] : memref<2x8x32xf32, #tpu.memory_space<vmem>>, vector<2x1x16xf32>
    %85 = vector.shape_cast %84 : vector<2x1x16xf32> to vector<2x16xf32>
    %86 = vector.shape_cast %83 : vector<2x16xf32> to vector<2x1x16xf32>
    tpu.vector_store %arg5[%c0_28, %c1_29, %c0_30], %86 {strides = array<i32>} : memref<2x8x32xf32, #tpu.memory_space<vmem>>, vector<2x1x16xf32>,
    %87 = vector.extract_strided_slice %82 {offsets = [0, 16], sizes = [2, 16], strides = [1, 1]} : vector<2x32xf32> to vector<2x16xf32>
    %c0_31 = arith.constant 0 : index
    %c6 = arith.constant 6 : index
    %c16_32 = arith.constant 16 : index
    %88 = vector.load %arg5[%c0_31, %c6, %c16_32] : memref<2x8x32xf32, #tpu.memory_space<vmem>>, vector<2x1x16xf32>
    %89 = vector.shape_cast %88 : vector<2x1x16xf32> to vector<2x16xf32>
    %90 = vector.shape_cast %87 : vector<2x16xf32> to vector<2x1x16xf32>
    tpu.vector_store %arg5[%c0_31, %c6, %c16_32], %90 {strides = array<i32>} : memref<2x8x32xf32, #tpu.memory_space<vmem>>, vector<2x1x16xf32>,
    %91 = vector.extract_strided_slice %18 {offsets = [2, 0, 0], sizes = [1, 2, 128], strides = [1, 1, 1]} : vector<8x2x128xf32> to vector<1x2x128xf32>
    %92 = vector.shape_cast %91 : vector<1x2x128xf32> to vector<2x128xf32>
    %93 = vector.extract_strided_slice %20 {offsets = [5, 0, 0], sizes = [1, 2, 128], strides = [1, 1, 1]} : vector<8x2x128xf32> to vector<1x2x128xf32>
    %94 = vector.shape_cast %93 : vector<1x2x128xf32> to vector<2x128xf32>
    %95 = arith.addf %92, %94 : vector<2x128xf32>
    %96 = vector.broadcast %7 : vector<1x128xf32> to vector<2x128xf32>
    %97 = arith.addf %95, %96 : vector<2x128xf32>
    %98 = arith.truncf %82 : vector<2x32xf32> to vector<2x32xbf16>
    %cst_33 = arith.constant dense<0.000000e+00> : vector<2x128xf32>
    %99 = tpu.matmul %98, %2, %cst_33 {dimension_numbers = #tpu.dot_dimension_numbers<[1], [0], [0], [1], [0, 0, 1, 1], [], []>} : vector<2x32xbf16>, vector<32x128xbf16>, vector<2x128xf32> -> vector<2x128xf32>
    %100 = arith.addf %97, %99 : vector<2x128xf32>
    %101 = vector.extract_strided_slice %100 {offsets = [0, 0], sizes = [2, 96], strides = [1, 1]} : vector<2x128xf32> to vector<2x96xf32>
    %102 = arith.negf %101 : vector<2x96xf32>
    %103 = math.exp %102 : vector<2x96xf32>
    %cst_34 = arith.constant 1.000000e+00 : f32
    %104 = vector.broadcast %cst_34 : f32 to vector<2x96xf32>
    %105 = arith.addf %104, %103 : vector<2x96xf32>
    %106 = arith.divf %104, %105 : vector<2x96xf32>
    %107 = vector.extract_strided_slice %106 {offsets = [0, 0], sizes = [2, 32], strides = [1, 1]} : vector<2x96xf32> to vector<2x32xf32>
    %108 = vector.extract_strided_slice %106 {offsets = [0, 32], sizes = [2, 32], strides = [1, 1]} : vector<2x96xf32> to vector<2x32xf32>
    %109 = vector.extract_strided_slice %106 {offsets = [0, 64], sizes = [2, 32], strides = [1, 1]} : vector<2x96xf32> to vector<2x32xf32>
    %110 = vector.extract_strided_slice %100 {offsets = [0, 96], sizes = [2, 32], strides = [1, 1]} : vector<2x128xf32> to vector<2x32xf32>
    %111 = math.tanh %110 : vector<2x32xf32>
    %112 = arith.mulf %108, %80 : vector<2x32xf32>
    %113 = arith.mulf %107, %111 : vector<2x32xf32>
    %114 = arith.addf %112, %113 : vector<2x32xf32>
    %115 = math.tanh %114 : vector<2x32xf32>
    %116 = arith.mulf %109, %115 : vector<2x32xf32>
    %117 = vector.extract_strided_slice %116 {offsets = [0, 0], sizes = [2, 16], strides = [1, 1]} : vector<2x32xf32> to vector<2x16xf32>
    %c0_35 = arith.constant 0 : index
    %c2_36 = arith.constant 2 : index
    %c0_37 = arith.constant 0 : index
    %118 = vector.load %arg5[%c0_35, %c2_36, %c0_37] : memref<2x8x32xf32, #tpu.memory_space<vmem>>, vector<2x1x16xf32>
    %119 = vector.shape_cast %118 : vector<2x1x16xf32> to vector<2x16xf32>
    %120 = vector.shape_cast %117 : vector<2x16xf32> to vector<2x1x16xf32>
    tpu.vector_store %arg5[%c0_35, %c2_36, %c0_37], %120 {strides = array<i32>} : memref<2x8x32xf32, #tpu.memory_space<vmem>>, vector<2x1x16xf32>,
    %121 = vector.extract_strided_slice %116 {offsets = [0, 16], sizes = [2, 16], strides = [1, 1]} : vector<2x32xf32> to vector<2x16xf32>
    %c0_38 = arith.constant 0 : index
    %c5_39 = arith.constant 5 : index
    %c16_40 = arith.constant 16 : index
    %122 = vector.load %arg5[%c0_38, %c5_39, %c16_40] : memref<2x8x32xf32, #tpu.memory_space<vmem>>, vector<2x1x16xf32>
    %123 = vector.shape_cast %122 : vector<2x1x16xf32> to vector<2x16xf32>
    %124 = vector.shape_cast %121 : vector<2x16xf32> to vector<2x1x16xf32>
    tpu.vector_store %arg5[%c0_38, %c5_39, %c16_40], %124 {strides = array<i32>} : memref<2x8x32xf32, #tpu.memory_space<vmem>>, vector<2x1x16xf32>,
    %125 = vector.extract_strided_slice %18 {offsets = [3, 0, 0], sizes = [1, 2, 128], strides = [1, 1, 1]} : vector<8x2x128xf32> to vector<1x2x128xf32>
    %126 = vector.shape_cast %125 : vector<1x2x128xf32> to vector<2x128xf32>
    %127 = vector.extract_strided_slice %20 {offsets = [4, 0, 0], sizes = [1, 2, 128], strides = [1, 1, 1]} : vector<8x2x128xf32> to vector<1x2x128xf32>
    %128 = vector.shape_cast %127 : vector<1x2x128xf32> to vector<2x128xf32>
    %129 = arith.addf %126, %128 : vector<2x128xf32>
    %130 = vector.broadcast %7 : vector<1x128xf32> to vector<2x128xf32>
    %131 = arith.addf %129, %130 : vector<2x128xf32>
    %132 = arith.truncf %116 : vector<2x32xf32> to vector<2x32xbf16>
    %cst_41 = arith.constant dense<0.000000e+00> : vector<2x128xf32>
    %133 = tpu.matmul %132, %2, %cst_41 {dimension_numbers = #tpu.dot_dimension_numbers<[1], [0], [0], [1], [0, 0, 1, 1], [], []>} : vector<2x32xbf16>, vector<32x128xbf16>, vector<2x128xf32> -> vector<2x128xf32>
    %134 = arith.addf %131, %133 : vector<2x128xf32>
    %135 = vector.extract_strided_slice %134 {offsets = [0, 0], sizes = [2, 96], strides = [1, 1]} : vector<2x128xf32> to vector<2x96xf32>
    %136 = arith.negf %135 : vector<2x96xf32>
    %137 = math.exp %136 : vector<2x96xf32>
    %cst_42 = arith.constant 1.000000e+00 : f32
    %138 = vector.broadcast %cst_42 : f32 to vector<2x96xf32>
    %139 = arith.addf %138, %137 : vector<2x96xf32>
    %140 = arith.divf %138, %139 : vector<2x96xf32>
    %141 = vector.extract_strided_slice %140 {offsets = [0, 0], sizes = [2, 32], strides = [1, 1]} : vector<2x96xf32> to vector<2x32xf32>
    %142 = vector.extract_strided_slice %140 {offsets = [0, 32], sizes = [2, 32], strides = [1, 1]} : vector<2x96xf32> to vector<2x32xf32>
    %143 = vector.extract_strided_slice %140 {offsets = [0, 64], sizes = [2, 32], strides = [1, 1]} : vector<2x96xf32> to vector<2x32xf32>
    %144 = vector.extract_strided_slice %134 {offsets = [0, 96], sizes = [2, 32], strides = [1, 1]} : vector<2x128xf32> to vector<2x32xf32>
    %145 = math.tanh %144 : vector<2x32xf32>
    %146 = arith.mulf %142, %114 : vector<2x32xf32>
    %147 = arith.mulf %141, %145 : vector<2x32xf32>
    %148 = arith.addf %146, %147 : vector<2x32xf32>
    %149 = math.tanh %148 : vector<2x32xf32>
    %150 = arith.mulf %143, %149 : vector<2x32xf32>
    %151 = vector.extract_strided_slice %150 {offsets = [0, 0], sizes = [2, 16], strides = [1, 1]} : vector<2x32xf32> to vector<2x16xf32>
    %c0_43 = arith.constant 0 : index
    %c3_44 = arith.constant 3 : index
    %c0_45 = arith.constant 0 : index
    %152 = vector.load %arg5[%c0_43, %c3_44, %c0_45] : memref<2x8x32xf32, #tpu.memory_space<vmem>>, vector<2x1x16xf32>
    %153 = vector.shape_cast %152 : vector<2x1x16xf32> to vector<2x16xf32>
    %154 = vector.shape_cast %151 : vector<2x16xf32> to vector<2x1x16xf32>
    tpu.vector_store %arg5[%c0_43, %c3_44, %c0_45], %154 {strides = array<i32>} : memref<2x8x32xf32, #tpu.memory_space<vmem>>, vector<2x1x16xf32>,
    %155 = vector.extract_strided_slice %150 {offsets = [0, 16], sizes = [2, 16], strides = [1, 1]} : vector<2x32xf32> to vector<2x16xf32>
    %c0_46 = arith.constant 0 : index
    %c4_47 = arith.constant 4 : index
    %c16_48 = arith.constant 16 : index
    %156 = vector.load %arg5[%c0_46, %c4_47, %c16_48] : memref<2x8x32xf32, #tpu.memory_space<vmem>>, vector<2x1x16xf32>
    %157 = vector.shape_cast %156 : vector<2x1x16xf32> to vector<2x16xf32>
    %158 = vector.shape_cast %155 : vector<2x16xf32> to vector<2x1x16xf32>
    tpu.vector_store %arg5[%c0_46, %c4_47, %c16_48], %158 {strides = array<i32>} : memref<2x8x32xf32, #tpu.memory_space<vmem>>, vector<2x1x16xf32>,
    %159 = vector.extract_strided_slice %18 {offsets = [4, 0, 0], sizes = [1, 2, 128], strides = [1, 1, 1]} : vector<8x2x128xf32> to vector<1x2x128xf32>
    %160 = vector.shape_cast %159 : vector<1x2x128xf32> to vector<2x128xf32>
    %161 = vector.extract_strided_slice %20 {offsets = [3, 0, 0], sizes = [1, 2, 128], strides = [1, 1, 1]} : vector<8x2x128xf32> to vector<1x2x128xf32>
    %162 = vector.shape_cast %161 : vector<1x2x128xf32> to vector<2x128xf32>
    %163 = arith.addf %160, %162 : vector<2x128xf32>
    %164 = vector.broadcast %7 : vector<1x128xf32> to vector<2x128xf32>
    %165 = arith.addf %163, %164 : vector<2x128xf32>
    %166 = arith.truncf %150 : vector<2x32xf32> to vector<2x32xbf16>
    %cst_49 = arith.constant dense<0.000000e+00> : vector<2x128xf32>
    %167 = tpu.matmul %166, %2, %cst_49 {dimension_numbers = #tpu.dot_dimension_numbers<[1], [0], [0], [1], [0, 0, 1, 1], [], []>} : vector<2x32xbf16>, vector<32x128xbf16>, vector<2x128xf32> -> vector<2x128xf32>
    %168 = arith.addf %165, %167 : vector<2x128xf32>
    %169 = vector.extract_strided_slice %168 {offsets = [0, 0], sizes = [2, 96], strides = [1, 1]} : vector<2x128xf32> to vector<2x96xf32>
    %170 = arith.negf %169 : vector<2x96xf32>
    %171 = math.exp %170 : vector<2x96xf32>
    %cst_50 = arith.constant 1.000000e+00 : f32
    %172 = vector.broadcast %cst_50 : f32 to vector<2x96xf32>
    %173 = arith.addf %172, %171 : vector<2x96xf32>
    %174 = arith.divf %172, %173 : vector<2x96xf32>
    %175 = vector.extract_strided_slice %174 {offsets = [0, 0], sizes = [2, 32], strides = [1, 1]} : vector<2x96xf32> to vector<2x32xf32>
    %176 = vector.extract_strided_slice %174 {offsets = [0, 32], sizes = [2, 32], strides = [1, 1]} : vector<2x96xf32> to vector<2x32xf32>
    %177 = vector.extract_strided_slice %174 {offsets = [0, 64], sizes = [2, 32], strides = [1, 1]} : vector<2x96xf32> to vector<2x32xf32>
    %178 = vector.extract_strided_slice %168 {offsets = [0, 96], sizes = [2, 32], strides = [1, 1]} : vector<2x128xf32> to vector<2x32xf32>
    %179 = math.tanh %178 : vector<2x32xf32>
    %180 = arith.mulf %176, %148 : vector<2x32xf32>
    %181 = arith.mulf %175, %179 : vector<2x32xf32>
    %182 = arith.addf %180, %181 : vector<2x32xf32>
    %183 = math.tanh %182 : vector<2x32xf32>
    %184 = arith.mulf %177, %183 : vector<2x32xf32>
    %185 = vector.extract_strided_slice %184 {offsets = [0, 0], sizes = [2, 16], strides = [1, 1]} : vector<2x32xf32> to vector<2x16xf32>
    %c0_51 = arith.constant 0 : index
    %c4_52 = arith.constant 4 : index
    %c0_53 = arith.constant 0 : index
    %186 = vector.load %arg5[%c0_51, %c4_52, %c0_53] : memref<2x8x32xf32, #tpu.memory_space<vmem>>, vector<2x1x16xf32>
    %187 = vector.shape_cast %186 : vector<2x1x16xf32> to vector<2x16xf32>
    %188 = vector.shape_cast %185 : vector<2x16xf32> to vector<2x1x16xf32>
    tpu.vector_store %arg5[%c0_51, %c4_52, %c0_53], %188 {strides = array<i32>} : memref<2x8x32xf32, #tpu.memory_space<vmem>>, vector<2x1x16xf32>,
    %189 = vector.extract_strided_slice %184 {offsets = [0, 16], sizes = [2, 16], strides = [1, 1]} : vector<2x32xf32> to vector<2x16xf32>
    %c0_54 = arith.constant 0 : index
    %c3_55 = arith.constant 3 : index
    %c16_56 = arith.constant 16 : index
    %190 = vector.load %arg5[%c0_54, %c3_55, %c16_56] : memref<2x8x32xf32, #tpu.memory_space<vmem>>, vector<2x1x16xf32>
    %191 = vector.shape_cast %190 : vector<2x1x16xf32> to vector<2x16xf32>
    %192 = vector.shape_cast %189 : vector<2x16xf32> to vector<2x1x16xf32>
    tpu.vector_store %arg5[%c0_54, %c3_55, %c16_56], %192 {strides = array<i32>} : memref<2x8x32xf32, #tpu.memory_space<vmem>>, vector<2x1x16xf32>,
    %193 = vector.extract_strided_slice %18 {offsets = [5, 0, 0], sizes = [1, 2, 128], strides = [1, 1, 1]} : vector<8x2x128xf32> to vector<1x2x128xf32>
    %194 = vector.shape_cast %193 : vector<1x2x128xf32> to vector<2x128xf32>
    %195 = vector.extract_strided_slice %20 {offsets = [2, 0, 0], sizes = [1, 2, 128], strides = [1, 1, 1]} : vector<8x2x128xf32> to vector<1x2x128xf32>
    %196 = vector.shape_cast %195 : vector<1x2x128xf32> to vector<2x128xf32>
    %197 = arith.addf %194, %196 : vector<2x128xf32>
    %198 = vector.broadcast %7 : vector<1x128xf32> to vector<2x128xf32>
    %199 = arith.addf %197, %198 : vector<2x128xf32>
    %200 = arith.truncf %184 : vector<2x32xf32> to vector<2x32xbf16>
    %cst_57 = arith.constant dense<0.000000e+00> : vector<2x128xf32>
    %201 = tpu.matmul %200, %2, %cst_57 {dimension_numbers = #tpu.dot_dimension_numbers<[1], [0], [0], [1], [0, 0, 1, 1], [], []>} : vector<2x32xbf16>, vector<32x128xbf16>, vector<2x128xf32> -> vector<2x128xf32>
    %202 = arith.addf %199, %201 : vector<2x128xf32>
    %203 = vector.extract_strided_slice %202 {offsets = [0, 0], sizes = [2, 96], strides = [1, 1]} : vector<2x128xf32> to vector<2x96xf32>
    %204 = arith.negf %203 : vector<2x96xf32>
    %205 = math.exp %204 : vector<2x96xf32>
    %cst_58 = arith.constant 1.000000e+00 : f32
    %206 = vector.broadcast %cst_58 : f32 to vector<2x96xf32>
    %207 = arith.addf %206, %205 : vector<2x96xf32>
    %208 = arith.divf %206, %207 : vector<2x96xf32>
    %209 = vector.extract_strided_slice %208 {offsets = [0, 0], sizes = [2, 32], strides = [1, 1]} : vector<2x96xf32> to vector<2x32xf32>
    %210 = vector.extract_strided_slice %208 {offsets = [0, 32], sizes = [2, 32], strides = [1, 1]} : vector<2x96xf32> to vector<2x32xf32>
    %211 = vector.extract_strided_slice %208 {offsets = [0, 64], sizes = [2, 32], strides = [1, 1]} : vector<2x96xf32> to vector<2x32xf32>
    %212 = vector.extract_strided_slice %202 {offsets = [0, 96], sizes = [2, 32], strides = [1, 1]} : vector<2x128xf32> to vector<2x32xf32>
    %213 = math.tanh %212 : vector<2x32xf32>
    %214 = arith.mulf %210, %182 : vector<2x32xf32>
    %215 = arith.mulf %209, %213 : vector<2x32xf32>
    %216 = arith.addf %214, %215 : vector<2x32xf32>
    %217 = math.tanh %216 : vector<2x32xf32>
    %218 = arith.mulf %211, %217 : vector<2x32xf32>
    %219 = vector.extract_strided_slice %218 {offsets = [0, 0], sizes = [2, 16], strides = [1, 1]} : vector<2x32xf32> to vector<2x16xf32>
    %c0_59 = arith.constant 0 : index
    %c5_60 = arith.constant 5 : index
    %c0_61 = arith.constant 0 : index
    %220 = vector.load %arg5[%c0_59, %c5_60, %c0_61] : memref<2x8x32xf32, #tpu.memory_space<vmem>>, vector<2x1x16xf32>
    %221 = vector.shape_cast %220 : vector<2x1x16xf32> to vector<2x16xf32>
    %222 = vector.shape_cast %219 : vector<2x16xf32> to vector<2x1x16xf32>
    tpu.vector_store %arg5[%c0_59, %c5_60, %c0_61], %222 {strides = array<i32>} : memref<2x8x32xf32, #tpu.memory_space<vmem>>, vector<2x1x16xf32>,
    %223 = vector.extract_strided_slice %218 {offsets = [0, 16], sizes = [2, 16], strides = [1, 1]} : vector<2x32xf32> to vector<2x16xf32>
    %c0_62 = arith.constant 0 : index
    %c2_63 = arith.constant 2 : index
    %c16_64 = arith.constant 16 : index
    %224 = vector.load %arg5[%c0_62, %c2_63, %c16_64] : memref<2x8x32xf32, #tpu.memory_space<vmem>>, vector<2x1x16xf32>
    %225 = vector.shape_cast %224 : vector<2x1x16xf32> to vector<2x16xf32>
    %226 = vector.shape_cast %223 : vector<2x16xf32> to vector<2x1x16xf32>
    tpu.vector_store %arg5[%c0_62, %c2_63, %c16_64], %226 {strides = array<i32>} : memref<2x8x32xf32, #tpu.memory_space<vmem>>, vector<2x1x16xf32>,
    %227 = vector.extract_strided_slice %18 {offsets = [6, 0, 0], sizes = [1, 2, 128], strides = [1, 1, 1]} : vector<8x2x128xf32> to vector<1x2x128xf32>
    %228 = vector.shape_cast %227 : vector<1x2x128xf32> to vector<2x128xf32>
    %229 = vector.extract_strided_slice %20 {offsets = [1, 0, 0], sizes = [1, 2, 128], strides = [1, 1, 1]} : vector<8x2x128xf32> to vector<1x2x128xf32>
    %230 = vector.shape_cast %229 : vector<1x2x128xf32> to vector<2x128xf32>
    %231 = arith.addf %228, %230 : vector<2x128xf32>
    %232 = vector.broadcast %7 : vector<1x128xf32> to vector<2x128xf32>
    %233 = arith.addf %231, %232 : vector<2x128xf32>
    %234 = arith.truncf %218 : vector<2x32xf32> to vector<2x32xbf16>
    %cst_65 = arith.constant dense<0.000000e+00> : vector<2x128xf32>
    %235 = tpu.matmul %234, %2, %cst_65 {dimension_numbers = #tpu.dot_dimension_numbers<[1], [0], [0], [1], [0, 0, 1, 1], [], []>} : vector<2x32xbf16>, vector<32x128xbf16>, vector<2x128xf32> -> vector<2x128xf32>
    %236 = arith.addf %233, %235 : vector<2x128xf32>
    %237 = vector.extract_strided_slice %236 {offsets = [0, 0], sizes = [2, 96], strides = [1, 1]} : vector<2x128xf32> to vector<2x96xf32>
    %238 = arith.negf %237 : vector<2x96xf32>
    %239 = math.exp %238 : vector<2x96xf32>
    %cst_66 = arith.constant 1.000000e+00 : f32
    %240 = vector.broadcast %cst_66 : f32 to vector<2x96xf32>
    %241 = arith.addf %240, %239 : vector<2x96xf32>
    %242 = arith.divf %240, %241 : vector<2x96xf32>
    %243 = vector.extract_strided_slice %242 {offsets = [0, 0], sizes = [2, 32], strides = [1, 1]} : vector<2x96xf32> to vector<2x32xf32>
    %244 = vector.extract_strided_slice %242 {offsets = [0, 32], sizes = [2, 32], strides = [1, 1]} : vector<2x96xf32> to vector<2x32xf32>
    %245 = vector.extract_strided_slice %242 {offsets = [0, 64], sizes = [2, 32], strides = [1, 1]} : vector<2x96xf32> to vector<2x32xf32>
    %246 = vector.extract_strided_slice %236 {offsets = [0, 96], sizes = [2, 32], strides = [1, 1]} : vector<2x128xf32> to vector<2x32xf32>
    %247 = math.tanh %246 : vector<2x32xf32>
    %248 = arith.mulf %244, %216 : vector<2x32xf32>
    %249 = arith.mulf %243, %247 : vector<2x32xf32>
    %250 = arith.addf %248, %249 : vector<2x32xf32>
    %251 = math.tanh %250 : vector<2x32xf32>
    %252 = arith.mulf %245, %251 : vector<2x32xf32>
    %253 = vector.extract_strided_slice %252 {offsets = [0, 0], sizes = [2, 16], strides = [1, 1]} : vector<2x32xf32> to vector<2x16xf32>
    %c0_67 = arith.constant 0 : index
    %c6_68 = arith.constant 6 : index
    %c0_69 = arith.constant 0 : index
    %254 = vector.load %arg5[%c0_67, %c6_68, %c0_69] : memref<2x8x32xf32, #tpu.memory_space<vmem>>, vector<2x1x16xf32>
    %255 = vector.shape_cast %254 : vector<2x1x16xf32> to vector<2x16xf32>
    %256 = vector.shape_cast %253 : vector<2x16xf32> to vector<2x1x16xf32>
    tpu.vector_store %arg5[%c0_67, %c6_68, %c0_69], %256 {strides = array<i32>} : memref<2x8x32xf32, #tpu.memory_space<vmem>>, vector<2x1x16xf32>,
    %257 = vector.extract_strided_slice %252 {offsets = [0, 16], sizes = [2, 16], strides = [1, 1]} : vector<2x32xf32> to vector<2x16xf32>
    %c0_70 = arith.constant 0 : index
    %c1_71 = arith.constant 1 : index
    %c16_72 = arith.constant 16 : index
    %258 = vector.load %arg5[%c0_70, %c1_71, %c16_72] : memref<2x8x32xf32, #tpu.memory_space<vmem>>, vector<2x1x16xf32>
    %259 = vector.shape_cast %258 : vector<2x1x16xf32> to vector<2x16xf32>
    %260 = vector.shape_cast %257 : vector<2x16xf32> to vector<2x1x16xf32>
    tpu.vector_store %arg5[%c0_70, %c1_71, %c16_72], %260 {strides = array<i32>} : memref<2x8x32xf32, #tpu.memory_space<vmem>>, vector<2x1x16xf32>,
    %261 = vector.extract_strided_slice %18 {offsets = [7, 0, 0], sizes = [1, 2, 128], strides = [1, 1, 1]} : vector<8x2x128xf32> to vector<1x2x128xf32>
    %262 = vector.shape_cast %261 : vector<1x2x128xf32> to vector<2x128xf32>
    %263 = vector.extract_strided_slice %20 {offsets = [0, 0, 0], sizes = [1, 2, 128], strides = [1, 1, 1]} : vector<8x2x128xf32> to vector<1x2x128xf32>
    %264 = vector.shape_cast %263 : vector<1x2x128xf32> to vector<2x128xf32>
    %265 = arith.addf %262, %264 : vector<2x128xf32>
    %266 = vector.broadcast %7 : vector<1x128xf32> to vector<2x128xf32>
    %267 = arith.addf %265, %266 : vector<2x128xf32>
    %268 = arith.truncf %252 : vector<2x32xf32> to vector<2x32xbf16>
    %cst_73 = arith.constant dense<0.000000e+00> : vector<2x128xf32>
    %269 = tpu.matmul %268, %2, %cst_73 {dimension_numbers = #tpu.dot_dimension_numbers<[1], [0], [0], [1], [0, 0, 1, 1], [], []>} : vector<2x32xbf16>, vector<32x128xbf16>, vector<2x128xf32> -> vector<2x128xf32>
    %270 = arith.addf %267, %269 : vector<2x128xf32>
    %271 = vector.extract_strided_slice %270 {offsets = [0, 0], sizes = [2, 96], strides = [1, 1]} : vector<2x128xf32> to vector<2x96xf32>
    %272 = arith.negf %271 : vector<2x96xf32>
    %273 = math.exp %272 : vector<2x96xf32>
    %cst_74 = arith.constant 1.000000e+00 : f32
    %274 = vector.broadcast %cst_74 : f32 to vector<2x96xf32>
    %275 = arith.addf %274, %273 : vector<2x96xf32>
    %276 = arith.divf %274, %275 : vector<2x96xf32>
    %277 = vector.extract_strided_slice %276 {offsets = [0, 0], sizes = [2, 32], strides = [1, 1]} : vector<2x96xf32> to vector<2x32xf32>
    %278 = vector.extract_strided_slice %276 {offsets = [0, 32], sizes = [2, 32], strides = [1, 1]} : vector<2x96xf32> to vector<2x32xf32>
    %279 = vector.extract_strided_slice %276 {offsets = [0, 64], sizes = [2, 32], strides = [1, 1]} : vector<2x96xf32> to vector<2x32xf32>
    %280 = vector.extract_strided_slice %270 {offsets = [0, 96], sizes = [2, 32], strides = [1, 1]} : vector<2x128xf32> to vector<2x32xf32>
    %281 = math.tanh %280 : vector<2x32xf32>
    %282 = arith.mulf %278, %250 : vector<2x32xf32>
    %283 = arith.mulf %277, %281 : vector<2x32xf32>
    %284 = arith.addf %282, %283 : vector<2x32xf32>
    %285 = math.tanh %284 : vector<2x32xf32>
    %286 = arith.mulf %279, %285 : vector<2x32xf32>
    %287 = vector.extract_strided_slice %286 {offsets = [0, 0], sizes = [2, 16], strides = [1, 1]} : vector<2x32xf32> to vector<2x16xf32>
    %c0_75 = arith.constant 0 : index
    %c7_76 = arith.constant 7 : index
    %c0_77 = arith.constant 0 : index
    %288 = vector.load %arg5[%c0_75, %c7_76, %c0_77] : memref<2x8x32xf32, #tpu.memory_space<vmem>>, vector<2x1x16xf32>
    %289 = vector.shape_cast %288 : vector<2x1x16xf32> to vector<2x16xf32>
    %290 = vector.shape_cast %287 : vector<2x16xf32> to vector<2x1x16xf32>
    tpu.vector_store %arg5[%c0_75, %c7_76, %c0_77], %290 {strides = array<i32>} : memref<2x8x32xf32, #tpu.memory_space<vmem>>, vector<2x1x16xf32>,
    %291 = vector.extract_strided_slice %286 {offsets = [0, 16], sizes = [2, 16], strides = [1, 1]} : vector<2x32xf32> to vector<2x16xf32>
    %c0_78 = arith.constant 0 : index
    %c0_79 = arith.constant 0 : index
    %c16_80 = arith.constant 16 : index
    %292 = vector.load %arg5[%c0_78, %c0_79, %c16_80] : memref<2x8x32xf32, #tpu.memory_space<vmem>>, vector<2x1x16xf32>
    %293 = vector.shape_cast %292 : vector<2x1x16xf32> to vector<2x16xf32>
    %294 = vector.shape_cast %291 : vector<2x16xf32> to vector<2x1x16xf32>
    tpu.vector_store %arg5[%c0_78, %c0_79, %c16_80], %294 {strides = array<i32>} : memref<2x8x32xf32, #tpu.memory_space<vmem>>, vector<2x1x16xf32>,
    %c0_81 = arith.constant 0 : index
    %c0_82 = arith.constant 0 : index
    %c0_83 = arith.constant 0 : index
    %295 = vector.load %arg5[%c0_81, %c0_82, %c0_83] : memref<2x8x32xf32, #tpu.memory_space<vmem>>, vector<2x8x32xf32>
    %296 = vector.shape_cast %295 : vector<2x8x32xf32> to vector<16x32xf32>
    %297 = arith.truncf %296 : vector<16x32xf32> to vector<16x32xbf16>
    %cst_84 = arith.constant dense<0.000000e+00> : vector<16x32xf32>
    %298 = tpu.matmul %297, %5, %cst_84 {dimension_numbers = #tpu.dot_dimension_numbers<[1], [0], [0], [1], [0, 0, 1, 1], [], []>} : vector<16x32xbf16>, vector<32x32xbf16>, vector<16x32xf32> -> vector<16x32xf32>
    %299 = vector.broadcast %9 : vector<1x32xf32> to vector<16x32xf32>
    %300 = arith.addf %298, %299 : vector<16x32xf32>
    %301 = vector.shape_cast %300 : vector<16x32xf32> to vector<2x8x32xf32>
    %302 = tpu.iota {dimensions = array<i32: 1>} : vector<2x12xi32>
    %303 = arith.sitofp %302 : vector<2x12xi32> to vector<2x12xf32>
    %cst_85 = arith.constant 0.000000e+00 : f32
    %304 = vector.broadcast %cst_85 : f32 to vector<2x32xf32>
    %cst_86 = arith.constant 0.000000e+00 : f32
    %305 = vector.broadcast %cst_86 : f32 to vector<2x32xf32>
    %306 = vector.shape_cast %12 : vector<1x32xf32> to vector<1x32xf32>
    %307 = vector.broadcast %306 : vector<1x32xf32> to vector<2x32xf32>
    %308 = vector.extract_strided_slice %4 {offsets = [0, 0], sizes = [1, 128], strides = [1, 1]} : vector<12x128xbf16> to vector<1x128xbf16>
    %309 = vector.shape_cast %308 : vector<1x128xbf16> to vector<1x128xbf16>
    %310 = vector.broadcast %309 : vector<1x128xbf16> to vector<2x128xbf16>
    %311 = arith.extf %310 : vector<2x128xbf16> to vector<2x128xf32>
    %312 = vector.shape_cast %307 : vector<2x32xf32> to vector<2x1x32xf32>
    %313 = vector.broadcast %312 : vector<2x1x32xf32> to vector<2x8x32xf32>
    %314 = arith.addf %301, %313 : vector<2x8x32xf32>
    %315 = math.tanh %314 : vector<2x8x32xf32>
    %316 = vector.broadcast %11 : vector<1x1x32xf32> to vector<2x8x32xf32>
    %317 = arith.mulf %315, %316 : vector<2x8x32xf32>
    %cst_87 = arith.constant dense<0.000000e+00> : vector<2x8xf32>
    %318 = vector.multi_reduction <add>, %317, %cst_87 [2] : vector<2x8x32xf32> to vector<2x8xf32>
    %cst_88 = arith.constant dense<0xFF800000> : vector<2xf32>
    %319 = vector.multi_reduction <maximumf>, %318, %cst_88 [1] : vector<2x8xf32> to vector<2xf32>
    %320 = vector.shape_cast %319 : vector<2xf32> to vector<2x1xf32>
    %321 = vector.broadcast %320 : vector<2x1xf32> to vector<2x8xf32>
    %322 = arith.subf %318, %321 : vector<2x8xf32>
    %323 = math.exp %322 : vector<2x8xf32>
    %cst_89 = arith.constant dense<0.000000e+00> : vector<2xf32>
    %324 = vector.multi_reduction <add>, %323, %cst_89 [1] : vector<2x8xf32> to vector<2xf32>
    %325 = vector.shape_cast %324 : vector<2xf32> to vector<2x1xf32>
    %326 = vector.broadcast %325 : vector<2x1xf32> to vector<2x8xf32>
    %327 = arith.divf %323, %326 : vector<2x8xf32>
    %328 = vector.shape_cast %327 : vector<2x8xf32> to vector<2x8x1xf32>
    %329 = vector.broadcast %328 : vector<2x8x1xf32> to vector<2x8x32xf32>
    %330 = arith.mulf %295, %329 : vector<2x8x32xf32>
    %cst_90 = arith.constant dense<0.000000e+00> : vector<2x32xf32>
    %331 = vector.multi_reduction <add>, %330, %cst_90 [1] : vector<2x8x32xf32> to vector<2x32xf32>
    %332 = tpu.concatenate %331, %304 in 1 : vector<2x32xf32>, vector<2x32xf32> -> vector<2x64xf32>
    %333 = arith.truncf %332 : vector<2x64xf32> to vector<2x64xbf16>
    %cst_91 = arith.constant dense<0.000000e+00> : vector<2x128xf32>
    %334 = tpu.matmul %333, %3, %cst_91 {dimension_numbers = #tpu.dot_dimension_numbers<[1], [0], [0], [1], [0, 0, 1, 1], [], []>} : vector<2x64xbf16>, vector<64x128xbf16>, vector<2x128xf32> -> vector<2x128xf32>
    %335 = arith.addf %311, %334 : vector<2x128xf32>
    %336 = vector.broadcast %8 : vector<1x128xf32> to vector<2x128xf32>
    %337 = arith.addf %335, %336 : vector<2x128xf32>
    %338 = vector.extract_strided_slice %337 {offsets = [0, 0], sizes = [2, 96], strides = [1, 1]} : vector<2x128xf32> to vector<2x96xf32>
    %339 = arith.negf %338 : vector<2x96xf32>
    %340 = math.exp %339 : vector<2x96xf32>
    %cst_92 = arith.constant 1.000000e+00 : f32
    %341 = vector.broadcast %cst_92 : f32 to vector<2x96xf32>
    %342 = arith.addf %341, %340 : vector<2x96xf32>
    %343 = arith.divf %341, %342 : vector<2x96xf32>
    %344 = vector.extract_strided_slice %343 {offsets = [0, 0], sizes = [2, 32], strides = [1, 1]} : vector<2x96xf32> to vector<2x32xf32>
    %345 = vector.extract_strided_slice %343 {offsets = [0, 32], sizes = [2, 32], strides = [1, 1]} : vector<2x96xf32> to vector<2x32xf32>
    %346 = vector.extract_strided_slice %343 {offsets = [0, 64], sizes = [2, 32], strides = [1, 1]} : vector<2x96xf32> to vector<2x32xf32>
    %347 = vector.extract_strided_slice %337 {offsets = [0, 96], sizes = [2, 32], strides = [1, 1]} : vector<2x128xf32> to vector<2x32xf32>
    %348 = math.tanh %347 : vector<2x32xf32>
    %349 = arith.mulf %345, %305 : vector<2x32xf32>
    %350 = arith.mulf %344, %348 : vector<2x32xf32>
    %351 = arith.addf %349, %350 : vector<2x32xf32>
    %352 = math.tanh %351 : vector<2x32xf32>
    %353 = arith.mulf %346, %352 : vector<2x32xf32>
    %354 = arith.truncf %353 : vector<2x32xf32> to vector<2x32xbf16>
    %cst_93 = arith.constant dense<0.000000e+00> : vector<2x44xf32>
    %355 = tpu.matmul %354, %6, %cst_93 {dimension_numbers = #tpu.dot_dimension_numbers<[1], [0], [0], [1], [0, 0, 1, 1], [], []>} : vector<2x32xbf16>, vector<32x44xbf16>, vector<2x44xf32> -> vector<2x44xf32>
    %356 = vector.broadcast %13 : vector<1x44xf32> to vector<2x44xf32>
    %357 = arith.addf %355, %356 : vector<2x44xf32>
    %358 = vector.extract_strided_slice %357 {offsets = [0, 32], sizes = [2, 12], strides = [1, 1]} : vector<2x44xf32> to vector<2x12xf32>
    %cst_94 = arith.constant dense<0xFF800000> : vector<2xf32>
    %359 = vector.multi_reduction <maximumf>, %358, %cst_94 [1] : vector<2x12xf32> to vector<2xf32>
    %360 = vector.shape_cast %359 : vector<2xf32> to vector<2x1xf32>
    %361 = vector.broadcast %360 : vector<2x1xf32> to vector<2x12xf32>
    %362 = arith.subf %358, %361 : vector<2x12xf32>
    %363 = math.exp %362 : vector<2x12xf32>
    %cst_95 = arith.constant dense<0.000000e+00> : vector<2xf32>
    %364 = vector.multi_reduction <add>, %363, %cst_95 [1] : vector<2x12xf32> to vector<2xf32>
    %365 = vector.shape_cast %364 : vector<2xf32> to vector<2x1xf32>
    %366 = math.log %365 : vector<2x1xf32>
    %367 = arith.addf %360, %366 : vector<2x1xf32>
    %368 = vector.broadcast %367 : vector<2x1xf32> to vector<2x12xf32>
    %369 = arith.subf %358, %368 : vector<2x12xf32>
    %c0_96 = arith.constant 0 : index
    %c0_97 = arith.constant 0 : index
    %c0_98 = arith.constant 0 : index
    %370 = vector.load %arg3[%c0_96, %c0_97, %c0_98] : memref<2x6x12xf32, #tpu.memory_space<vmem>>, vector<2x1x12xf32>
    %371 = vector.shape_cast %370 : vector<2x1x12xf32> to vector<2x12xf32>
    %372 = vector.shape_cast %369 : vector<2x12xf32> to vector<2x1x12xf32>
    tpu.vector_store %arg3[%c0_96, %c0_97, %c0_98], %372 {strides = array<i32>} : memref<2x6x12xf32, #tpu.memory_space<vmem>>, vector<2x1x12xf32>,
    %c0_99 = arith.constant 0 : index
    %c0_100 = arith.constant 0 : index
    %c0_101 = arith.constant 0 : index
    %373 = vector.load %arg4[%c0_99, %c0_100, %c0_101] : memref<2x6x8xf32, #tpu.memory_space<vmem>>, vector<2x1x8xf32>
    %374 = vector.shape_cast %373 : vector<2x1x8xf32> to vector<2x8xf32>
    %375 = vector.shape_cast %327 : vector<2x8xf32> to vector<2x1x8xf32>
    tpu.vector_store %arg4[%c0_99, %c0_100, %c0_101], %375 {strides = array<i32>} : memref<2x6x8xf32, #tpu.memory_space<vmem>>, vector<2x1x8xf32>,
    %376 = vector.extract_strided_slice %357 {offsets = [0, 0], sizes = [2, 32], strides = [1, 1]} : vector<2x44xf32> to vector<2x32xf32>
    %cst_102 = arith.constant dense<0xFF800000> : vector<2xf32>
    %377 = vector.multi_reduction <maximumf>, %369, %cst_102 [1] : vector<2x12xf32> to vector<2xf32>
    %378 = vector.shape_cast %377 : vector<2xf32> to vector<2x1xf32>
    %379 = vector.broadcast %378 : vector<2x1xf32> to vector<2x12xf32>
    %380 = arith.cmpf oge, %369, %379 : vector<2x12xf32>
    %cst_103 = arith.constant 1.200000e+01 : f32
    %381 = vector.broadcast %cst_103 : f32 to vector<2x12xf32>
    %382 = arith.select %380, %303, %381 : vector<2x12xi1>, vector<2x12xf32>
    %cst_104 = arith.constant dense<0x7F800000> : vector<2xf32>
    %383 = vector.multi_reduction <minimumf>, %382, %cst_104 [1] : vector<2x12xf32> to vector<2xf32>
    %384 = vector.shape_cast %383 : vector<2xf32> to vector<2x1xf32>
    %385 = vector.broadcast %384 : vector<2x1xf32> to vector<2x12xf32>
    %386 = arith.cmpf oeq, %303, %385 : vector<2x12xf32>
    %387 = arith.extui %386 : vector<2x12xi1> to vector<2x12xi32>
    %388 = arith.sitofp %387 : vector<2x12xi32> to vector<2x12xf32>
    %389 = arith.truncf %388 : vector<2x12xf32> to vector<2x12xbf16>
    %cst_105 = arith.constant dense<0.000000e+00> : vector<2x128xf32>
    %390 = tpu.matmul %389, %4, %cst_105 {dimension_numbers = #tpu.dot_dimension_numbers<[1], [0], [0], [1], [0, 0, 1, 1], [], []>} : vector<2x12xbf16>, vector<12x128xbf16>, vector<2x128xf32> -> vector<2x128xf32>
    %391 = vector.shape_cast %376 : vector<2x32xf32> to vector<2x1x32xf32>
    %392 = vector.broadcast %391 : vector<2x1x32xf32> to vector<2x8x32xf32>
    %393 = arith.addf %301, %392 : vector<2x8x32xf32>
    %394 = math.tanh %393 : vector<2x8x32xf32>
    %395 = vector.broadcast %11 : vector<1x1x32xf32> to vector<2x8x32xf32>
    %396 = arith.mulf %394, %395 : vector<2x8x32xf32>
    %cst_106 = arith.constant dense<0.000000e+00> : vector<2x8xf32>
    %397 = vector.multi_reduction <add>, %396, %cst_106 [2] : vector<2x8x32xf32> to vector<2x8xf32>
    %cst_107 = arith.constant dense<0xFF800000> : vector<2xf32>
    %398 = vector.multi_reduction <maximumf>, %397, %cst_107 [1] : vector<2x8xf32> to vector<2xf32>
    %399 = vector.shape_cast %398 : vector<2xf32> to vector<2x1xf32>
    %400 = vector.broadcast %399 : vector<2x1xf32> to vector<2x8xf32>
    %401 = arith.subf %397, %400 : vector<2x8xf32>
    %402 = math.exp %401 : vector<2x8xf32>
    %cst_108 = arith.constant dense<0.000000e+00> : vector<2xf32>
    %403 = vector.multi_reduction <add>, %402, %cst_108 [1] : vector<2x8xf32> to vector<2xf32>
    %404 = vector.shape_cast %403 : vector<2xf32> to vector<2x1xf32>
    %405 = vector.broadcast %404 : vector<2x1xf32> to vector<2x8xf32>
    %406 = arith.divf %402, %405 : vector<2x8xf32>
    %407 = vector.shape_cast %406 : vector<2x8xf32> to vector<2x8x1xf32>
    %408 = vector.broadcast %407 : vector<2x8x1xf32> to vector<2x8x32xf32>
    %409 = arith.mulf %295, %408 : vector<2x8x32xf32>
    %cst_109 = arith.constant dense<0.000000e+00> : vector<2x32xf32>
    %410 = vector.multi_reduction <add>, %409, %cst_109 [1] : vector<2x8x32xf32> to vector<2x32xf32>
    %411 = tpu.concatenate %410, %353 in 1 : vector<2x32xf32>, vector<2x32xf32> -> vector<2x64xf32>
    %412 = arith.truncf %411 : vector<2x64xf32> to vector<2x64xbf16>
    %cst_110 = arith.constant dense<0.000000e+00> : vector<2x128xf32>
    %413 = tpu.matmul %412, %3, %cst_110 {dimension_numbers = #tpu.dot_dimension_numbers<[1], [0], [0], [1], [0, 0, 1, 1], [], []>} : vector<2x64xbf16>, vector<64x128xbf16>, vector<2x128xf32> -> vector<2x128xf32>
    %414 = arith.addf %390, %413 : vector<2x128xf32>
    %415 = vector.broadcast %8 : vector<1x128xf32> to vector<2x128xf32>
    %416 = arith.addf %414, %415 : vector<2x128xf32>
    %417 = vector.extract_strided_slice %416 {offsets = [0, 0], sizes = [2, 96], strides = [1, 1]} : vector<2x128xf32> to vector<2x96xf32>
    %418 = arith.negf %417 : vector<2x96xf32>
    %419 = math.exp %418 : vector<2x96xf32>
    %cst_111 = arith.constant 1.000000e+00 : f32
    %420 = vector.broadcast %cst_111 : f32 to vector<2x96xf32>
    %421 = arith.addf %420, %419 : vector<2x96xf32>
    %422 = arith.divf %420, %421 : vector<2x96xf32>
    %423 = vector.extract_strided_slice %422 {offsets = [0, 0], sizes = [2, 32], strides = [1, 1]} : vector<2x96xf32> to vector<2x32xf32>
    %424 = vector.extract_strided_slice %422 {offsets = [0, 32], sizes = [2, 32], strides = [1, 1]} : vector<2x96xf32> to vector<2x32xf32>
    %425 = vector.extract_strided_slice %422 {offsets = [0, 64], sizes = [2, 32], strides = [1, 1]} : vector<2x96xf32> to vector<2x32xf32>
    %426 = vector.extract_strided_slice %416 {offsets = [0, 96], sizes = [2, 32], strides = [1, 1]} : vector<2x128xf32> to vector<2x32xf32>
    %427 = math.tanh %426 : vector<2x32xf32>
    %428 = arith.mulf %424, %351 : vector<2x32xf32>
    %429 = arith.mulf %423, %427 : vector<2x32xf32>
    %430 = arith.addf %428, %429 : vector<2x32xf32>
    %431 = math.tanh %430 : vector<2x32xf32>
    %432 = arith.mulf %425, %431 : vector<2x32xf32>
    %433 = arith.truncf %432 : vector<2x32xf32> to vector<2x32xbf16>
    %cst_112 = arith.constant dense<0.000000e+00> : vector<2x44xf32>
    %434 = tpu.matmul %433, %6, %cst_112 {dimension_numbers = #tpu.dot_dimension_numbers<[1], [0], [0], [1], [0, 0, 1, 1], [], []>} : vector<2x32xbf16>, vector<32x44xbf16>, vector<2x44xf32> -> vector<2x44xf32>
    %435 = vector.broadcast %13 : vector<1x44xf32> to vector<2x44xf32>
    %436 = arith.addf %434, %435 : vector<2x44xf32>
    %437 = vector.extract_strided_slice %436 {offsets = [0, 32], sizes = [2, 12], strides = [1, 1]} : vector<2x44xf32> to vector<2x12xf32>
    %cst_113 = arith.constant dense<0xFF800000> : vector<2xf32>
    %438 = vector.multi_reduction <maximumf>, %437, %cst_113 [1] : vector<2x12xf32> to vector<2xf32>
    %439 = vector.shape_cast %438 : vector<2xf32> to vector<2x1xf32>
    %440 = vector.broadcast %439 : vector<2x1xf32> to vector<2x12xf32>
    %441 = arith.subf %437, %440 : vector<2x12xf32>
    %442 = math.exp %441 : vector<2x12xf32>
    %cst_114 = arith.constant dense<0.000000e+00> : vector<2xf32>
    %443 = vector.multi_reduction <add>, %442, %cst_114 [1] : vector<2x12xf32> to vector<2xf32>
    %444 = vector.shape_cast %443 : vector<2xf32> to vector<2x1xf32>
    %445 = math.log %444 : vector<2x1xf32>
    %446 = arith.addf %439, %445 : vector<2x1xf32>
    %447 = vector.broadcast %446 : vector<2x1xf32> to vector<2x12xf32>
    %448 = arith.subf %437, %447 : vector<2x12xf32>
    %c0_115 = arith.constant 0 : index
    %c1_116 = arith.constant 1 : index
    %c0_117 = arith.constant 0 : index
    %449 = vector.load %arg3[%c0_115, %c1_116, %c0_117] : memref<2x6x12xf32, #tpu.memory_space<vmem>>, vector<2x1x12xf32>
    %450 = vector.shape_cast %449 : vector<2x1x12xf32> to vector<2x12xf32>
    %451 = vector.shape_cast %448 : vector<2x12xf32> to vector<2x1x12xf32>
    tpu.vector_store %arg3[%c0_115, %c1_116, %c0_117], %451 {strides = array<i32>} : memref<2x6x12xf32, #tpu.memory_space<vmem>>, vector<2x1x12xf32>,
    %c0_118 = arith.constant 0 : index
    %c1_119 = arith.constant 1 : index
    %c0_120 = arith.constant 0 : index
    %452 = vector.load %arg4[%c0_118, %c1_119, %c0_120] : memref<2x6x8xf32, #tpu.memory_space<vmem>>, vector<2x1x8xf32>
    %453 = vector.shape_cast %452 : vector<2x1x8xf32> to vector<2x8xf32>
    %454 = vector.shape_cast %406 : vector<2x8xf32> to vector<2x1x8xf32>
    tpu.vector_store %arg4[%c0_118, %c1_119, %c0_120], %454 {strides = array<i32>} : memref<2x6x8xf32, #tpu.memory_space<vmem>>, vector<2x1x8xf32>,
    %455 = vector.extract_strided_slice %436 {offsets = [0, 0], sizes = [2, 32], strides = [1, 1]} : vector<2x44xf32> to vector<2x32xf32>
    %cst_121 = arith.constant dense<0xFF800000> : vector<2xf32>
    %456 = vector.multi_reduction <maximumf>, %448, %cst_121 [1] : vector<2x12xf32> to vector<2xf32>
    %457 = vector.shape_cast %456 : vector<2xf32> to vector<2x1xf32>
    %458 = vector.broadcast %457 : vector<2x1xf32> to vector<2x12xf32>
    %459 = arith.cmpf oge, %448, %458 : vector<2x12xf32>
    %cst_122 = arith.constant 1.200000e+01 : f32
    %460 = vector.broadcast %cst_122 : f32 to vector<2x12xf32>
    %461 = arith.select %459, %303, %460 : vector<2x12xi1>, vector<2x12xf32>
    %cst_123 = arith.constant dense<0x7F800000> : vector<2xf32>
    %462 = vector.multi_reduction <minimumf>, %461, %cst_123 [1] : vector<2x12xf32> to vector<2xf32>
    %463 = vector.shape_cast %462 : vector<2xf32> to vector<2x1xf32>
    %464 = vector.broadcast %463 : vector<2x1xf32> to vector<2x12xf32>
    %465 = arith.cmpf oeq, %303, %464 : vector<2x12xf32>
    %466 = arith.extui %465 : vector<2x12xi1> to vector<2x12xi32>
    %467 = arith.sitofp %466 : vector<2x12xi32> to vector<2x12xf32>
    %468 = arith.truncf %467 : vector<2x12xf32> to vector<2x12xbf16>
    %cst_124 = arith.constant dense<0.000000e+00> : vector<2x128xf32>
    %469 = tpu.matmul %468, %4, %cst_124 {dimension_numbers = #tpu.dot_dimension_numbers<[1], [0], [0], [1], [0, 0, 1, 1], [], []>} : vector<2x12xbf16>, vector<12x128xbf16>, vector<2x128xf32> -> vector<2x128xf32>
    %470 = vector.shape_cast %455 : vector<2x32xf32> to vector<2x1x32xf32>
    %471 = vector.broadcast %470 : vector<2x1x32xf32> to vector<2x8x32xf32>
    %472 = arith.addf %301, %471 : vector<2x8x32xf32>
    %473 = math.tanh %472 : vector<2x8x32xf32>
    %474 = vector.broadcast %11 : vector<1x1x32xf32> to vector<2x8x32xf32>
    %475 = arith.mulf %473, %474 : vector<2x8x32xf32>
    %cst_125 = arith.constant dense<0.000000e+00> : vector<2x8xf32>
    %476 = vector.multi_reduction <add>, %475, %cst_125 [2] : vector<2x8x32xf32> to vector<2x8xf32>
    %cst_126 = arith.constant dense<0xFF800000> : vector<2xf32>
    %477 = vector.multi_reduction <maximumf>, %476, %cst_126 [1] : vector<2x8xf32> to vector<2xf32>
    %478 = vector.shape_cast %477 : vector<2xf32> to vector<2x1xf32>
    %479 = vector.broadcast %478 : vector<2x1xf32> to vector<2x8xf32>
    %480 = arith.subf %476, %479 : vector<2x8xf32>
    %481 = math.exp %480 : vector<2x8xf32>
    %cst_127 = arith.constant dense<0.000000e+00> : vector<2xf32>
    %482 = vector.multi_reduction <add>, %481, %cst_127 [1] : vector<2x8xf32> to vector<2xf32>
    %483 = vector.shape_cast %482 : vector<2xf32> to vector<2x1xf32>
    %484 = vector.broadcast %483 : vector<2x1xf32> to vector<2x8xf32>
    %485 = arith.divf %481, %484 : vector<2x8xf32>
    %486 = vector.shape_cast %485 : vector<2x8xf32> to vector<2x8x1xf32>
    %487 = vector.broadcast %486 : vector<2x8x1xf32> to vector<2x8x32xf32>
    %488 = arith.mulf %295, %487 : vector<2x8x32xf32>
    %cst_128 = arith.constant dense<0.000000e+00> : vector<2x32xf32>
    %489 = vector.multi_reduction <add>, %488, %cst_128 [1] : vector<2x8x32xf32> to vector<2x32xf32>
    %490 = tpu.concatenate %489, %432 in 1 : vector<2x32xf32>, vector<2x32xf32> -> vector<2x64xf32>
    %491 = arith.truncf %490 : vector<2x64xf32> to vector<2x64xbf16>
    %cst_129 = arith.constant dense<0.000000e+00> : vector<2x128xf32>
    %492 = tpu.matmul %491, %3, %cst_129 {dimension_numbers = #tpu.dot_dimension_numbers<[1], [0], [0], [1], [0, 0, 1, 1], [], []>} : vector<2x64xbf16>, vector<64x128xbf16>, vector<2x128xf32> -> vector<2x128xf32>
    %493 = arith.addf %469, %492 : vector<2x128xf32>
    %494 = vector.broadcast %8 : vector<1x128xf32> to vector<2x128xf32>
    %495 = arith.addf %493, %494 : vector<2x128xf32>
    %496 = vector.extract_strided_slice %495 {offsets = [0, 0], sizes = [2, 96], strides = [1, 1]} : vector<2x128xf32> to vector<2x96xf32>
    %497 = arith.negf %496 : vector<2x96xf32>
    %498 = math.exp %497 : vector<2x96xf32>
    %cst_130 = arith.constant 1.000000e+00 : f32
    %499 = vector.broadcast %cst_130 : f32 to vector<2x96xf32>
    %500 = arith.addf %499, %498 : vector<2x96xf32>
    %501 = arith.divf %499, %500 : vector<2x96xf32>
    %502 = vector.extract_strided_slice %501 {offsets = [0, 0], sizes = [2, 32], strides = [1, 1]} : vector<2x96xf32> to vector<2x32xf32>
    %503 = vector.extract_strided_slice %501 {offsets = [0, 32], sizes = [2, 32], strides = [1, 1]} : vector<2x96xf32> to vector<2x32xf32>
    %504 = vector.extract_strided_slice %501 {offsets = [0, 64], sizes = [2, 32], strides = [1, 1]} : vector<2x96xf32> to vector<2x32xf32>
    %505 = vector.extract_strided_slice %495 {offsets = [0, 96], sizes = [2, 32], strides = [1, 1]} : vector<2x128xf32> to vector<2x32xf32>
    %506 = math.tanh %505 : vector<2x32xf32>
    %507 = arith.mulf %503, %430 : vector<2x32xf32>
    %508 = arith.mulf %502, %506 : vector<2x32xf32>
    %509 = arith.addf %507, %508 : vector<2x32xf32>
    %510 = math.tanh %509 : vector<2x32xf32>
    %511 = arith.mulf %504, %510 : vector<2x32xf32>
    %512 = arith.truncf %511 : vector<2x32xf32> to vector<2x32xbf16>
    %cst_131 = arith.constant dense<0.000000e+00> : vector<2x44xf32>
    %513 = tpu.matmul %512, %6, %cst_131 {dimension_numbers = #tpu.dot_dimension_numbers<[1], [0], [0], [1], [0, 0, 1, 1], [], []>} : vector<2x32xbf16>, vector<32x44xbf16>, vector<2x44xf32> -> vector<2x44xf32>
    %514 = vector.broadcast %13 : vector<1x44xf32> to vector<2x44xf32>
    %515 = arith.addf %513, %514 : vector<2x44xf32>
    %516 = vector.extract_strided_slice %515 {offsets = [0, 32], sizes = [2, 12], strides = [1, 1]} : vector<2x44xf32> to vector<2x12xf32>
    %cst_132 = arith.constant dense<0xFF800000> : vector<2xf32>
    %517 = vector.multi_reduction <maximumf>, %516, %cst_132 [1] : vector<2x12xf32> to vector<2xf32>
    %518 = vector.shape_cast %517 : vector<2xf32> to vector<2x1xf32>
    %519 = vector.broadcast %518 : vector<2x1xf32> to vector<2x12xf32>
    %520 = arith.subf %516, %519 : vector<2x12xf32>
    %521 = math.exp %520 : vector<2x12xf32>
    %cst_133 = arith.constant dense<0.000000e+00> : vector<2xf32>
    %522 = vector.multi_reduction <add>, %521, %cst_133 [1] : vector<2x12xf32> to vector<2xf32>
    %523 = vector.shape_cast %522 : vector<2xf32> to vector<2x1xf32>
    %524 = math.log %523 : vector<2x1xf32>
    %525 = arith.addf %518, %524 : vector<2x1xf32>
    %526 = vector.broadcast %525 : vector<2x1xf32> to vector<2x12xf32>
    %527 = arith.subf %516, %526 : vector<2x12xf32>
    %c0_134 = arith.constant 0 : index
    %c2_135 = arith.constant 2 : index
    %c0_136 = arith.constant 0 : index
    %528 = vector.load %arg3[%c0_134, %c2_135, %c0_136] : memref<2x6x12xf32, #tpu.memory_space<vmem>>, vector<2x1x12xf32>
    %529 = vector.shape_cast %528 : vector<2x1x12xf32> to vector<2x12xf32>
    %530 = vector.shape_cast %527 : vector<2x12xf32> to vector<2x1x12xf32>
    tpu.vector_store %arg3[%c0_134, %c2_135, %c0_136], %530 {strides = array<i32>} : memref<2x6x12xf32, #tpu.memory_space<vmem>>, vector<2x1x12xf32>,
    %c0_137 = arith.constant 0 : index
    %c2_138 = arith.constant 2 : index
    %c0_139 = arith.constant 0 : index
    %531 = vector.load %arg4[%c0_137, %c2_138, %c0_139] : memref<2x6x8xf32, #tpu.memory_space<vmem>>, vector<2x1x8xf32>
    %532 = vector.shape_cast %531 : vector<2x1x8xf32> to vector<2x8xf32>
    %533 = vector.shape_cast %485 : vector<2x8xf32> to vector<2x1x8xf32>
    tpu.vector_store %arg4[%c0_137, %c2_138, %c0_139], %533 {strides = array<i32>} : memref<2x6x8xf32, #tpu.memory_space<vmem>>, vector<2x1x8xf32>,
    %534 = vector.extract_strided_slice %515 {offsets = [0, 0], sizes = [2, 32], strides = [1, 1]} : vector<2x44xf32> to vector<2x32xf32>
    %cst_140 = arith.constant dense<0xFF800000> : vector<2xf32>
    %535 = vector.multi_reduction <maximumf>, %527, %cst_140 [1] : vector<2x12xf32> to vector<2xf32>
    %536 = vector.shape_cast %535 : vector<2xf32> to vector<2x1xf32>
    %537 = vector.broadcast %536 : vector<2x1xf32> to vector<2x12xf32>
    %538 = arith.cmpf oge, %527, %537 : vector<2x12xf32>
    %cst_141 = arith.constant 1.200000e+01 : f32
    %539 = vector.broadcast %cst_141 : f32 to vector<2x12xf32>
    %540 = arith.select %538, %303, %539 : vector<2x12xi1>, vector<2x12xf32>
    %cst_142 = arith.constant dense<0x7F800000> : vector<2xf32>
    %541 = vector.multi_reduction <minimumf>, %540, %cst_142 [1] : vector<2x12xf32> to vector<2xf32>
    %542 = vector.shape_cast %541 : vector<2xf32> to vector<2x1xf32>
    %543 = vector.broadcast %542 : vector<2x1xf32> to vector<2x12xf32>
    %544 = arith.cmpf oeq, %303, %543 : vector<2x12xf32>
    %545 = arith.extui %544 : vector<2x12xi1> to vector<2x12xi32>
    %546 = arith.sitofp %545 : vector<2x12xi32> to vector<2x12xf32>
    %547 = arith.truncf %546 : vector<2x12xf32> to vector<2x12xbf16>
    %cst_143 = arith.constant dense<0.000000e+00> : vector<2x128xf32>
    %548 = tpu.matmul %547, %4, %cst_143 {dimension_numbers = #tpu.dot_dimension_numbers<[1], [0], [0], [1], [0, 0, 1, 1], [], []>} : vector<2x12xbf16>, vector<12x128xbf16>, vector<2x128xf32> -> vector<2x128xf32>
    %549 = vector.shape_cast %534 : vector<2x32xf32> to vector<2x1x32xf32>
    %550 = vector.broadcast %549 : vector<2x1x32xf32> to vector<2x8x32xf32>
    %551 = arith.addf %301, %550 : vector<2x8x32xf32>
    %552 = math.tanh %551 : vector<2x8x32xf32>
    %553 = vector.broadcast %11 : vector<1x1x32xf32> to vector<2x8x32xf32>
    %554 = arith.mulf %552, %553 : vector<2x8x32xf32>
    %cst_144 = arith.constant dense<0.000000e+00> : vector<2x8xf32>
    %555 = vector.multi_reduction <add>, %554, %cst_144 [2] : vector<2x8x32xf32> to vector<2x8xf32>
    %cst_145 = arith.constant dense<0xFF800000> : vector<2xf32>
    %556 = vector.multi_reduction <maximumf>, %555, %cst_145 [1] : vector<2x8xf32> to vector<2xf32>
    %557 = vector.shape_cast %556 : vector<2xf32> to vector<2x1xf32>
    %558 = vector.broadcast %557 : vector<2x1xf32> to vector<2x8xf32>
    %559 = arith.subf %555, %558 : vector<2x8xf32>
    %560 = math.exp %559 : vector<2x8xf32>
    %cst_146 = arith.constant dense<0.000000e+00> : vector<2xf32>
    %561 = vector.multi_reduction <add>, %560, %cst_146 [1] : vector<2x8xf32> to vector<2xf32>
    %562 = vector.shape_cast %561 : vector<2xf32> to vector<2x1xf32>
    %563 = vector.broadcast %562 : vector<2x1xf32> to vector<2x8xf32>
    %564 = arith.divf %560, %563 : vector<2x8xf32>
    %565 = vector.shape_cast %564 : vector<2x8xf32> to vector<2x8x1xf32>
    %566 = vector.broadcast %565 : vector<2x8x1xf32> to vector<2x8x32xf32>
    %567 = arith.mulf %295, %566 : vector<2x8x32xf32>
    %cst_147 = arith.constant dense<0.000000e+00> : vector<2x32xf32>
    %568 = vector.multi_reduction <add>, %567, %cst_147 [1] : vector<2x8x32xf32> to vector<2x32xf32>
    %569 = tpu.concatenate %568, %511 in 1 : vector<2x32xf32>, vector<2x32xf32> -> vector<2x64xf32>
    %570 = arith.truncf %569 : vector<2x64xf32> to vector<2x64xbf16>
    %cst_148 = arith.constant dense<0.000000e+00> : vector<2x128xf32>
    %571 = tpu.matmul %570, %3, %cst_148 {dimension_numbers = #tpu.dot_dimension_numbers<[1], [0], [0], [1], [0, 0, 1, 1], [], []>} : vector<2x64xbf16>, vector<64x128xbf16>, vector<2x128xf32> -> vector<2x128xf32>
    %572 = arith.addf %548, %571 : vector<2x128xf32>
    %573 = vector.broadcast %8 : vector<1x128xf32> to vector<2x128xf32>
    %574 = arith.addf %572, %573 : vector<2x128xf32>
    %575 = vector.extract_strided_slice %574 {offsets = [0, 0], sizes = [2, 96], strides = [1, 1]} : vector<2x128xf32> to vector<2x96xf32>
    %576 = arith.negf %575 : vector<2x96xf32>
    %577 = math.exp %576 : vector<2x96xf32>
    %cst_149 = arith.constant 1.000000e+00 : f32
    %578 = vector.broadcast %cst_149 : f32 to vector<2x96xf32>
    %579 = arith.addf %578, %577 : vector<2x96xf32>
    %580 = arith.divf %578, %579 : vector<2x96xf32>
    %581 = vector.extract_strided_slice %580 {offsets = [0, 0], sizes = [2, 32], strides = [1, 1]} : vector<2x96xf32> to vector<2x32xf32>
    %582 = vector.extract_strided_slice %580 {offsets = [0, 32], sizes = [2, 32], strides = [1, 1]} : vector<2x96xf32> to vector<2x32xf32>
    %583 = vector.extract_strided_slice %580 {offsets = [0, 64], sizes = [2, 32], strides = [1, 1]} : vector<2x96xf32> to vector<2x32xf32>
    %584 = vector.extract_strided_slice %574 {offsets = [0, 96], sizes = [2, 32], strides = [1, 1]} : vector<2x128xf32> to vector<2x32xf32>
    %585 = math.tanh %584 : vector<2x32xf32>
    %586 = arith.mulf %582, %509 : vector<2x32xf32>
    %587 = arith.mulf %581, %585 : vector<2x32xf32>
    %588 = arith.addf %586, %587 : vector<2x32xf32>
    %589 = math.tanh %588 : vector<2x32xf32>
    %590 = arith.mulf %583, %589 : vector<2x32xf32>
    %591 = arith.truncf %590 : vector<2x32xf32> to vector<2x32xbf16>
    %cst_150 = arith.constant dense<0.000000e+00> : vector<2x44xf32>
    %592 = tpu.matmul %591, %6, %cst_150 {dimension_numbers = #tpu.dot_dimension_numbers<[1], [0], [0], [1], [0, 0, 1, 1], [], []>} : vector<2x32xbf16>, vector<32x44xbf16>, vector<2x44xf32> -> vector<2x44xf32>
    %593 = vector.broadcast %13 : vector<1x44xf32> to vector<2x44xf32>
    %594 = arith.addf %592, %593 : vector<2x44xf32>
    %595 = vector.extract_strided_slice %594 {offsets = [0, 32], sizes = [2, 12], strides = [1, 1]} : vector<2x44xf32> to vector<2x12xf32>
    %cst_151 = arith.constant dense<0xFF800000> : vector<2xf32>
    %596 = vector.multi_reduction <maximumf>, %595, %cst_151 [1] : vector<2x12xf32> to vector<2xf32>
    %597 = vector.shape_cast %596 : vector<2xf32> to vector<2x1xf32>
    %598 = vector.broadcast %597 : vector<2x1xf32> to vector<2x12xf32>
    %599 = arith.subf %595, %598 : vector<2x12xf32>
    %600 = math.exp %599 : vector<2x12xf32>
    %cst_152 = arith.constant dense<0.000000e+00> : vector<2xf32>
    %601 = vector.multi_reduction <add>, %600, %cst_152 [1] : vector<2x12xf32> to vector<2xf32>
    %602 = vector.shape_cast %601 : vector<2xf32> to vector<2x1xf32>
    %603 = math.log %602 : vector<2x1xf32>
    %604 = arith.addf %597, %603 : vector<2x1xf32>
    %605 = vector.broadcast %604 : vector<2x1xf32> to vector<2x12xf32>
    %606 = arith.subf %595, %605 : vector<2x12xf32>
    %c0_153 = arith.constant 0 : index
    %c3_154 = arith.constant 3 : index
    %c0_155 = arith.constant 0 : index
    %607 = vector.load %arg3[%c0_153, %c3_154, %c0_155] : memref<2x6x12xf32, #tpu.memory_space<vmem>>, vector<2x1x12xf32>
    %608 = vector.shape_cast %607 : vector<2x1x12xf32> to vector<2x12xf32>
    %609 = vector.shape_cast %606 : vector<2x12xf32> to vector<2x1x12xf32>
    tpu.vector_store %arg3[%c0_153, %c3_154, %c0_155], %609 {strides = array<i32>} : memref<2x6x12xf32, #tpu.memory_space<vmem>>, vector<2x1x12xf32>,
    %c0_156 = arith.constant 0 : index
    %c3_157 = arith.constant 3 : index
    %c0_158 = arith.constant 0 : index
    %610 = vector.load %arg4[%c0_156, %c3_157, %c0_158] : memref<2x6x8xf32, #tpu.memory_space<vmem>>, vector<2x1x8xf32>
    %611 = vector.shape_cast %610 : vector<2x1x8xf32> to vector<2x8xf32>
    %612 = vector.shape_cast %564 : vector<2x8xf32> to vector<2x1x8xf32>
    tpu.vector_store %arg4[%c0_156, %c3_157, %c0_158], %612 {strides = array<i32>} : memref<2x6x8xf32, #tpu.memory_space<vmem>>, vector<2x1x8xf32>,
    %613 = vector.extract_strided_slice %594 {offsets = [0, 0], sizes = [2, 32], strides = [1, 1]} : vector<2x44xf32> to vector<2x32xf32>
    %cst_159 = arith.constant dense<0xFF800000> : vector<2xf32>
    %614 = vector.multi_reduction <maximumf>, %606, %cst_159 [1] : vector<2x12xf32> to vector<2xf32>
    %615 = vector.shape_cast %614 : vector<2xf32> to vector<2x1xf32>
    %616 = vector.broadcast %615 : vector<2x1xf32> to vector<2x12xf32>
    %617 = arith.cmpf oge, %606, %616 : vector<2x12xf32>
    %cst_160 = arith.constant 1.200000e+01 : f32
    %618 = vector.broadcast %cst_160 : f32 to vector<2x12xf32>
    %619 = arith.select %617, %303, %618 : vector<2x12xi1>, vector<2x12xf32>
    %cst_161 = arith.constant dense<0x7F800000> : vector<2xf32>
    %620 = vector.multi_reduction <minimumf>, %619, %cst_161 [1] : vector<2x12xf32> to vector<2xf32>
    %621 = vector.shape_cast %620 : vector<2xf32> to vector<2x1xf32>
    %622 = vector.broadcast %621 : vector<2x1xf32> to vector<2x12xf32>
    %623 = arith.cmpf oeq, %303, %622 : vector<2x12xf32>
    %624 = arith.extui %623 : vector<2x12xi1> to vector<2x12xi32>
    %625 = arith.sitofp %624 : vector<2x12xi32> to vector<2x12xf32>
    %626 = arith.truncf %625 : vector<2x12xf32> to vector<2x12xbf16>
    %cst_162 = arith.constant dense<0.000000e+00> : vector<2x128xf32>
    %627 = tpu.matmul %626, %4, %cst_162 {dimension_numbers = #tpu.dot_dimension_numbers<[1], [0], [0], [1], [0, 0, 1, 1], [], []>} : vector<2x12xbf16>, vector<12x128xbf16>, vector<2x128xf32> -> vector<2x128xf32>
    %628 = vector.shape_cast %613 : vector<2x32xf32> to vector<2x1x32xf32>
    %629 = vector.broadcast %628 : vector<2x1x32xf32> to vector<2x8x32xf32>
    %630 = arith.addf %301, %629 : vector<2x8x32xf32>
    %631 = math.tanh %630 : vector<2x8x32xf32>
    %632 = vector.broadcast %11 : vector<1x1x32xf32> to vector<2x8x32xf32>
    %633 = arith.mulf %631, %632 : vector<2x8x32xf32>
    %cst_163 = arith.constant dense<0.000000e+00> : vector<2x8xf32>
    %634 = vector.multi_reduction <add>, %633, %cst_163 [2] : vector<2x8x32xf32> to vector<2x8xf32>
    %cst_164 = arith.constant dense<0xFF800000> : vector<2xf32>
    %635 = vector.multi_reduction <maximumf>, %634, %cst_164 [1] : vector<2x8xf32> to vector<2xf32>
    %636 = vector.shape_cast %635 : vector<2xf32> to vector<2x1xf32>
    %637 = vector.broadcast %636 : vector<2x1xf32> to vector<2x8xf32>
    %638 = arith.subf %634, %637 : vector<2x8xf32>
    %639 = math.exp %638 : vector<2x8xf32>
    %cst_165 = arith.constant dense<0.000000e+00> : vector<2xf32>
    %640 = vector.multi_reduction <add>, %639, %cst_165 [1] : vector<2x8xf32> to vector<2xf32>
    %641 = vector.shape_cast %640 : vector<2xf32> to vector<2x1xf32>
    %642 = vector.broadcast %641 : vector<2x1xf32> to vector<2x8xf32>
    %643 = arith.divf %639, %642 : vector<2x8xf32>
    %644 = vector.shape_cast %643 : vector<2x8xf32> to vector<2x8x1xf32>
    %645 = vector.broadcast %644 : vector<2x8x1xf32> to vector<2x8x32xf32>
    %646 = arith.mulf %295, %645 : vector<2x8x32xf32>
    %cst_166 = arith.constant dense<0.000000e+00> : vector<2x32xf32>
    %647 = vector.multi_reduction <add>, %646, %cst_166 [1] : vector<2x8x32xf32> to vector<2x32xf32>
    %648 = tpu.concatenate %647, %590 in 1 : vector<2x32xf32>, vector<2x32xf32> -> vector<2x64xf32>
    %649 = arith.truncf %648 : vector<2x64xf32> to vector<2x64xbf16>
    %cst_167 = arith.constant dense<0.000000e+00> : vector<2x128xf32>
    %650 = tpu.matmul %649, %3, %cst_167 {dimension_numbers = #tpu.dot_dimension_numbers<[1], [0], [0], [1], [0, 0, 1, 1], [], []>} : vector<2x64xbf16>, vector<64x128xbf16>, vector<2x128xf32> -> vector<2x128xf32>
    %651 = arith.addf %627, %650 : vector<2x128xf32>
    %652 = vector.broadcast %8 : vector<1x128xf32> to vector<2x128xf32>
    %653 = arith.addf %651, %652 : vector<2x128xf32>
    %654 = vector.extract_strided_slice %653 {offsets = [0, 0], sizes = [2, 96], strides = [1, 1]} : vector<2x128xf32> to vector<2x96xf32>
    %655 = arith.negf %654 : vector<2x96xf32>
    %656 = math.exp %655 : vector<2x96xf32>
    %cst_168 = arith.constant 1.000000e+00 : f32
    %657 = vector.broadcast %cst_168 : f32 to vector<2x96xf32>
    %658 = arith.addf %657, %656 : vector<2x96xf32>
    %659 = arith.divf %657, %658 : vector<2x96xf32>
    %660 = vector.extract_strided_slice %659 {offsets = [0, 0], sizes = [2, 32], strides = [1, 1]} : vector<2x96xf32> to vector<2x32xf32>
    %661 = vector.extract_strided_slice %659 {offsets = [0, 32], sizes = [2, 32], strides = [1, 1]} : vector<2x96xf32> to vector<2x32xf32>
    %662 = vector.extract_strided_slice %659 {offsets = [0, 64], sizes = [2, 32], strides = [1, 1]} : vector<2x96xf32> to vector<2x32xf32>
    %663 = vector.extract_strided_slice %653 {offsets = [0, 96], sizes = [2, 32], strides = [1, 1]} : vector<2x128xf32> to vector<2x32xf32>
    %664 = math.tanh %663 : vector<2x32xf32>
    %665 = arith.mulf %661, %588 : vector<2x32xf32>
    %666 = arith.mulf %660, %664 : vector<2x32xf32>
    %667 = arith.addf %665, %666 : vector<2x32xf32>
    %668 = math.tanh %667 : vector<2x32xf32>
    %669 = arith.mulf %662, %668 : vector<2x32xf32>
    %670 = arith.truncf %669 : vector<2x32xf32> to vector<2x32xbf16>
    %cst_169 = arith.constant dense<0.000000e+00> : vector<2x44xf32>
    %671 = tpu.matmul %670, %6, %cst_169 {dimension_numbers = #tpu.dot_dimension_numbers<[1], [0], [0], [1], [0, 0, 1, 1], [], []>} : vector<2x32xbf16>, vector<32x44xbf16>, vector<2x44xf32> -> vector<2x44xf32>
    %672 = vector.broadcast %13 : vector<1x44xf32> to vector<2x44xf32>
    %673 = arith.addf %671, %672 : vector<2x44xf32>
    %674 = vector.extract_strided_slice %673 {offsets = [0, 32], sizes = [2, 12], strides = [1, 1]} : vector<2x44xf32> to vector<2x12xf32>
    %cst_170 = arith.constant dense<0xFF800000> : vector<2xf32>
    %675 = vector.multi_reduction <maximumf>, %674, %cst_170 [1] : vector<2x12xf32> to vector<2xf32>
    %676 = vector.shape_cast %675 : vector<2xf32> to vector<2x1xf32>
    %677 = vector.broadcast %676 : vector<2x1xf32> to vector<2x12xf32>
    %678 = arith.subf %674, %677 : vector<2x12xf32>
    %679 = math.exp %678 : vector<2x12xf32>
    %cst_171 = arith.constant dense<0.000000e+00> : vector<2xf32>
    %680 = vector.multi_reduction <add>, %679, %cst_171 [1] : vector<2x12xf32> to vector<2xf32>
    %681 = vector.shape_cast %680 : vector<2xf32> to vector<2x1xf32>
    %682 = math.log %681 : vector<2x1xf32>
    %683 = arith.addf %676, %682 : vector<2x1xf32>
    %684 = vector.broadcast %683 : vector<2x1xf32> to vector<2x12xf32>
    %685 = arith.subf %674, %684 : vector<2x12xf32>
    %c0_172 = arith.constant 0 : index
    %c4_173 = arith.constant 4 : index
    %c0_174 = arith.constant 0 : index
    %686 = vector.load %arg3[%c0_172, %c4_173, %c0_174] : memref<2x6x12xf32, #tpu.memory_space<vmem>>, vector<2x1x12xf32>
    %687 = vector.shape_cast %686 : vector<2x1x12xf32> to vector<2x12xf32>
    %688 = vector.shape_cast %685 : vector<2x12xf32> to vector<2x1x12xf32>
    tpu.vector_store %arg3[%c0_172, %c4_173, %c0_174], %688 {strides = array<i32>} : memref<2x6x12xf32, #tpu.memory_space<vmem>>, vector<2x1x12xf32>,
    %c0_175 = arith.constant 0 : index
    %c4_176 = arith.constant 4 : index
    %c0_177 = arith.constant 0 : index
    %689 = vector.load %arg4[%c0_175, %c4_176, %c0_177] : memref<2x6x8xf32, #tpu.memory_space<vmem>>, vector<2x1x8xf32>
    %690 = vector.shape_cast %689 : vector<2x1x8xf32> to vector<2x8xf32>
    %691 = vector.shape_cast %643 : vector<2x8xf32> to vector<2x1x8xf32>
    tpu.vector_store %arg4[%c0_175, %c4_176, %c0_177], %691 {strides = array<i32>} : memref<2x6x8xf32, #tpu.memory_space<vmem>>, vector<2x1x8xf32>,
    %692 = vector.extract_strided_slice %673 {offsets = [0, 0], sizes = [2, 32], strides = [1, 1]} : vector<2x44xf32> to vector<2x32xf32>
    %cst_178 = arith.constant dense<0xFF800000> : vector<2xf32>
    %693 = vector.multi_reduction <maximumf>, %685, %cst_178 [1] : vector<2x12xf32> to vector<2xf32>
    %694 = vector.shape_cast %693 : vector<2xf32> to vector<2x1xf32>
    %695 = vector.broadcast %694 : vector<2x1xf32> to vector<2x12xf32>
    %696 = arith.cmpf oge, %685, %695 : vector<2x12xf32>
    %cst_179 = arith.constant 1.200000e+01 : f32
    %697 = vector.broadcast %cst_179 : f32 to vector<2x12xf32>
    %698 = arith.select %696, %303, %697 : vector<2x12xi1>, vector<2x12xf32>
    %cst_180 = arith.constant dense<0x7F800000> : vector<2xf32>
    %699 = vector.multi_reduction <minimumf>, %698, %cst_180 [1] : vector<2x12xf32> to vector<2xf32>
    %700 = vector.shape_cast %699 : vector<2xf32> to vector<2x1xf32>
    %701 = vector.broadcast %700 : vector<2x1xf32> to vector<2x12xf32>
    %702 = arith.cmpf oeq, %303, %701 : vector<2x12xf32>
    %703 = arith.extui %702 : vector<2x12xi1> to vector<2x12xi32>
    %704 = arith.sitofp %703 : vector<2x12xi32> to vector<2x12xf32>
    %705 = arith.truncf %704 : vector<2x12xf32> to vector<2x12xbf16>
    %cst_181 = arith.constant dense<0.000000e+00> : vector<2x128xf32>
    %706 = tpu.matmul %705, %4, %cst_181 {dimension_numbers = #tpu.dot_dimension_numbers<[1], [0], [0], [1], [0, 0, 1, 1], [], []>} : vector<2x12xbf16>, vector<12x128xbf16>, vector<2x128xf32> -> vector<2x128xf32>
    %707 = vector.shape_cast %692 : vector<2x32xf32> to vector<2x1x32xf32>
    %708 = vector.broadcast %707 : vector<2x1x32xf32> to vector<2x8x32xf32>
    %709 = arith.addf %301, %708 : vector<2x8x32xf32>
    %710 = math.tanh %709 : vector<2x8x32xf32>
    %711 = vector.broadcast %11 : vector<1x1x32xf32> to vector<2x8x32xf32>
    %712 = arith.mulf %710, %711 : vector<2x8x32xf32>
    %cst_182 = arith.constant dense<0.000000e+00> : vector<2x8xf32>
    %713 = vector.multi_reduction <add>, %712, %cst_182 [2] : vector<2x8x32xf32> to vector<2x8xf32>
    %cst_183 = arith.constant dense<0xFF800000> : vector<2xf32>
    %714 = vector.multi_reduction <maximumf>, %713, %cst_183 [1] : vector<2x8xf32> to vector<2xf32>
    %715 = vector.shape_cast %714 : vector<2xf32> to vector<2x1xf32>
    %716 = vector.broadcast %715 : vector<2x1xf32> to vector<2x8xf32>
    %717 = arith.subf %713, %716 : vector<2x8xf32>
    %718 = math.exp %717 : vector<2x8xf32>
    %cst_184 = arith.constant dense<0.000000e+00> : vector<2xf32>
    %719 = vector.multi_reduction <add>, %718, %cst_184 [1] : vector<2x8xf32> to vector<2xf32>
    %720 = vector.shape_cast %719 : vector<2xf32> to vector<2x1xf32>
    %721 = vector.broadcast %720 : vector<2x1xf32> to vector<2x8xf32>
    %722 = arith.divf %718, %721 : vector<2x8xf32>
    %723 = vector.shape_cast %722 : vector<2x8xf32> to vector<2x8x1xf32>
    %724 = vector.broadcast %723 : vector<2x8x1xf32> to vector<2x8x32xf32>
    %725 = arith.mulf %295, %724 : vector<2x8x32xf32>
    %cst_185 = arith.constant dense<0.000000e+00> : vector<2x32xf32>
    %726 = vector.multi_reduction <add>, %725, %cst_185 [1] : vector<2x8x32xf32> to vector<2x32xf32>
    %727 = tpu.concatenate %726, %669 in 1 : vector<2x32xf32>, vector<2x32xf32> -> vector<2x64xf32>
    %728 = arith.truncf %727 : vector<2x64xf32> to vector<2x64xbf16>
    %cst_186 = arith.constant dense<0.000000e+00> : vector<2x128xf32>
    %729 = tpu.matmul %728, %3, %cst_186 {dimension_numbers = #tpu.dot_dimension_numbers<[1], [0], [0], [1], [0, 0, 1, 1], [], []>} : vector<2x64xbf16>, vector<64x128xbf16>, vector<2x128xf32> -> vector<2x128xf32>
    %730 = arith.addf %706, %729 : vector<2x128xf32>
    %731 = vector.broadcast %8 : vector<1x128xf32> to vector<2x128xf32>
    %732 = arith.addf %730, %731 : vector<2x128xf32>
    %733 = vector.extract_strided_slice %732 {offsets = [0, 0], sizes = [2, 96], strides = [1, 1]} : vector<2x128xf32> to vector<2x96xf32>
    %734 = arith.negf %733 : vector<2x96xf32>
    %735 = math.exp %734 : vector<2x96xf32>
    %cst_187 = arith.constant 1.000000e+00 : f32
    %736 = vector.broadcast %cst_187 : f32 to vector<2x96xf32>
    %737 = arith.addf %736, %735 : vector<2x96xf32>
    %738 = arith.divf %736, %737 : vector<2x96xf32>
    %739 = vector.extract_strided_slice %738 {offsets = [0, 0], sizes = [2, 32], strides = [1, 1]} : vector<2x96xf32> to vector<2x32xf32>
    %740 = vector.extract_strided_slice %738 {offsets = [0, 32], sizes = [2, 32], strides = [1, 1]} : vector<2x96xf32> to vector<2x32xf32>
    %741 = vector.extract_strided_slice %738 {offsets = [0, 64], sizes = [2, 32], strides = [1, 1]} : vector<2x96xf32> to vector<2x32xf32>
    %742 = vector.extract_strided_slice %732 {offsets = [0, 96], sizes = [2, 32], strides = [1, 1]} : vector<2x128xf32> to vector<2x32xf32>
    %743 = math.tanh %742 : vector<2x32xf32>
    %744 = arith.mulf %740, %667 : vector<2x32xf32>
    %745 = arith.mulf %739, %743 : vector<2x32xf32>
    %746 = arith.addf %744, %745 : vector<2x32xf32>
    %747 = math.tanh %746 : vector<2x32xf32>
    %748 = arith.mulf %741, %747 : vector<2x32xf32>
    %749 = arith.truncf %748 : vector<2x32xf32> to vector<2x32xbf16>
    %cst_188 = arith.constant dense<0.000000e+00> : vector<2x44xf32>
    %750 = tpu.matmul %749, %6, %cst_188 {dimension_numbers = #tpu.dot_dimension_numbers<[1], [0], [0], [1], [0, 0, 1, 1], [], []>} : vector<2x32xbf16>, vector<32x44xbf16>, vector<2x44xf32> -> vector<2x44xf32>
    %751 = vector.broadcast %13 : vector<1x44xf32> to vector<2x44xf32>
    %752 = arith.addf %750, %751 : vector<2x44xf32>
    %753 = vector.extract_strided_slice %752 {offsets = [0, 32], sizes = [2, 12], strides = [1, 1]} : vector<2x44xf32> to vector<2x12xf32>
    %cst_189 = arith.constant dense<0xFF800000> : vector<2xf32>
    %754 = vector.multi_reduction <maximumf>, %753, %cst_189 [1] : vector<2x12xf32> to vector<2xf32>
    %755 = vector.shape_cast %754 : vector<2xf32> to vector<2x1xf32>
    %756 = vector.broadcast %755 : vector<2x1xf32> to vector<2x12xf32>
    %757 = arith.subf %753, %756 : vector<2x12xf32>
    %758 = math.exp %757 : vector<2x12xf32>
    %cst_190 = arith.constant dense<0.000000e+00> : vector<2xf32>
    %759 = vector.multi_reduction <add>, %758, %cst_190 [1] : vector<2x12xf32> to vector<2xf32>
    %760 = vector.shape_cast %759 : vector<2xf32> to vector<2x1xf32>
    %761 = math.log %760 : vector<2x1xf32>
    %762 = arith.addf %755, %761 : vector<2x1xf32>
    %763 = vector.broadcast %762 : vector<2x1xf32> to vector<2x12xf32>
    %764 = arith.subf %753, %763 : vector<2x12xf32>
    %c0_191 = arith.constant 0 : index
    %c5_192 = arith.constant 5 : index
    %c0_193 = arith.constant 0 : index
    %765 = vector.load %arg3[%c0_191, %c5_192, %c0_193] : memref<2x6x12xf32, #tpu.memory_space<vmem>>, vector<2x1x12xf32>
    %766 = vector.shape_cast %765 : vector<2x1x12xf32> to vector<2x12xf32>
    %767 = vector.shape_cast %764 : vector<2x12xf32> to vector<2x1x12xf32>
    tpu.vector_store %arg3[%c0_191, %c5_192, %c0_193], %767 {strides = array<i32>} : memref<2x6x12xf32, #tpu.memory_space<vmem>>, vector<2x1x12xf32>,
    %c0_194 = arith.constant 0 : index
    %c5_195 = arith.constant 5 : index
    %c0_196 = arith.constant 0 : index
    %768 = vector.load %arg4[%c0_194, %c5_195, %c0_196] : memref<2x6x8xf32, #tpu.memory_space<vmem>>, vector<2x1x8xf32>
    %769 = vector.shape_cast %768 : vector<2x1x8xf32> to vector<2x8xf32>
    %770 = vector.shape_cast %722 : vector<2x8xf32> to vector<2x1x8xf32>
    tpu.vector_store %arg4[%c0_194, %c5_195, %c0_196], %770 {strides = array<i32>} : memref<2x6x8xf32, #tpu.memory_space<vmem>>, vector<2x1x8xf32>,
    return
  }
}

</mosaic_0001>

<llo_original>
// kernel: seq2seq_forward.1
$region0: #{seq2seq_forward.1}
  #allocation0 [shape = 'u32[]', space=smem, size = 0x4, offset = 0x4, fixed_abs, tag = 'smem constant byte address 0x4 - core index']
  #allocation1 [shape = 'u32[144,128]{1,0:T(1,128)}', space=vmem, size = 0x12000, scoped, tag = 'internal scratch']
  #allocation2 [shape = 'f32[2,8,32]{2,1,0:T(8,128)}', space=vmem, size = 0x2000, scoped, tag = 'scratch operand']
  %s0 = inlined_call_operand.vmem [shape: f32[8,2,32], index: 0, kind: input, shape index: {}]
  %s1 = inlined_call_operand.vmem [shape: bf16[240,128], index: 1, kind: input, shape index: {}]
  %s2 = inlined_call_operand.vmem [shape: f32[8,128], index: 2, kind: input, shape index: {}]
  %s3 = inlined_call_operand.vmem [shape: f32[2,6,12], index: 3, kind: output, shape index: {0}]
  %s4 = inlined_call_operand.vmem [shape: f32[2,6,8], index: 4, kind: output, shape index: {1}]
  %5 = xla_tuple %s3, %s4
  %s6 = sld [smem:[#allocation0]]
  $region30: #{seq2seq_forward.1} parent=0
    _
  %s8 = ssub.s32 1, %s6
  %s9 = scalar_select 0, %s8, %s6
  // Predicated region
  $region2: #{seq2seq_forward.1} parent=0 // pred_check
    _
  $region3: #{seq2seq_forward.1} parent=0 // pred_check_branch
    %11 = sbr.rel (0) target = $region5
  $region4: #{seq2seq_forward.1} parent=0 // pred_region
    _
  $region5: #{seq2seq_forward.1} parent=0 // pred_fallthru
    _
  // Predicated region
  $region6: #{seq2seq_forward.1} parent=0 // pred_check
    _
  $region7: #{seq2seq_forward.1} parent=0 // pred_check_branch
    %13 = sbr.rel (0) target = $region9
  $region8: #{seq2seq_forward.1} parent=0 // pred_region
    _
  $region9: #{seq2seq_forward.1} parent=0 // pred_fallthru
    _
  // Predicated region
  $region10: #{seq2seq_forward.1} parent=0 // pred_check
    _
  $region11: #{seq2seq_forward.1} parent=0 // pred_check_branch
    %15 = sbr.rel (0) target = $region13
  $region12: #{seq2seq_forward.1} parent=0 // pred_region
    _
  $region13: #{seq2seq_forward.1} parent=0 // pred_fallthru
    _
  %v17 = vld [vmem:[%s1] sm:$0xf]
  %v18 = vld [vmem:[%s1 + $0x4] sm:$0xf]
  %v19 = vld [vmem:[%s1 + $0x8] sm:$0xf]
  %v20 = vld [vmem:[%s1 + $0xc] sm:$0xf]
  %v21 = vld [vmem:[%s1 + $0x10] sm:$0xf]
  %v22 = vld [vmem:[%s1 + $0x14] sm:$0xf]
  %v23 = vld [vmem:[%s1 + $0x18] sm:$0xf]
  %v24 = vld [vmem:[%s1 + $0x1c] sm:$0xf]
  %v25 = vld [vmem:[%s1 + $0x20] sm:$0xf]
  %v26 = vld [vmem:[%s1 + $0x24] sm:$0xf]
  %v27 = vld [vmem:[%s1 + $0x28] sm:$0xf]
  %v28 = vld [vmem:[%s1 + $0x2c] sm:$0xf]
  %v29 = vld [vmem:[%s1 + $0x30] sm:$0xf]
  %v30 = vld [vmem:[%s1 + $0x34] sm:$0xf]
  %v31 = vld [vmem:[%s1 + $0x38] sm:$0xf]
  %v32 = vld [vmem:[%s1 + $0x3c] sm:$0xf]
  %v33 = vld [vmem:[%s1 + $0x40] sm:$0xf]
  %v34 = vld [vmem:[%s1 + $0x44] sm:$0xf]
  %v35 = vld [vmem:[%s1 + $0x48] sm:$0xf]
  %v36 = vld [vmem:[%s1 + $0x4c] sm:$0xf]
  %v37 = vld [vmem:[%s1 + $0x50] sm:$0xf]
  %v38 = vld [vmem:[%s1 + $0x54] sm:$0x3]
  %v39 = vld [vmem:[%s1 + $0x58] sm:$0xf]
  %v40 = vld [vmem:[%s1 + $0x5c] sm:$0xf]
  %v41 = vld [vmem:[%s1 + $0x60] sm:$0xf]
  %v42 = vld [vmem:[%s1 + $0x64] sm:$0xf]
  %v43 = vld [vmem:[%s1 + $0x68] sm:$0xf]
  %v44 = vld [vmem:[%s1 + $0x6c] sm:$0xf]
  %v45 = vld [vmem:[%s1 + $0x70] sm:$0xf]
  %v46 = vld [vmem:[%s1 + $0x74] sm:$0xf]
  %v47 = vld [vmem:[%s2] sm:$0x1]
  %v48 = vld [vmem:[%s2 + $0x1] sm:$0x1]
  %v49 = vld [vmem:[%s2 + $0x2] sm:$0x1]
  %v50 = vld [vmem:[%s2 + $0x3] sm:$0x1]
  %v51 = vld [vmem:[%s2 + $0x4] sm:$0x1]
  %v52 = vld [vmem:[%s2 + $0x5] sm:$0x1]
  %v53 = vld [vmem:[%s0] sm:$0x3]
  %v54 = vld [vmem:[%s0 + $0x2] sm:$0x3]
  %v55 = vld [vmem:[%s0 + $0x4] sm:$0x3]
  %v56 = vld [vmem:[%s0 + $0x6] sm:$0x3]
  %v57 = vld [vmem:[%s0 + $0x8] sm:$0x3]
  %v58 = vld [vmem:[%s0 + $0xa] sm:$0x3]
  %v59 = vld [vmem:[%s0 + $0xc] sm:$0x3]
  %v60 = vld [vmem:[%s0 + $0xe] sm:$0x3]
  %v69 = vcombine.low %v53, %v54
  %v70 = vcombine.low %v55, %v56
  %v72 = vunpack.c.l.s4 1983009808
  %v73 = vunpack.c.0.s8 %v72
  %v74 = vlaneseq
  %v75 = vshrl.u32 %v74, 7
  %v76 = vsub.s32 %v73, %v75
  %v77 = vrot.slane %v69, %v76
  %v79 = vunpack.c.l.s4 1983009808
  %v80 = vunpack.c.0.s8 %v79
  %v81 = vlaneseq
  %v82 = vshrl.u32 %v81, 7
  %v83 = vsub.s32 %v80, %v82
  %v84 = vrot.slane %v70, %v83
  %v85 = vcombine.low %v77, %v84
  %v86 = vcombine.low %v57, %v58
  %v87 = vcombine.low %v59, %v60
  %v89 = vunpack.c.l.s4 1983009808
  %v90 = vunpack.c.0.s8 %v89
  %v91 = vlaneseq
  %v92 = vshrl.u32 %v91, 7
  %v93 = vsub.s32 %v90, %v92
  %v94 = vrot.slane %v86, %v93
  %v96 = vunpack.c.l.s4 1983009808
  %v97 = vunpack.c.0.s8 %v96
  %v98 = vlaneseq
  %v99 = vshrl.u32 %v98, 7
  %v100 = vsub.s32 %v97, %v99
  %v101 = vrot.slane %v87, %v100
  %v102 = vcombine.low %v94, %v101
  %v105 = vpack.c.bf16 %v102, %v85
  %v110 = vunpack.c.l.b16 %v17
  %v111 = vunpack.c.l.b16 %v18
  %v112 = vunpack.c.l.b16 %v19
  %v113 = vunpack.c.l.b16 %v20
  %v114 = vpack.c.b16 %v111, %v110
  %v115 = vpack.c.b16 %v113, %v112
  %vm118 = vcmask 261120
  %v120 = vsel %vm118, %v105, 0
  %122 = vmatprep.subr.bf16.mxu0 0
  %123 = vmatpush1.bf16.msra.mxu0 %v114
  %124 = vmatprep.subr.bf16.mxu0 0
  %125 = vmatpush1.bf16.msra.mxu0 %v115
  %126 = vmatprep.subr.bf16.mxu0 0
  %127 = vmatpush1.bf16.msra.mxu0 0
  %128 = vmatprep.subr.bf16.mxu0 0
  %129 = vmatpush1.bf16.msra.mxu0 0
  %130 = vmatprep.subr.bf16.mxu0 0
  %131 = vmatpush1.bf16.msra.mxu0 0
  %132 = vmatprep.subr.bf16.mxu0 0
  %133 = vmatpush1.bf16.msra.mxu0 0
  %134 = vmatprep.subr.bf16.mxu0 0
  %135 = vmatpush1.bf16.msra.mxu0 0
  %136 = vmatprep.subr.bf16.mxu0 0
  %137 = vmatpush1.bf16.msra.mxu0 0
  %138 = vmatprep.subr.bf16.mxu0 0
  %139 = vmatpush1.bf16.msra.mxu0 0
  %140 = vmatprep.subr.bf16.mxu0 0
  %141 = vmatpush1.bf16.msra.mxu0 0
  %142 = vmatprep.subr.bf16.mxu0 0
  %143 = vmatpush1.bf16.msra.mxu0 0
  %144 = vmatprep.subr.bf16.mxu0 0
  %145 = vmatpush1.bf16.msra.mxu0 0
  %146 = vmatprep.subr.bf16.mxu0 0
  %147 = vmatpush1.bf16.msra.mxu0 0
  %148 = vmatprep.subr.bf16.mxu0 0
  %149 = vmatpush1.bf16.msra.mxu0 0
  %150 = vmatprep.subr.bf16.mxu0 0
  %151 = vmatpush1.bf16.msra.mxu0 0
  %152 = vmatprep.subr.bf16.mxu0 0
  %153 = vmatpush1.bf16.msra.mxu0 0
  %154 = vmatprep.mubr.bf16.mxu0 0
  %155 = vmatmul.mubr.bf16.gmra.mrb[0].mxu0 %v120
  %v156 = vpop.f32.mrb[0].mxu0
  %v157 = vadd.f32 0.0, %v156
  %v158 = vpop.f32.mrb[0].mxu0
  %v159 = vpop.f32.mrb[0].mxu0
  %v160 = vadd.f32 0.0, %v159
  %v161 = vpop.f32.mrb[0].mxu0
  %162 = vdwg.mxu0
  %v165 = vcombine.high %v157, %v157
  %v167 = vunpack.c.l.s4 1983009808
  %v168 = vunpack.c.0.s8 %v167
  %v169 = vlaneseq
  %v170 = vshrl.u32 %v169, 7
  %v171 = vsub.s32 %v168, %v170
  %v172 = vrot.slane %v157, %v171
  %v174 = vunpack.c.l.s4 1983009808
  %v175 = vunpack.c.0.s8 %v174
  %v176 = vlaneseq
  %v177 = vshrl.u32 %v176, 7
  %v178 = vsub.s32 %v175, %v177
  %v179 = vrot.slane %v165, %v178
  %v180 = vcombine.high %v172, %v172
  %v181 = vcombine.high %v179, %v179
  %v182 = vcombine.high %v160, %v160
  %v184 = vunpack.c.l.s4 1983009808
  %v185 = vunpack.c.0.s8 %v184
  %v186 = vlaneseq
  %v187 = vshrl.u32 %v186, 7
  %v188 = vsub.s32 %v185, %v187
  %v189 = vrot.slane %v160, %v188
  %v191 = vunpack.c.l.s4 1983009808
  %v192 = vunpack.c.0.s8 %v191
  %v193 = vlaneseq
  %v194 = vshrl.u32 %v193, 7
  %v195 = vsub.s32 %v192, %v194
  %v196 = vrot.slane %v182, %v195
  %v197 = vcombine.high %v189, %v189
  %v198 = vcombine.high %v196, %v196
  %v211 = vunpack.c.l.b16 %v21
  %v212 = vunpack.c.l.b16 %v22
  %v213 = vunpack.c.l.b16 %v23
  %v214 = vunpack.c.l.b16 %v24
  %v215 = vpack.c.b16 %v212, %v211
  %v216 = vpack.c.b16 %v214, %v213
  %219 = vmatprep.subr.bf16.mxu0 0
  %220 = vmatpush1.bf16.msra.mxu0 %v215
  %221 = vmatprep.subr.bf16.mxu0 0
  %222 = vmatpush1.bf16.msra.mxu0 %v216
  %223 = vmatprep.subr.bf16.mxu0 0
  %224 = vmatpush1.bf16.msra.mxu0 0
  %225 = vmatprep.subr.bf16.mxu0 0
  %226 = vmatpush1.bf16.msra.mxu0 0
  %227 = vmatprep.subr.bf16.mxu0 0
  %228 = vmatpush1.bf16.msra.mxu0 0
  %229 = vmatprep.subr.bf16.mxu0 0
  %230 = vmatpush1.bf16.msra.mxu0 0
  %231 = vmatprep.subr.bf16.mxu0 0
  %232 = vmatpush1.bf16.msra.mxu0 0
  %233 = vmatprep.subr.bf16.mxu0 0
  %234 = vmatpush1.bf16.msra.mxu0 0
  %235 = vmatprep.subr.bf16.mxu0 0
  %236 = vmatpush1.bf16.msra.mxu0 0
  %237 = vmatprep.subr.bf16.mxu0 0
  %238 = vmatpush1.bf16.msra.mxu0 0
  %239 = vmatprep.subr.bf16.mxu0 0
  %240 = vmatpush1.bf16.msra.mxu0 0
  %241 = vmatprep.subr.bf16.mxu0 0
  %242 = vmatpush1.bf16.msra.mxu0 0
  %243 = vmatprep.subr.bf16.mxu0 0
  %244 = vmatpush1.bf16.msra.mxu0 0
  %245 = vmatprep.subr.bf16.mxu0 0
  %246 = vmatpush1.bf16.msra.mxu0 0
  %247 = vmatprep.subr.bf16.mxu0 0
  %248 = vmatpush1.bf16.msra.mxu0 0
  %249 = vmatprep.subr.bf16.mxu0 0
  %250 = vmatpush1.bf16.msra.mxu0 0
  %251 = vmatprep.mubr.bf16.mxu0 0
  %252 = vmatmul.mubr.bf16.gmra.mrb[0].mxu0 %v120
  %v253 = vpop.f32.mrb[0].mxu0
  %v254 = vadd.f32 0.0, %v253
  %v255 = vpop.f32.mrb[0].mxu0
  %v256 = vpop.f32.mrb[0].mxu0
  %v257 = vadd.f32 0.0, %v256
  %v258 = vpop.f32.mrb[0].mxu0
  %259 = vdwg.mxu0
  %v262 = vcombine.high %v254, %v254
  %v264 = vunpack.c.l.s4 1983009808
  %v265 = vunpack.c.0.s8 %v264
  %v266 = vlaneseq
  %v267 = vshrl.u32 %v266, 7
  %v268 = vsub.s32 %v265, %v267
  %v269 = vrot.slane %v254, %v268
  %v271 = vunpack.c.l.s4 1983009808
  %v272 = vunpack.c.0.s8 %v271
  %v273 = vlaneseq
  %v274 = vshrl.u32 %v273, 7
  %v275 = vsub.s32 %v272, %v274
  %v276 = vrot.slane %v262, %v275
  %v277 = vcombine.high %v269, %v269
  %v278 = vcombine.high %v276, %v276
  %v279 = vcombine.high %v257, %v257
  %v281 = vunpack.c.l.s4 1983009808
  %v282 = vunpack.c.0.s8 %v281
  %v283 = vlaneseq
  %v284 = vshrl.u32 %v283, 7
  %v285 = vsub.s32 %v282, %v284
  %v286 = vrot.slane %v257, %v285
  %v288 = vunpack.c.l.s4 1983009808
  %v289 = vunpack.c.0.s8 %v288
  %v290 = vlaneseq
  %v291 = vshrl.u32 %v290, 7
  %v292 = vsub.s32 %v289, %v291
  %v293 = vrot.slane %v279, %v292
  %v294 = vcombine.high %v286, %v286
  %v295 = vcombine.high %v293, %v293
  %v304 = vadd.f32 %v172, %v295
  %v305 = vlaneseq
  %v306 = vshrl.u32 %v305, 7
  %v307 = vsub.s32 0, %v306
  %v308 = vrot.slane %v47, %v307
  %v309 = vadd.f32 %v304, %v308
  %v314 = vunpack.c.l.b16 %v25
  %v315 = vunpack.c.l.b16 %v26
  %v316 = vunpack.c.l.b16 %v27
  %v317 = vunpack.c.l.b16 %v28
  %v318 = vpack.c.b16 %v315, %v314
  %v319 = vpack.c.b16 %v317, %v316
  %v323 = vsel %vm118, 0, 0
  %325 = vmatprep.subr.bf16.mxu0 0
  %326 = vmatpush1.bf16.msra.mxu0 %v318
  %327 = vmatprep.subr.bf16.mxu0 0
  %328 = vmatpush1.bf16.msra.mxu0 %v319
  %329 = vmatprep.subr.bf16.mxu0 0
  %330 = vmatpush1.bf16.msra.mxu0 0
  %331 = vmatprep.subr.bf16.mxu0 0
  %332 = vmatpush1.bf16.msra.mxu0 0
  %333 = vmatprep.subr.bf16.mxu0 0
  %334 = vmatpush1.bf16.msra.mxu0 0
  %335 = vmatprep.subr.bf16.mxu0 0
  %336 = vmatpush1.bf16.msra.mxu0 0
  %337 = vmatprep.subr.bf16.mxu0 0
  %338 = vmatpush1.bf16.msra.mxu0 0
  %339 = vmatprep.subr.bf16.mxu0 0
  %340 = vmatpush1.bf16.msra.mxu0 0
  %341 = vmatprep.subr.bf16.mxu0 0
  %342 = vmatpush1.bf16.msra.mxu0 0
  %343 = vmatprep.subr.bf16.mxu0 0
  %344 = vmatpush1.bf16.msra.mxu0 0
  %345 = vmatprep.subr.bf16.mxu0 0
  %346 = vmatpush1.bf16.msra.mxu0 0
  %347 = vmatprep.subr.bf16.mxu0 0
  %348 = vmatpush1.bf16.msra.mxu0 0
  %349 = vmatprep.subr.bf16.mxu0 0
  %350 = vmatpush1.bf16.msra.mxu0 0
  %351 = vmatprep.subr.bf16.mxu0 0
  %352 = vmatpush1.bf16.msra.mxu0 0
  %353 = vmatprep.subr.bf16.mxu0 0
  %354 = vmatpush1.bf16.msra.mxu0 0
  %355 = vmatprep.subr.bf16.mxu0 0
  %356 = vmatpush1.bf16.msra.mxu0 0
  %357 = vmatprep.mubr.bf16.mxu0 0
  %358 = vmatmul.mubr.bf16.gmra.mrb[0].mxu0 %v323
  %v359 = vpop.f32.mrb[0].mxu0
  %v360 = vadd.f32 0.0, %v359
  %v361 = vpop.f32.mrb[0].mxu0
  %v362 = vpop.f32.mrb[0].mxu0
  %v363 = vpop.f32.mrb[0].mxu0
  %364 = vdwg.mxu0
  %v365 = vadd.f32 %v309, %v360
  %v366 = vxor.u32 %v365, 2147483648
  %v367 = vmul.f32 %v366, 1.442695
  %v368 = vpow.pop %v367
  %v369 = vadd.f32 %v368, 1.0
  %v370 = vrcp.pop %v369
  %v371 = vmul.f32 1.0, %v370
  %v372 = vtanh.pop %v365
  %v373 = vmul.f32 %v371, 0.0
  %375 = vrot.lane.b32.xlu0 %v372, 32
  %v376 = vpop.permute.xlu0 %375
  %v378 = vmul.f32 %v371, %v376
  %380 = vrot.lane.b32.xlu0 %v378, 32
  %v381 = vpop.permute.xlu0 %380
  %v383 = vadd.f32 %v373, %v381
  %v384 = vtanh.pop %v383
  %386 = vrot.lane.b32.xlu0 %v384, 32
  %v387 = vpop.permute.xlu0 %386
  %v389 = vmul.f32 %v371, %v387
  %v392 = vunpack.c.l.s4 1966171168
  %v393 = vunpack.c.0.s8 %v392
  %v394 = vlaneseq
  %v395 = vshrl.u32 %v394, 7
  %v396 = vsub.s32 %v393, %v395
  %v397 = vrot.slane %v389, %v396
  %v398 = vcombine.high %v397, %v397
  %v399 = vlaneseq
  %v400 = vshrl.u32 %v399, 7
  %v401 = vsub.s32 0, %v400
  %v402 = vrot.slane %v397, %v401
  %v403 = vlaneseq
  %v404 = vshrl.u32 %v403, 7
  %v405 = vsub.s32 0, %v404
  %v406 = vrot.slane %v398, %v405
  %407 = vrot.lane.b32.xlu0 %v402, 64
  %v408 = vpop.permute.xlu0 %407
  %409 = vrot.lane.b32.xlu0 %v406, 64
  %v410 = vpop.permute.xlu0 %409
  %vm413 = vcmask 122880
  %414 = vst.msk [vmem:[#allocation2] sm:$0x1] %vm413, %v408
  %415 = vst.msk [vmem:[#allocation2 + $0x8] sm:$0x1] %vm413, %v410
  %vm416 = vcmask 254080
  %417 = vst.msk [vmem:[#allocation2 + $0x7] sm:$0x1] %vm416, %v408
  %418 = vst.msk [vmem:[#allocation2 + $0xf] sm:$0x1] %vm416, %v410
  %v419 = vadd.f32 %v180, %v293
  %v420 = vadd.f32 %v419, %v308
  %v421 = vpack.c.bf16 %v389, %v389
  %423 = vrot.lane.b32.xlu0 %v421, 64
  %v424 = vpop.permute.xlu0 %423
  %v426 = vsel %vm118, %v424, 0
  %428 = vmatprep.subr.bf16.mxu0 0
  %429 = vmatpush1.bf16.msra.mxu0 %v318
  %430 = vmatprep.subr.bf16.mxu0 0
  %431 = vmatpush1.bf16.msra.mxu0 %v319
  %432 = vmatprep.subr.bf16.mxu0 0
  %433 = vmatpush1.bf16.msra.mxu0 0
  %434 = vmatprep.subr.bf16.mxu0 0
  %435 = vmatpush1.bf16.msra.mxu0 0
  %436 = vmatprep.subr.bf16.mxu0 0
  %437 = vmatpush1.bf16.msra.mxu0 0
  %438 = vmatprep.subr.bf16.mxu0 0
  %439 = vmatpush1.bf16.msra.mxu0 0
  %440 = vmatprep.subr.bf16.mxu0 0
  %441 = vmatpush1.bf16.msra.mxu0 0
  %442 = vmatprep.subr.bf16.mxu0 0
  %443 = vmatpush1.bf16.msra.mxu0 0
  %444 = vmatprep.subr.bf16.mxu0 0
  %445 = vmatpush1.bf16.msra.mxu0 0
  %446 = vmatprep.subr.bf16.mxu0 0
  %447 = vmatpush1.bf16.msra.mxu0 0
  %448 = vmatprep.subr.bf16.mxu0 0
  %449 = vmatpush1.bf16.msra.mxu0 0
  %450 = vmatprep.subr.bf16.mxu0 0
  %451 = vmatpush1.bf16.msra.mxu0 0
  %452 = vmatprep.subr.bf16.mxu0 0
  %453 = vmatpush1.bf16.msra.mxu0 0
  %454 = vmatprep.subr.bf16.mxu0 0
  %455 = vmatpush1.bf16.msra.mxu0 0
  %456 = vmatprep.subr.bf16.mxu0 0
  %457 = vmatpush1.bf16.msra.mxu0 0
  %458 = vmatprep.subr.bf16.mxu0 0
  %459 = vmatpush1.bf16.msra.mxu0 0
  %460 = vmatprep.mubr.bf16.mxu0 0
  %461 = vmatmul.mubr.bf16.gmra.mrb[0].mxu0 %v426
  %v462 = vpop.f32.mrb[0].mxu0
  %v463 = vadd.f32 0.0, %v462
  %v464 = vpop.f32.mrb[0].mxu0
  %v465 = vpop.f32.mrb[0].mxu0
  %v466 = vpop.f32.mrb[0].mxu0
  %467 = vdwg.mxu0
  %v468 = vadd.f32 %v420, %v463
  %v469 = vxor.u32 %v468, 2147483648
  %v470 = vmul.f32 %v469, 1.442695
  %v471 = vpow.pop %v470
  %v472 = vadd.f32 %v471, 1.0
  %v473 = vrcp.pop %v472
  %v474 = vmul.f32 1.0, %v473
  %v475 = vtanh.pop %v468
  %v476 = vmul.f32 %v474, %v383
  %478 = vrot.lane.b32.xlu0 %v475, 32
  %v479 = vpop.permute.xlu0 %478
  %v481 = vmul.f32 %v474, %v479
  %483 = vrot.lane.b32.xlu0 %v481, 32
  %v484 = vpop.permute.xlu0 %483
  %v486 = vadd.f32 %v476, %v484
  %v487 = vtanh.pop %v486
  %489 = vrot.lane.b32.xlu0 %v487, 32
  %v490 = vpop.permute.xlu0 %489
  %v492 = vmul.f32 %v474, %v490
  %v495 = vunpack.c.l.s4 1966171168
  %v496 = vunpack.c.0.s8 %v495
  %v497 = vlaneseq
  %v498 = vshrl.u32 %v497, 7
  %v499 = vsub.s32 %v496, %v498
  %v500 = vrot.slane %v492, %v499
  %v501 = vcombine.high %v500, %v500
  %v502 = vlaneseq
  %v503 = vshrl.u32 %v502, 7
  %v504 = vsub.s32 0, %v503
  %v505 = vrot.slane %v500, %v504
  %v506 = vlaneseq
  %v507 = vshrl.u32 %v506, 7
  %v508 = vsub.s32 0, %v507
  %v509 = vrot.slane %v501, %v508
  %510 = vrot.lane.b32.xlu0 %v505, 64
  %v511 = vpop.permute.xlu0 %510
  %512 = vrot.lane.b32.xlu0 %v509, 64
  %v513 = vpop.permute.xlu0 %512
  %516 = vst.msk [vmem:[#allocation2 + $0x1] sm:$0x1] %vm413, %v511
  %517 = vst.msk [vmem:[#allocation2 + $0x9] sm:$0x1] %vm413, %v513
  %518 = vst.msk [vmem:[#allocation2 + $0x6] sm:$0x1] %vm416, %v511
  %519 = vst.msk [vmem:[#allocation2 + $0xe] sm:$0x1] %vm416, %v513
  %v520 = vadd.f32 %v179, %v294
  %v521 = vadd.f32 %v520, %v308
  %v522 = vpack.c.bf16 %v492, %v492
  %524 = vrot.lane.b32.xlu0 %v522, 64
  %v525 = vpop.permute.xlu0 %524
  %v527 = vsel %vm118, %v525, 0
  %529 = vmatprep.subr.bf16.mxu0 0
  %530 = vmatpush1.bf16.msra.mxu0 %v318
  %531 = vmatprep.subr.bf16.mxu0 0
  %532 = vmatpush1.bf16.msra.mxu0 %v319
  %533 = vmatprep.subr.bf16.mxu0 0
  %534 = vmatpush1.bf16.msra.mxu0 0
  %535 = vmatprep.subr.bf16.mxu0 0
  %536 = vmatpush1.bf16.msra.mxu0 0
  %537 = vmatprep.subr.bf16.mxu0 0
  %538 = vmatpush1.bf16.msra.mxu0 0
  %539 = vmatprep.subr.bf16.mxu0 0
  %540 = vmatpush1.bf16.msra.mxu0 0
  %541 = vmatprep.subr.bf16.mxu0 0
  %542 = vmatpush1.bf16.msra.mxu0 0
  %543 = vmatprep.subr.bf16.mxu0 0
  %544 = vmatpush1.bf16.msra.mxu0 0
  %545 = vmatprep.subr.bf16.mxu0 0
  %546 = vmatpush1.bf16.msra.mxu0 0
  %547 = vmatprep.subr.bf16.mxu0 0
  %548 = vmatpush1.bf16.msra.mxu0 0
  %549 = vmatprep.subr.bf16.mxu0 0
  %550 = vmatpush1.bf16.msra.mxu0 0
  %551 = vmatprep.subr.bf16.mxu0 0
  %552 = vmatpush1.bf16.msra.mxu0 0
  %553 = vmatprep.subr.bf16.mxu0 0
  %554 = vmatpush1.bf16.msra.mxu0 0
  %555 = vmatprep.subr.bf16.mxu0 0
  %556 = vmatpush1.bf16.msra.mxu0 0
  %557 = vmatprep.subr.bf16.mxu0 0
  %558 = vmatpush1.bf16.msra.mxu0 0
  %559 = vmatprep.subr.bf16.mxu0 0
  %560 = vmatpush1.bf16.msra.mxu0 0
  %561 = vmatprep.mubr.bf16.mxu0 0
  %562 = vmatmul.mubr.bf16.gmra.mrb[0].mxu0 %v527
  %v563 = vpop.f32.mrb[0].mxu0
  %v564 = vadd.f32 0.0, %v563
  %v565 = vpop.f32.mrb[0].mxu0
  %v566 = vpop.f32.mrb[0].mxu0
  %v567 = vpop.f32.mrb[0].mxu0
  %568 = vdwg.mxu0
  %v569 = vadd.f32 %v521, %v564
  %v570 = vxor.u32 %v569, 2147483648
  %v571 = vmul.f32 %v570, 1.442695
  %v572 = vpow.pop %v571
  %v573 = vadd.f32 %v572, 1.0
  %v574 = vrcp.pop %v573
  %v575 = vmul.f32 1.0, %v574
  %v576 = vtanh.pop %v569
  %v577 = vmul.f32 %v575, %v486
  %579 = vrot.lane.b32.xlu0 %v576, 32
  %v580 = vpop.permute.xlu0 %579
  %v582 = vmul.f32 %v575, %v580
  %584 = vrot.lane.b32.xlu0 %v582, 32
  %v585 = vpop.permute.xlu0 %584
  %v587 = vadd.f32 %v577, %v585
  %v588 = vtanh.pop %v587
  %590 = vrot.lane.b32.xlu0 %v588, 32
  %v591 = vpop.permute.xlu0 %590
  %v593 = vmul.f32 %v575, %v591
  %v596 = vunpack.c.l.s4 1966171168
  %v597 = vunpack.c.0.s8 %v596
  %v598 = vlaneseq
  %v599 = vshrl.u32 %v598, 7
  %v600 = vsub.s32 %v597, %v599
  %v601 = vrot.slane %v593, %v600
  %v602 = vcombine.high %v601, %v601
  %v603 = vlaneseq
  %v604 = vshrl.u32 %v603, 7
  %v605 = vsub.s32 0, %v604
  %v606 = vrot.slane %v601, %v605
  %v607 = vlaneseq
  %v608 = vshrl.u32 %v607, 7
  %v609 = vsub.s32 0, %v608
  %v610 = vrot.slane %v602, %v609
  %611 = vrot.lane.b32.xlu0 %v606, 64
  %v612 = vpop.permute.xlu0 %611
  %613 = vrot.lane.b32.xlu0 %v610, 64
  %v614 = vpop.permute.xlu0 %613
  %617 = vst.msk [vmem:[#allocation2 + $0x2] sm:$0x1] %vm413, %v612
  %618 = vst.msk [vmem:[#allocation2 + $0xa] sm:$0x1] %vm413, %v614
  %619 = vst.msk [vmem:[#allocation2 + $0x5] sm:$0x1] %vm416, %v612
  %620 = vst.msk [vmem:[#allocation2 + $0xd] sm:$0x1] %vm416, %v614
  %v621 = vadd.f32 %v181, %v286
  %v622 = vadd.f32 %v621, %v308
  %v623 = vpack.c.bf16 %v593, %v593
  %625 = vrot.lane.b32.xlu0 %v623, 64
  %v626 = vpop.permute.xlu0 %625
  %v628 = vsel %vm118, %v626, 0
  %630 = vmatprep.subr.bf16.mxu0 0
  %631 = vmatpush1.bf16.msra.mxu0 %v318
  %632 = vmatprep.subr.bf16.mxu0 0
  %633 = vmatpush1.bf16.msra.mxu0 %v319
  %634 = vmatprep.subr.bf16.mxu0 0
  %635 = vmatpush1.bf16.msra.mxu0 0
  %636 = vmatprep.subr.bf16.mxu0 0
  %637 = vmatpush1.bf16.msra.mxu0 0
  %638 = vmatprep.subr.bf16.mxu0 0
  %639 = vmatpush1.bf16.msra.mxu0 0
  %640 = vmatprep.subr.bf16.mxu0 0
  %641 = vmatpush1.bf16.msra.mxu0 0
  %642 = vmatprep.subr.bf16.mxu0 0
  %643 = vmatpush1.bf16.msra.mxu0 0
  %644 = vmatprep.subr.bf16.mxu0 0
  %645 = vmatpush1.bf16.msra.mxu0 0
  %646 = vmatprep.subr.bf16.mxu0 0
  %647 = vmatpush1.bf16.msra.mxu0 0
  %648 = vmatprep.subr.bf16.mxu0 0
  %649 = vmatpush1.bf16.msra.mxu0 0
  %650 = vmatprep.subr.bf16.mxu0 0
  %651 = vmatpush1.bf16.msra.mxu0 0
  %652 = vmatprep.subr.bf16.mxu0 0
  %653 = vmatpush1.bf16.msra.mxu0 0
  %654 = vmatprep.subr.bf16.mxu0 0
  %655 = vmatpush1.bf16.msra.mxu0 0
  %656 = vmatprep.subr.bf16.mxu0 0
  %657 = vmatpush1.bf16.msra.mxu0 0
  %658 = vmatprep.subr.bf16.mxu0 0
  %659 = vmatpush1.bf16.msra.mxu0 0
  %660 = vmatprep.subr.bf16.mxu0 0
  %661 = vmatpush1.bf16.msra.mxu0 0
  %662 = vmatprep.mubr.bf16.mxu0 0
  %663 = vmatmul.mubr.bf16.gmra.mrb[0].mxu0 %v628
  %v664 = vpop.f32.mrb[0].mxu0
  %v665 = vadd.f32 0.0, %v664
  %v666 = vpop.f32.mrb[0].mxu0
  %v667 = vpop.f32.mrb[0].mxu0
  %v668 = vpop.f32.mrb[0].mxu0
  %669 = vdwg.mxu0
  %v670 = vadd.f32 %v622, %v665
  %v671 = vxor.u32 %v670, 2147483648
  %v672 = vmul.f32 %v671, 1.442695
  %v673 = vpow.pop %v672
  %v674 = vadd.f32 %v673, 1.0
  %v675 = vrcp.pop %v674
  %v676 = vmul.f32 1.0, %v675
  %v677 = vtanh.pop %v670
  %v678 = vmul.f32 %v676, %v587
  %680 = vrot.lane.b32.xlu0 %v677, 32
  %v681 = vpop.permute.xlu0 %680
  %v683 = vmul.f32 %v676, %v681
  %685 = vrot.lane.b32.xlu0 %v683, 32
  %v686 = vpop.permute.xlu0 %685
  %v688 = vadd.f32 %v678, %v686
  %v689 = vtanh.pop %v688
  %691 = vrot.lane.b32.xlu0 %v689, 32
  %v692 = vpop.permute.xlu0 %691
  %v694 = vmul.f32 %v676, %v692
  %v697 = vunpack.c.l.s4 1966171168
  %v698 = vunpack.c.0.s8 %v697
  %v699 = vlaneseq
  %v700 = vshrl.u32 %v699, 7
  %v701 = vsub.s32 %v698, %v700
  %v702 = vrot.slane %v694, %v701
  %v703 = vcombine.high %v702, %v702
  %v704 = vlaneseq
  %v705 = vshrl.u32 %v704, 7
  %v706 = vsub.s32 0, %v705
  %v707 = vrot.slane %v702, %v706
  %v708 = vlaneseq
  %v709 = vshrl.u32 %v708, 7
  %v710 = vsub.s32 0, %v709
  %v711 = vrot.slane %v703, %v710
  %712 = vrot.lane.b32.xlu0 %v707, 64
  %v713 = vpop.permute.xlu0 %712
  %714 = vrot.lane.b32.xlu0 %v711, 64
  %v715 = vpop.permute.xlu0 %714
  %718 = vst.msk [vmem:[#allocation2 + $0x3] sm:$0x1] %vm413, %v713
  %719 = vst.msk [vmem:[#allocation2 + $0xb] sm:$0x1] %vm413, %v715
  %720 = vst.msk [vmem:[#allocation2 + $0x4] sm:$0x1] %vm416, %v713
  %721 = vst.msk [vmem:[#allocation2 + $0xc] sm:$0x1] %vm416, %v715
  %v722 = vadd.f32 %v189, %v278
  %v723 = vadd.f32 %v722, %v308
  %v724 = vpack.c.bf16 %v694, %v694
  %726 = vrot.lane.b32.xlu0 %v724, 64
  %v727 = vpop.permute.xlu0 %726
  %v729 = vsel %vm118, %v727, 0
  %731 = vmatprep.subr.bf16.mxu0 0
  %732 = vmatpush1.bf16.msra.mxu0 %v318
  %733 = vmatprep.subr.bf16.mxu0 0
  %734 = vmatpush1.bf16.msra.mxu0 %v319
  %735 = vmatprep.subr.bf16.mxu0 0
  %736 = vmatpush1.bf16.msra.mxu0 0
  %737 = vmatprep.subr.bf16.mxu0 0
  %738 = vmatpush1.bf16.msra.mxu0 0
  %739 = vmatprep.subr.bf16.mxu0 0
  %740 = vmatpush1.bf16.msra.mxu0 0
  %741 = vmatprep.subr.bf16.mxu0 0
  %742 = vmatpush1.bf16.msra.mxu0 0
  %743 = vmatprep.subr.bf16.mxu0 0
  %744 = vmatpush1.bf16.msra.mxu0 0
  %745 = vmatprep.subr.bf16.mxu0 0
  %746 = vmatpush1.bf16.msra.mxu0 0
  %747 = vmatprep.subr.bf16.mxu0 0
  %748 = vmatpush1.bf16.msra.mxu0 0
  %749 = vmatprep.subr.bf16.mxu0 0
  %750 = vmatpush1.bf16.msra.mxu0 0
  %751 = vmatprep.subr.bf16.mxu0 0
  %752 = vmatpush1.bf16.msra.mxu0 0
  %753 = vmatprep.subr.bf16.mxu0 0
  %754 = vmatpush1.bf16.msra.mxu0 0
  %755 = vmatprep.subr.bf16.mxu0 0
  %756 = vmatpush1.bf16.msra.mxu0 0
  %757 = vmatprep.subr.bf16.mxu0 0
  %758 = vmatpush1.bf16.msra.mxu0 0
  %759 = vmatprep.subr.bf16.mxu0 0
  %760 = vmatpush1.bf16.msra.mxu0 0
  %761 = vmatprep.subr.bf16.mxu0 0
  %762 = vmatpush1.bf16.msra.mxu0 0
  %763 = vmatprep.mubr.bf16.mxu0 0
  %764 = vmatmul.mubr.bf16.gmra.mrb[0].mxu0 %v729
  %v765 = vpop.f32.mrb[0].mxu0
  %v766 = vadd.f32 0.0, %v765
  %v767 = vpop.f32.mrb[0].mxu0
  %v768 = vpop.f32.mrb[0].mxu0
  %v769 = vpop.f32.mrb[0].mxu0
  %770 = vdwg.mxu0
  %v771 = vadd.f32 %v723, %v766
  %v772 = vxor.u32 %v771, 2147483648
  %v773 = vmul.f32 %v772, 1.442695
  %v774 = vpow.pop %v773
  %v775 = vadd.f32 %v774, 1.0
  %v776 = vrcp.pop %v775
  %v777 = vmul.f32 1.0, %v776
  %v778 = vtanh.pop %v771
  %v779 = vmul.f32 %v777, %v688
  %781 = vrot.lane.b32.xlu0 %v778, 32
  %v782 = vpop.permute.xlu0 %781
  %v784 = vmul.f32 %v777, %v782
  %786 = vrot.lane.b32.xlu0 %v784, 32
  %v787 = vpop.permute.xlu0 %786
  %v789 = vadd.f32 %v779, %v787
  %v790 = vtanh.pop %v789
  %792 = vrot.lane.b32.xlu0 %v790, 32
  %v793 = vpop.permute.xlu0 %792
  %v795 = vmul.f32 %v777, %v793
  %v798 = vunpack.c.l.s4 1966171168
  %v799 = vunpack.c.0.s8 %v798
  %v800 = vlaneseq
  %v801 = vshrl.u32 %v800, 7
  %v802 = vsub.s32 %v799, %v801
  %v803 = vrot.slane %v795, %v802
  %v804 = vcombine.high %v803, %v803
  %v805 = vlaneseq
  %v806 = vshrl.u32 %v805, 7
  %v807 = vsub.s32 0, %v806
  %v808 = vrot.slane %v803, %v807
  %v809 = vlaneseq
  %v810 = vshrl.u32 %v809, 7
  %v811 = vsub.s32 0, %v810
  %v812 = vrot.slane %v804, %v811
  %813 = vrot.lane.b32.xlu0 %v808, 64
  %v814 = vpop.permute.xlu0 %813
  %815 = vrot.lane.b32.xlu0 %v812, 64
  %v816 = vpop.permute.xlu0 %815
  %819 = vst.msk [vmem:[#allocation2 + $0x4] sm:$0x1] %vm413, %v814
  %820 = vst.msk [vmem:[#allocation2 + $0xc] sm:$0x1] %vm413, %v816
  %821 = vst.msk [vmem:[#allocation2 + $0x3] sm:$0x1] %vm416, %v814
  %822 = vst.msk [vmem:[#allocation2 + $0xb] sm:$0x1] %vm416, %v816
  %v823 = vadd.f32 %v197, %v276
  %v824 = vadd.f32 %v823, %v308
  %v825 = vpack.c.bf16 %v795, %v795
  %827 = vrot.lane.b32.xlu0 %v825, 64
  %v828 = vpop.permute.xlu0 %827
  %v830 = vsel %vm118, %v828, 0
  %832 = vmatprep.subr.bf16.mxu0 0
  %833 = vmatpush1.bf16.msra.mxu0 %v318
  %834 = vmatprep.subr.bf16.mxu0 0
  %835 = vmatpush1.bf16.msra.mxu0 %v319
  %836 = vmatprep.subr.bf16.mxu0 0
  %837 = vmatpush1.bf16.msra.mxu0 0
  %838 = vmatprep.subr.bf16.mxu0 0
  %839 = vmatpush1.bf16.msra.mxu0 0
  %840 = vmatprep.subr.bf16.mxu0 0
  %841 = vmatpush1.bf16.msra.mxu0 0
  %842 = vmatprep.subr.bf16.mxu0 0
  %843 = vmatpush1.bf16.msra.mxu0 0
  %844 = vmatprep.subr.bf16.mxu0 0
  %845 = vmatpush1.bf16.msra.mxu0 0
  %846 = vmatprep.subr.bf16.mxu0 0
  %847 = vmatpush1.bf16.msra.mxu0 0
  %848 = vmatprep.subr.bf16.mxu0 0
  %849 = vmatpush1.bf16.msra.mxu0 0
  %850 = vmatprep.subr.bf16.mxu0 0
  %851 = vmatpush1.bf16.msra.mxu0 0
  %852 = vmatprep.subr.bf16.mxu0 0
  %853 = vmatpush1.bf16.msra.mxu0 0
  %854 = vmatprep.subr.bf16.mxu0 0
  %855 = vmatpush1.bf16.msra.mxu0 0
  %856 = vmatprep.subr.bf16.mxu0 0
  %857 = vmatpush1.bf16.msra.mxu0 0
  %858 = vmatprep.subr.bf16.mxu0 0
  %859 = vmatpush1.bf16.msra.mxu0 0
  %860 = vmatprep.subr.bf16.mxu0 0
  %861 = vmatpush1.bf16.msra.mxu0 0
  %862 = vmatprep.subr.bf16.mxu0 0
  %863 = vmatpush1.bf16.msra.mxu0 0
  %864 = vmatprep.mubr.bf16.mxu0 0
  %865 = vmatmul.mubr.bf16.gmra.mrb[0].mxu0 %v830
  %v866 = vpop.f32.mrb[0].mxu0
  %v867 = vadd.f32 0.0, %v866
  %v868 = vpop.f32.mrb[0].mxu0
  %v869 = vpop.f32.mrb[0].mxu0
  %v870 = vpop.f32.mrb[0].mxu0
  %871 = vdwg.mxu0
  %v872 = vadd.f32 %v824, %v867
  %v873 = vxor.u32 %v872, 2147483648
  %v874 = vmul.f32 %v873, 1.442695
  %v875 = vpow.pop %v874
  %v876 = vadd.f32 %v875, 1.0
  %v877 = vrcp.pop %v876
  %v878 = vmul.f32 1.0, %v877
  %v879 = vtanh.pop %v872
  %v880 = vmul.f32 %v878, %v789
  %882 = vrot.lane.b32.xlu0 %v879, 32
  %v883 = vpop.permute.xlu0 %882
  %v885 = vmul.f32 %v878, %v883
  %887 = vrot.lane.b32.xlu0 %v885, 32
  %v888 = vpop.permute.xlu0 %887
  %v890 = vadd.f32 %v880, %v888
  %v891 = vtanh.pop %v890
  %893 = vrot.lane.b32.xlu0 %v891, 32
  %v894 = vpop.permute.xlu0 %893
  %v896 = vmul.f32 %v878, %v894
  %v899 = vunpack.c.l.s4 1966171168
  %v900 = vunpack.c.0.s8 %v899
  %v901 = vlaneseq
  %v902 = vshrl.u32 %v901, 7
  %v903 = vsub.s32 %v900, %v902
  %v904 = vrot.slane %v896, %v903
  %v905 = vcombine.high %v904, %v904
  %v906 = vlaneseq
  %v907 = vshrl.u32 %v906, 7
  %v908 = vsub.s32 0, %v907
  %v909 = vrot.slane %v904, %v908
  %v910 = vlaneseq
  %v911 = vshrl.u32 %v910, 7
  %v912 = vsub.s32 0, %v911
  %v913 = vrot.slane %v905, %v912
  %914 = vrot.lane.b32.xlu0 %v909, 64
  %v915 = vpop.permute.xlu0 %914
  %916 = vrot.lane.b32.xlu0 %v913, 64
  %v917 = vpop.permute.xlu0 %916
  %920 = vst.msk [vmem:[#allocation2 + $0x5] sm:$0x1] %vm413, %v915
  %921 = vst.msk [vmem:[#allocation2 + $0xd] sm:$0x1] %vm413, %v917
  %922 = vst.msk [vmem:[#allocation2 + $0x2] sm:$0x1] %vm416, %v915
  %923 = vst.msk [vmem:[#allocation2 + $0xa] sm:$0x1] %vm416, %v917
  %v924 = vadd.f32 %v196, %v277
  %v925 = vadd.f32 %v924, %v308
  %v926 = vpack.c.bf16 %v896, %v896
  %928 = vrot.lane.b32.xlu0 %v926, 64
  %v929 = vpop.permute.xlu0 %928
  %v931 = vsel %vm118, %v929, 0
  %933 = vmatprep.subr.bf16.mxu0 0
  %934 = vmatpush1.bf16.msra.mxu0 %v318
  %935 = vmatprep.subr.bf16.mxu0 0
  %936 = vmatpush1.bf16.msra.mxu0 %v319
  %937 = vmatprep.subr.bf16.mxu0 0
  %938 = vmatpush1.bf16.msra.mxu0 0
  %939 = vmatprep.subr.bf16.mxu0 0
  %940 = vmatpush1.bf16.msra.mxu0 0
  %941 = vmatprep.subr.bf16.mxu0 0
  %942 = vmatpush1.bf16.msra.mxu0 0
  %943 = vmatprep.subr.bf16.mxu0 0
  %944 = vmatpush1.bf16.msra.mxu0 0
  %945 = vmatprep.subr.bf16.mxu0 0
  %946 = vmatpush1.bf16.msra.mxu0 0
  %947 = vmatprep.subr.bf16.mxu0 0
  %948 = vmatpush1.bf16.msra.mxu0 0
  %949 = vmatprep.subr.bf16.mxu0 0
  %950 = vmatpush1.bf16.msra.mxu0 0
  %951 = vmatprep.subr.bf16.mxu0 0
  %952 = vmatpush1.bf16.msra.mxu0 0
  %953 = vmatprep.subr.bf16.mxu0 0
  %954 = vmatpush1.bf16.msra.mxu0 0
  %955 = vmatprep.subr.bf16.mxu0 0
  %956 = vmatpush1.bf16.msra.mxu0 0
  %957 = vmatprep.subr.bf16.mxu0 0
  %958 = vmatpush1.bf16.msra.mxu0 0
  %959 = vmatprep.subr.bf16.mxu0 0
  %960 = vmatpush1.bf16.msra.mxu0 0
  %961 = vmatprep.subr.bf16.mxu0 0
  %962 = vmatpush1.bf16.msra.mxu0 0
  %963 = vmatprep.subr.bf16.mxu0 0
  %964 = vmatpush1.bf16.msra.mxu0 0
  %965 = vmatprep.mubr.bf16.mxu0 0
  %966 = vmatmul.mubr.bf16.gmra.mrb[0].mxu0 %v931
  %v967 = vpop.f32.mrb[0].mxu0
  %v968 = vadd.f32 0.0, %v967
  %v969 = vpop.f32.mrb[0].mxu0
  %v970 = vpop.f32.mrb[0].mxu0
  %v971 = vpop.f32.mrb[0].mxu0
  %972 = vdwg.mxu0
  %v973 = vadd.f32 %v925, %v968
  %v974 = vxor.u32 %v973, 2147483648
  %v975 = vmul.f32 %v974, 1.442695
  %v976 = vpow.pop %v975
  %v977 = vadd.f32 %v976, 1.0
  %v978 = vrcp.pop %v977
  %v979 = vmul.f32 1.0, %v978
  %v980 = vtanh.pop %v973
  %v981 = vmul.f32 %v979, %v890
  %983 = vrot.lane.b32.xlu0 %v980, 32
  %v984 = vpop.permute.xlu0 %983
  %v986 = vmul.f32 %v979, %v984
  %988 = vrot.lane.b32.xlu0 %v986, 32
  %v989 = vpop.permute.xlu0 %988
  %v991 = vadd.f32 %v981, %v989
  %v992 = vtanh.pop %v991
  %994 = vrot.lane.b32.xlu0 %v992, 32
  %v995 = vpop.permute.xlu0 %994
  %v997 = vmul.f32 %v979, %v995
  %v1000 = vunpack.c.l.s4 1966171168
  %v1001 = vunpack.c.0.s8 %v1000
  %v1002 = vlaneseq
  %v1003 = vshrl.u32 %v1002, 7
  %v1004 = vsub.s32 %v1001, %v1003
  %v1005 = vrot.slane %v997, %v1004
  %v1006 = vcombine.high %v1005, %v1005
  %v1007 = vlaneseq
  %v1008 = vshrl.u32 %v1007, 7
  %v1009 = vsub.s32 0, %v1008
  %v1010 = vrot.slane %v1005, %v1009
  %v1011 = vlaneseq
  %v1012 = vshrl.u32 %v1011, 7
  %v1013 = vsub.s32 0, %v1012
  %v1014 = vrot.slane %v1006, %v1013
  %1015 = vrot.lane.b32.xlu0 %v1010, 64
  %v1016 = vpop.permute.xlu0 %1015
  %1017 = vrot.lane.b32.xlu0 %v1014, 64
  %v1018 = vpop.permute.xlu0 %1017
  %1021 = vst.msk [vmem:[#allocation2 + $0x6] sm:$0x1] %vm413, %v1016
  %1022 = vst.msk [vmem:[#allocation2 + $0xe] sm:$0x1] %vm413, %v1018
  %1023 = vst.msk [vmem:[#allocation2 + $0x1] sm:$0x1] %vm416, %v1016
  %1024 = vst.msk [vmem:[#allocation2 + $0x9] sm:$0x1] %vm416, %v1018
  %v1025 = vadd.f32 %v198, %v269
  %v1026 = vadd.f32 %v1025, %v308
  %v1027 = vpack.c.bf16 %v997, %v997
  %1029 = vrot.lane.b32.xlu0 %v1027, 64
  %v1030 = vpop.permute.xlu0 %1029
  %v1032 = vsel %vm118, %v1030, 0
  %1034 = vmatprep.subr.bf16.mxu0 0
  %1035 = vmatpush1.bf16.msra.mxu0 %v318
  %1036 = vmatprep.subr.bf16.mxu0 0
  %1037 = vmatpush1.bf16.msra.mxu0 %v319
  %1038 = vmatprep.subr.bf16.mxu0 0
  %1039 = vmatpush1.bf16.msra.mxu0 0
  %1040 = vmatprep.subr.bf16.mxu0 0
  %1041 = vmatpush1.bf16.msra.mxu0 0
  %1042 = vmatprep.subr.bf16.mxu0 0
  %1043 = vmatpush1.bf16.msra.mxu0 0
  %1044 = vmatprep.subr.bf16.mxu0 0
  %1045 = vmatpush1.bf16.msra.mxu0 0
  %1046 = vmatprep.subr.bf16.mxu0 0
  %1047 = vmatpush1.bf16.msra.mxu0 0
  %1048 = vmatprep.subr.bf16.mxu0 0
  %1049 = vmatpush1.bf16.msra.mxu0 0
  %1050 = vmatprep.subr.bf16.mxu0 0
  %1051 = vmatpush1.bf16.msra.mxu0 0
  %1052 = vmatprep.subr.bf16.mxu0 0
  %1053 = vmatpush1.bf16.msra.mxu0 0
  %1054 = vmatprep.subr.bf16.mxu0 0
  %1055 = vmatpush1.bf16.msra.mxu0 0
  %1056 = vmatprep.subr.bf16.mxu0 0
  %1057 = vmatpush1.bf16.msra.mxu0 0
  %1058 = vmatprep.subr.bf16.mxu0 0
  %1059 = vmatpush1.bf16.msra.mxu0 0
  %1060 = vmatprep.subr.bf16.mxu0 0
  %1061 = vmatpush1.bf16.msra.mxu0 0
  %1062 = vmatprep.subr.bf16.mxu0 0
  %1063 = vmatpush1.bf16.msra.mxu0 0
  %1064 = vmatprep.subr.bf16.mxu0 0
  %1065 = vmatpush1.bf16.msra.mxu0 0
  %1066 = vmatprep.mubr.bf16.mxu0 0
  %1067 = vmatmul.mubr.bf16.gmra.mrb[0].mxu0 %v1032
  %v1068 = vpop.f32.mrb[0].mxu0
  %v1069 = vadd.f32 0.0, %v1068
  %v1070 = vpop.f32.mrb[0].mxu0
  %v1071 = vpop.f32.mrb[0].mxu0
  %v1072 = vpop.f32.mrb[0].mxu0
  %1073 = vdwg.mxu0
  %v1074 = vadd.f32 %v1026, %v1069
  %v1075 = vxor.u32 %v1074, 2147483648
  %v1076 = vmul.f32 %v1075, 1.442695
  %v1077 = vpow.pop %v1076
  %v1078 = vadd.f32 %v1077, 1.0
  %v1079 = vrcp.pop %v1078
  %v1080 = vmul.f32 1.0, %v1079
  %v1081 = vtanh.pop %v1074
  %v1082 = vmul.f32 %v1080, %v991
  %1084 = vrot.lane.b32.xlu0 %v1081, 32
  %v1085 = vpop.permute.xlu0 %1084
  %v1087 = vmul.f32 %v1080, %v1085
  %1089 = vrot.lane.b32.xlu0 %v1087, 32
  %v1090 = vpop.permute.xlu0 %1089
  %v1092 = vadd.f32 %v1082, %v1090
  %v1093 = vtanh.pop %v1092
  %1095 = vrot.lane.b32.xlu0 %v1093, 32
  %v1096 = vpop.permute.xlu0 %1095
  %v1098 = vmul.f32 %v1080, %v1096
  %v1101 = vunpack.c.l.s4 1966171168
  %v1102 = vunpack.c.0.s8 %v1101
  %v1103 = vlaneseq
  %v1104 = vshrl.u32 %v1103, 7
  %v1105 = vsub.s32 %v1102, %v1104
  %v1106 = vrot.slane %v1098, %v1105
  %v1107 = vcombine.high %v1106, %v1106
  %v1108 = vlaneseq
  %v1109 = vshrl.u32 %v1108, 7
  %v1110 = vsub.s32 0, %v1109
  %v1111 = vrot.slane %v1106, %v1110
  %v1112 = vlaneseq
  %v1113 = vshrl.u32 %v1112, 7
  %v1114 = vsub.s32 0, %v1113
  %v1115 = vrot.slane %v1107, %v1114
  %1116 = vrot.lane.b32.xlu0 %v1111, 64
  %v1117 = vpop.permute.xlu0 %1116
  %1118 = vrot.lane.b32.xlu0 %v1115, 64
  %v1119 = vpop.permute.xlu0 %1118
  %1122 = vst.msk [vmem:[#allocation2 + $0x7] sm:$0x1] %vm413, %v1117
  %1123 = vst.msk [vmem:[#allocation2 + $0xf] sm:$0x1] %vm413, %v1119
  %1124 = vst.msk [vmem:[#allocation2] sm:$0x1] %vm416, %v1117
  %1125 = vst.msk [vmem:[#allocation2 + $0x8] sm:$0x1] %vm416, %v1119
  %v1126 = vld [vmem:[#allocation2] sm:$0xff]
  %v1127 = vld [vmem:[#allocation2 + $0x8] sm:$0xff]
  %v1128 = vpack.c.bf16 %v1127, %v1126
  %v1129 = vlaneseq
  %v1130 = vshrl.u32 %v1129, 7
  %v1131 = vsub.s32 0, %v1130
  %v1132 = vrot.slane %v49, %v1131
  %v1137 = vunpack.c.l.b16 %v39
  %v1138 = vunpack.c.l.b16 %v40
  %v1139 = vunpack.c.l.b16 %v41
  %v1140 = vunpack.c.l.b16 %v42
  %v1141 = vpack.c.b16 %v1138, %v1137
  %v1142 = vpack.c.b16 %v1140, %v1139
  %v1146 = vsel %vm118, %v1128, 0
  %1148 = vmatprep.subr.bf16.mxu0 0
  %1149 = vmatpush1.bf16.msra.mxu0 %v1141
  %1150 = vmatprep.subr.bf16.mxu0 0
  %1151 = vmatpush1.bf16.msra.mxu0 %v1142
  %1152 = vmatprep.subr.bf16.mxu0 0
  %1153 = vmatpush1.bf16.msra.mxu0 0
  %1154 = vmatprep.subr.bf16.mxu0 0
  %1155 = vmatpush1.bf16.msra.mxu0 0
  %1156 = vmatprep.subr.bf16.mxu0 0
  %1157 = vmatpush1.bf16.msra.mxu0 0
  %1158 = vmatprep.subr.bf16.mxu0 0
  %1159 = vmatpush1.bf16.msra.mxu0 0
  %1160 = vmatprep.subr.bf16.mxu0 0
  %1161 = vmatpush1.bf16.msra.mxu0 0
  %1162 = vmatprep.subr.bf16.mxu0 0
  %1163 = vmatpush1.bf16.msra.mxu0 0
  %1164 = vmatprep.subr.bf16.mxu0 0
  %1165 = vmatpush1.bf16.msra.mxu0 0
  %1166 = vmatprep.subr.bf16.mxu0 0
  %1167 = vmatpush1.bf16.msra.mxu0 0
  %1168 = vmatprep.subr.bf16.mxu0 0
  %1169 = vmatpush1.bf16.msra.mxu0 0
  %1170 = vmatprep.subr.bf16.mxu0 0
  %1171 = vmatpush1.bf16.msra.mxu0 0
  %1172 = vmatprep.subr.bf16.mxu0 0
  %1173 = vmatpush1.bf16.msra.mxu0 0
  %1174 = vmatprep.subr.bf16.mxu0 0
  %1175 = vmatpush1.bf16.msra.mxu0 0
  %1176 = vmatprep.subr.bf16.mxu0 0
  %1177 = vmatpush1.bf16.msra.mxu0 0
  %1178 = vmatprep.subr.bf16.mxu0 0
  %1179 = vmatpush1.bf16.msra.mxu0 0
  %1180 = vmatprep.mubr.bf16.mxu0 0
  %1181 = vmatmul.mubr.bf16.gmra.mrb[0].mxu0 %v1146
  %v1182 = vpop.f32.mrb[0].mxu0
  %v1183 = vadd.f32 %v1132, %v1182
  %v1184 = vpop.f32.mrb[0].mxu0
  %v1185 = vpop.f32.mrb[0].mxu0
  %v1186 = vadd.f32 %v1132, %v1185
  %v1187 = vpop.f32.mrb[0].mxu0
  %1188 = vdwg.mxu0
  %v1189 = vlaneseq
  %v1190 = vand.u32 %v1189, 127
  %v1191 = vcvt.s32.f32 %v1190
  %v1192 = vlaneseq
  %v1193 = vshrl.u32 %v1192, 7
  %v1194 = vsub.s32 0, %v1193
  %v1195 = vrot.slane %v51, %v1194
  %v1197 = vpack.i.b16 %v37, %v37
  %v1199 = vlaneseq
  %v1200 = vshrl.u32 %v1199, 7
  %v1201 = vsub.s32 0, %v1200
  %v1202 = vrot.slane %v1197, %v1201
  %v1203 = vunpack.c.l.bf16 %v1202
  %v1206 = vunpack.c.l.s4 1966171168
  %v1207 = vunpack.c.0.s8 %v1206
  %v1208 = vlaneseq
  %v1209 = vshrl.u32 %v1208, 7
  %v1210 = vsub.s32 %v1207, %v1209
  %v1211 = vrot.slane %v1195, %v1210
  %v1212 = vcombine.high %v1211, %v1211
  %v1214 = vunpack.c.l.s4 1966171168
  %v1215 = vunpack.c.0.s8 %v1214
  %v1216 = vlaneseq
  %v1217 = vshrl.u32 %v1216, 7
  %v1218 = vsub.s32 %v1215, %v1217
  %v1219 = vrot.slane %v1211, %v1218
  %v1221 = vunpack.c.l.s4 1966171168
  %v1222 = vunpack.c.0.s8 %v1221
  %v1223 = vlaneseq
  %v1224 = vshrl.u32 %v1223, 7
  %v1225 = vsub.s32 %v1222, %v1224
  %v1226 = vrot.slane %v1212, %v1225
  %v1227 = vlaneseq
  %v1228 = vshrl.u32 %v1227, 7
  %v1229 = vsub.s32 0, %v1228
  %v1230 = vrot.slane %v1219, %v1229
  %v1231 = vlaneseq
  %v1232 = vshrl.u32 %v1231, 7
  %v1233 = vsub.s32 0, %v1232
  %v1234 = vrot.slane %v1226, %v1233
  %v1237 = vadd.f32 %v1183, %v1230
  %v1238 = vadd.f32 %v1186, %v1234
  %v1239 = vtanh.pop %v1237
  %v1240 = vtanh.pop %v1238
  %v1241 = vlaneseq
  %v1242 = vshrl.u32 %v1241, 7
  %v1243 = vsub.s32 0, %v1242
  %v1244 = vrot.slane %v50, %v1243
  %v1245 = vmul.f32 %v1239, %v1244
  %v1246 = vmul.f32 %v1240, %v1244
  %v1247 = vsel %vm118, %v1245, 0.0
  %1248 = vadd.xlane.f32.xlu0 %v1247
  %v1249 = vpop.xlane.xlu0 %1248
  %v1250 = vsel %vm118, %v1246, 0.0
  %1251 = vadd.xlane.f32.xlu0 %v1250
  %v1252 = vpop.xlane.xlu0 %1251
  %v1255 = vlaneseq
  %v1256 = vshrl.u32 %v1255, 7
  %v1257 = vsub.s32 %v1190, %v1256
  %v1258 = vrot.slane %v1249, %v1257
  %v1259 = vlaneseq
  %v1260 = vshrl.u32 %v1259, 7
  %v1261 = vsub.s32 %v1190, %v1260
  %v1262 = vrot.slane %v1252, %v1261
  %vm1263 = vcmask 1041409
  %v1264 = vsel %vm1263, %v1262, %v1258
  %vm1266 = vcmask 58368
  %v1267 = vsel %vm1266, %v1264, -inf
  %1268 = vmax.xlane.f32.xlu0 %v1267
  %v1269 = vpop.xlane.xlu0 %1268
  %v1271 = vlaneseq
  %v1272 = vshrl.u32 %v1271, 7
  %v1273 = vsub.s32 0, %v1272
  %v1274 = vrot.slane %v1269, %v1273
  %v1275 = vlaneseq
  %v1276 = vshrl.u32 %v1275, 7
  %v1277 = vsub.s32 1, %v1276
  %v1278 = vrot.slane %v1269, %v1277
  %v1281 = vsub.f32 %v1249, %v1274
  %v1282 = vsub.f32 %v1252, %v1278
  %v1283 = vmul.f32 %v1281, 1.442695
  %v1284 = vpow.pop %v1283
  %v1285 = vmul.f32 %v1282, 1.442695
  %v1286 = vpow.pop %v1285
  %1289 = vset.pattern.permute.xlu0 0
  %1290 = vperm.xlu0 %1289, %v1284
  %v1291 = vpop.permute.xlu0 %1290
  %1292 = vset.pattern.permute.xlu0 0
  %1293 = vperm.xlu0 %1292, %v1286
  %v1294 = vpop.permute.xlu0 %1293
  %v1295 = vlaneseq
  %v1296 = vshrl.u32 %v1295, 7
  %v1297 = vsub.s32 %v1190, %v1296
  %v1298 = vrot.slane %v1291, %v1297
  %v1299 = vlaneseq
  %v1300 = vshrl.u32 %v1299, 7
  %v1301 = vsub.s32 %v1190, %v1300
  %v1302 = vrot.slane %v1294, %v1301
  %v1303 = vsel %vm1263, %v1302, %v1298
  %v1305 = vsel %vm1266, %v1303, 0.0
  %1306 = vadd.xlane.f32.xlu0 %v1305
  %v1307 = vpop.xlane.xlu0 %1306
  %v1309 = vlaneseq
  %v1310 = vshrl.u32 %v1309, 7
  %v1311 = vsub.s32 0, %v1310
  %v1312 = vrot.slane %v1307, %v1311
  %v1313 = vlaneseq
  %v1314 = vshrl.u32 %v1313, 7
  %v1315 = vsub.s32 1, %v1314
  %v1316 = vrot.slane %v1307, %v1315
  %v1319 = vrcp.pop %v1312
  %v1320 = vmul.f32 %v1284, %v1319
  %v1321 = vrcp.pop %v1316
  %v1322 = vmul.f32 %v1286, %v1321
  %1324 = vset.pattern.permute.xlu0 0
  %1325 = vperm.xlu0 %1324, %v1320
  %v1326 = vpop.permute.xlu0 %1325
  %1329 = vset.pattern.permute.xlu0 0
  %1330 = vperm.xlu0 %1329, %v1322
  %v1331 = vpop.permute.xlu0 %1330
  %v1333 = vmul.f32 %v1126, %v1326
  %v1334 = vmul.f32 %v1127, %v1331
  %v1335 = vsel %vm118, %v1333, 0.0
  %v1336 = vrot.slane %v1335, 4
  %v1337 = vadd.f32 %v1335, %v1336
  %v1338 = vrot.slane %v1337, 2
  %v1339 = vadd.f32 %v1337, %v1338
  %v1340 = vrot.slane %v1339, 1
  %v1341 = vadd.f32 %v1339, %v1340
  %v1342 = vsel %vm118, %v1334, 0.0
  %v1343 = vrot.slane %v1342, 4
  %v1344 = vadd.f32 %v1342, %v1343
  %v1345 = vrot.slane %v1344, 2
  %v1346 = vadd.f32 %v1344, %v1345
  %v1347 = vrot.slane %v1346, 1
  %v1348 = vadd.f32 %v1346, %v1347
  %v1351 = vsel %vm1263, %v1348, %v1341
  %v1353 = vsel %vm118, %v1351, 0.0
  %v1354 = vpack.c.bf16 %v1353, %v1353
  %v1363 = vunpack.c.l.b16 %v29
  %v1364 = vunpack.c.l.b16 %v30
  %v1365 = vunpack.c.l.b16 %v31
  %v1366 = vunpack.c.l.b16 %v32
  %v1367 = vunpack.c.l.b16 %v33
  %v1368 = vunpack.c.l.b16 %v34
  %v1369 = vunpack.c.l.b16 %v35
  %v1370 = vunpack.c.l.b16 %v36
  %v1371 = vpack.c.b16 %v1364, %v1363
  %v1372 = vpack.c.b16 %v1366, %v1365
  %v1373 = vpack.c.b16 %v1368, %v1367
  %v1374 = vpack.c.b16 %v1370, %v1369
  %vm1379 = vcmask 523264
  %v1381 = vsel %vm1379, %v1354, 0
  %1383 = vmatprep.subr.bf16.mxu0 0
  %1384 = vmatpush1.bf16.msra.mxu0 %v1371
  %1385 = vmatprep.subr.bf16.mxu0 0
  %1386 = vmatpush1.bf16.msra.mxu0 %v1372
  %1387 = vmatprep.subr.bf16.mxu0 0
  %1388 = vmatpush1.bf16.msra.mxu0 %v1373
  %1389 = vmatprep.subr.bf16.mxu0 0
  %1390 = vmatpush1.bf16.msra.mxu0 %v1374
  %1391 = vmatprep.subr.bf16.mxu0 0
  %1392 = vmatpush1.bf16.msra.mxu0 0
  %1393 = vmatprep.subr.bf16.mxu0 0
  %1394 = vmatpush1.bf16.msra.mxu0 0
  %1395 = vmatprep.subr.bf16.mxu0 0
  %1396 = vmatpush1.bf16.msra.mxu0 0
  %1397 = vmatprep.subr.bf16.mxu0 0
  %1398 = vmatpush1.bf16.msra.mxu0 0
  %1399 = vmatprep.subr.bf16.mxu0 0
  %1400 = vmatpush1.bf16.msra.mxu0 0
  %1401 = vmatprep.subr.bf16.mxu0 0
  %1402 = vmatpush1.bf16.msra.mxu0 0
  %1403 = vmatprep.subr.bf16.mxu0 0
  %1404 = vmatpush1.bf16.msra.mxu0 0
  %1405 = vmatprep.subr.bf16.mxu0 0
  %1406 = vmatpush1.bf16.msra.mxu0 0
  %1407 = vmatprep.subr.bf16.mxu0 0
  %1408 = vmatpush1.bf16.msra.mxu0 0
  %1409 = vmatprep.subr.bf16.mxu0 0
  %1410 = vmatpush1.bf16.msra.mxu0 0
  %1411 = vmatprep.subr.bf16.mxu0 0
  %1412 = vmatpush1.bf16.msra.mxu0 0
  %1413 = vmatprep.subr.bf16.mxu0 0
  %1414 = vmatpush1.bf16.msra.mxu0 0
  %1415 = vmatprep.mubr.bf16.mxu0 0
  %1416 = vmatmul.mubr.bf16.gmra.mrb[0].mxu0 %v1381
  %v1417 = vpop.f32.mrb[0].mxu0
  %v1418 = vadd.f32 0.0, %v1417
  %v1419 = vpop.f32.mrb[0].mxu0
  %v1420 = vpop.f32.mrb[0].mxu0
  %v1421 = vpop.f32.mrb[0].mxu0
  %1422 = vdwg.mxu0
  %v1423 = vadd.f32 %v1203, %v1418
  %v1424 = vlaneseq
  %v1425 = vshrl.u32 %v1424, 7
  %v1426 = vsub.s32 0, %v1425
  %v1427 = vrot.slane %v48, %v1426
  %v1428 = vadd.f32 %v1423, %v1427
  %v1429 = vxor.u32 %v1428, 2147483648
  %v1430 = vmul.f32 %v1429, 1.442695
  %v1431 = vpow.pop %v1430
  %v1432 = vadd.f32 %v1431, 1.0
  %v1433 = vrcp.pop %v1432
  %v1434 = vmul.f32 1.0, %v1433
  %v1435 = vtanh.pop %v1428
  %v1436 = vmul.f32 %v1434, 0.0
  %1438 = vrot.lane.b32.xlu0 %v1435, 32
  %v1439 = vpop.permute.xlu0 %1438
  %v1441 = vmul.f32 %v1434, %v1439
  %1443 = vrot.lane.b32.xlu0 %v1441, 32
  %v1444 = vpop.permute.xlu0 %1443
  %v1446 = vadd.f32 %v1436, %v1444
  %v1447 = vtanh.pop %v1446
  %1449 = vrot.lane.b32.xlu0 %v1447, 32
  %v1450 = vpop.permute.xlu0 %1449
  %v1452 = vmul.f32 %v1434, %v1450
  %v1453 = vpack.c.bf16 %v1452, %v1452
  %v1454 = vlaneseq
  %v1455 = vshrl.u32 %v1454, 7
  %v1456 = vsub.s32 0, %v1455
  %v1457 = vrot.slane %v52, %v1456
  %1459 = vrot.lane.b32.xlu0 %v1453, 64
  %v1460 = vpop.permute.xlu0 %1459
  %v1465 = vunpack.c.l.b16 %v43
  %v1466 = vunpack.c.l.b16 %v44
  %v1467 = vunpack.c.l.b16 %v45
  %v1468 = vunpack.c.l.b16 %v46
  %v1469 = vpack.c.b16 %v1466, %v1465
  %v1470 = vpack.c.b16 %v1468, %v1467
  %v1474 = vsel %vm118, %v1460, 0
  %1476 = vmatprep.subr.bf16.mxu0 0
  %1477 = vmatpush1.bf16.msra.mxu0 %v1469
  %1478 = vmatprep.subr.bf16.mxu0 0
  %1479 = vmatpush1.bf16.msra.mxu0 %v1470
  %1480 = vmatprep.subr.bf16.mxu0 0
  %1481 = vmatpush1.bf16.msra.mxu0 0
  %1482 = vmatprep.subr.bf16.mxu0 0
  %1483 = vmatpush1.bf16.msra.mxu0 0
  %1484 = vmatprep.subr.bf16.mxu0 0
  %1485 = vmatpush1.bf16.msra.mxu0 0
  %1486 = vmatprep.subr.bf16.mxu0 0
  %1487 = vmatpush1.bf16.msra.mxu0 0
  %1488 = vmatprep.subr.bf16.mxu0 0
  %1489 = vmatpush1.bf16.msra.mxu0 0
  %1490 = vmatprep.subr.bf16.mxu0 0
  %1491 = vmatpush1.bf16.msra.mxu0 0
  %1492 = vmatprep.subr.bf16.mxu0 0
  %1493 = vmatpush1.bf16.msra.mxu0 0
  %1494 = vmatprep.subr.bf16.mxu0 0
  %1495 = vmatpush1.bf16.msra.mxu0 0
  %1496 = vmatprep.subr.bf16.mxu0 0
  %1497 = vmatpush1.bf16.msra.mxu0 0
  %1498 = vmatprep.subr.bf16.mxu0 0
  %1499 = vmatpush1.bf16.msra.mxu0 0
  %1500 = vmatprep.subr.bf16.mxu0 0
  %1501 = vmatpush1.bf16.msra.mxu0 0
  %1502 = vmatprep.subr.bf16.mxu0 0
  %1503 = vmatpush1.bf16.msra.mxu0 0
  %1504 = vmatprep.subr.bf16.mxu0 0
  %1505 = vmatpush1.bf16.msra.mxu0 0
  %1506 = vmatprep.subr.bf16.mxu0 0
  %1507 = vmatpush1.bf16.msra.mxu0 0
  %1508 = vmatprep.mubr.bf16.mxu0 0
  %1509 = vmatmul.mubr.bf16.gmra.mrb[0].mxu0 %v1474
  %v1510 = vpop.f32.mrb[0].mxu0
  %v1511 = vadd.f32 %v1457, %v1510
  %v1512 = vpop.f32.mrb[0].mxu0
  %v1513 = vpop.f32.mrb[0].mxu0
  %v1514 = vpop.f32.mrb[0].mxu0
  %1515 = vdwg.mxu0
  %vm1516 = vcmask 353536
  %v1517 = vsel %vm1516, %v1511, -inf
  %1518 = vmax.xlane.f32.xlu0 %v1517
  %v1519 = vpop.xlane.xlu0 %1518
  %v1520 = vsub.f32 %v1511, %v1519
  %v1521 = vmul.f32 %v1520, 1.442695
  %v1522 = vpow.pop %v1521
  %1524 = vrot.lane.b32.xlu0 %v1522, 96
  %v1525 = vpop.permute.xlu0 %1524
  %vm1527 = vcmask 91136
  %v1528 = vsel %vm1527, %v1525, 0.0
  %1529 = vadd.xlane.f32.xlu0 %v1528
  %v1530 = vpop.xlane.xlu0 %1529
  %v1531 = vlog2.pop %v1530
  %v1532 = vmul.f32 %v1531, 0.6931472
  %v1533 = vadd.f32 %v1519, %v1532
  %v1534 = vsub.f32 %v1511, %v1533
  %v1537 = vunpack.c.l.s4 1966171168
  %v1538 = vunpack.c.0.s8 %v1537
  %v1539 = vlaneseq
  %v1540 = vshrl.u32 %v1539, 7
  %v1541 = vsub.s32 %v1538, %v1540
  %v1542 = vrot.slane %v1534, %v1541
  %v1543 = vcombine.high %v1542, %v1542
  %v1545 = vunpack.c.l.s4 1966171168
  %v1546 = vunpack.c.0.s8 %v1545
  %v1547 = vlaneseq
  %v1548 = vshrl.u32 %v1547, 7
  %v1549 = vsub.s32 %v1546, %v1548
  %v1550 = vrot.slane %v1542, %v1549
  %v1552 = vunpack.c.l.s4 1966171168
  %v1553 = vunpack.c.0.s8 %v1552
  %v1554 = vlaneseq
  %v1555 = vshrl.u32 %v1554, 7
  %v1556 = vsub.s32 %v1553, %v1555
  %v1557 = vrot.slane %v1543, %v1556
  %v1558 = vlaneseq
  %v1559 = vshrl.u32 %v1558, 7
  %v1560 = vsub.s32 0, %v1559
  %v1561 = vrot.slane %v1550, %v1560
  %v1562 = vlaneseq
  %v1563 = vshrl.u32 %v1562, 7
  %v1564 = vsub.s32 0, %v1563
  %v1565 = vrot.slane %v1557, %v1564
  %1566 = vrot.lane.b32.xlu0 %v1561, 96
  %v1567 = vpop.permute.xlu0 %1566
  %1568 = vrot.lane.b32.xlu0 %v1565, 96
  %v1569 = vpop.permute.xlu0 %1568
  %vm1572 = vcmask 90112
  %1573 = vst.msk [vmem:[%s3] sm:$0x1] %vm1572, %v1567
  %1574 = vst.msk [vmem:[%s3 + $0x8] sm:$0x1] %vm1572, %v1569
  %v1575 = vlaneseq
  %v1576 = vshrl.u32 %v1575, 7
  %v1577 = vsub.s32 %v1190, %v1576
  %v1578 = vrot.slane %v1326, %v1577
  %v1579 = vlaneseq
  %v1580 = vshrl.u32 %v1579, 7
  %v1581 = vsub.s32 %v1190, %v1580
  %v1582 = vrot.slane %v1331, %v1581
  %vm1585 = vcmask 57344
  %1586 = vst.msk [vmem:[%s4] sm:$0x1] %vm1585, %v1578
  %1587 = vst.msk [vmem:[%s4 + $0x8] sm:$0x1] %vm1585, %v1582
  %v1588 = vsel %vm1516, %v1534, -inf
  %1589 = vmax.xlane.f32.xlu0 %v1588
  %v1590 = vpop.xlane.xlu0 %1589
  %vm1591 = vcmp.ge.f32.partialorder %v1534, %v1590
  %1593 = vrot.lane.b32.xlu0 %v1191, 32
  %v1594 = vpop.permute.xlu0 %1593
  %v1596 = vsel %vm1591, %v1594, 12.0
  %v1597 = vsel %vm1516, %v1596, inf
  %1598 = vmin.xlane.f32.xlu0 %v1597
  %v1599 = vpop.xlane.xlu0 %1598
  %vm1600 = vcmp.eq.f32.partialorder %v1191, %v1599
  %v1601 = vsel %vm1600, 1, 0
  %v1602 = vcvt.s32.f32 %v1601
  %v1603 = vpack.c.bf16 %v1602, %v1602
  %v1606 = vunpack.c.l.s4 1966171168
  %v1607 = vunpack.c.0.s8 %v1606
  %v1608 = vlaneseq
  %v1609 = vshrl.u32 %v1608, 7
  %v1610 = vsub.s32 %v1607, %v1609
  %v1611 = vrot.slane %v1511, %v1610
  %v1612 = vcombine.high %v1611, %v1611
  %v1614 = vunpack.c.l.s4 1966171168
  %v1615 = vunpack.c.0.s8 %v1614
  %v1616 = vlaneseq
  %v1617 = vshrl.u32 %v1616, 7
  %v1618 = vsub.s32 %v1615, %v1617
  %v1619 = vrot.slane %v1611, %v1618
  %v1621 = vunpack.c.l.s4 1966171168
  %v1622 = vunpack.c.0.s8 %v1621
  %v1623 = vlaneseq
  %v1624 = vshrl.u32 %v1623, 7
  %v1625 = vsub.s32 %v1622, %v1624
  %v1626 = vrot.slane %v1612, %v1625
  %v1627 = vlaneseq
  %v1628 = vshrl.u32 %v1627, 7
  %v1629 = vsub.s32 0, %v1628
  %v1630 = vrot.slane %v1619, %v1629
  %v1631 = vlaneseq
  %v1632 = vshrl.u32 %v1631, 7
  %v1633 = vsub.s32 0, %v1632
  %v1634 = vrot.slane %v1626, %v1633
  %v1637 = vadd.f32 %v1183, %v1630
  %v1638 = vadd.f32 %v1186, %v1634
  %v1639 = vtanh.pop %v1637
  %v1640 = vtanh.pop %v1638
  %v1641 = vmul.f32 %v1639, %v1244
  %v1642 = vmul.f32 %v1640, %v1244
  %v1643 = vsel %vm118, %v1641, 0.0
  %1644 = vadd.xlane.f32.xlu0 %v1643
  %v1645 = vpop.xlane.xlu0 %1644
  %v1646 = vsel %vm118, %v1642, 0.0
  %1647 = vadd.xlane.f32.xlu0 %v1646
  %v1648 = vpop.xlane.xlu0 %1647
  %v1651 = vlaneseq
  %v1652 = vshrl.u32 %v1651, 7
  %v1653 = vsub.s32 %v1190, %v1652
  %v1654 = vrot.slane %v1645, %v1653
  %v1655 = vlaneseq
  %v1656 = vshrl.u32 %v1655, 7
  %v1657 = vsub.s32 %v1190, %v1656
  %v1658 = vrot.slane %v1648, %v1657
  %v1659 = vsel %vm1263, %v1658, %v1654
  %v1661 = vsel %vm1266, %v1659, -inf
  %1662 = vmax.xlane.f32.xlu0 %v1661
  %v1663 = vpop.xlane.xlu0 %1662
  %v1665 = vlaneseq
  %v1666 = vshrl.u32 %v1665, 7
  %v1667 = vsub.s32 0, %v1666
  %v1668 = vrot.slane %v1663, %v1667
  %v1669 = vlaneseq
  %v1670 = vshrl.u32 %v1669, 7
  %v1671 = vsub.s32 1, %v1670
  %v1672 = vrot.slane %v1663, %v1671
  %v1675 = vsub.f32 %v1645, %v1668
  %v1676 = vsub.f32 %v1648, %v1672
  %v1677 = vmul.f32 %v1675, 1.442695
  %v1678 = vpow.pop %v1677
  %v1679 = vmul.f32 %v1676, 1.442695
  %v1680 = vpow.pop %v1679
  %1683 = vset.pattern.permute.xlu0 0
  %1684 = vperm.xlu0 %1683, %v1678
  %v1685 = vpop.permute.xlu0 %1684
  %1686 = vset.pattern.permute.xlu0 0
  %1687 = vperm.xlu0 %1686, %v1680
  %v1688 = vpop.permute.xlu0 %1687
  %v1689 = vlaneseq
  %v1690 = vshrl.u32 %v1689, 7
  %v1691 = vsub.s32 %v1190, %v1690
  %v1692 = vrot.slane %v1685, %v1691
  %v1693 = vlaneseq
  %v1694 = vshrl.u32 %v1693, 7
  %v1695 = vsub.s32 %v1190, %v1694
  %v1696 = vrot.slane %v1688, %v1695
  %v1697 = vsel %vm1263, %v1696, %v1692
  %v1699 = vsel %vm1266, %v1697, 0.0
  %1700 = vadd.xlane.f32.xlu0 %v1699
  %v1701 = vpop.xlane.xlu0 %1700
  %v1703 = vlaneseq
  %v1704 = vshrl.u32 %v1703, 7
  %v1705 = vsub.s32 0, %v1704
  %v1706 = vrot.slane %v1701, %v1705
  %v1707 = vlaneseq
  %v1708 = vshrl.u32 %v1707, 7
  %v1709 = vsub.s32 1, %v1708
  %v1710 = vrot.slane %v1701, %v1709
  %v1713 = vrcp.pop %v1706
  %v1714 = vmul.f32 %v1678, %v1713
  %v1715 = vrcp.pop %v1710
  %v1716 = vmul.f32 %v1680, %v1715
  %1718 = vset.pattern.permute.xlu0 0
  %1719 = vperm.xlu0 %1718, %v1714
  %v1720 = vpop.permute.xlu0 %1719
  %1723 = vset.pattern.permute.xlu0 0
  %1724 = vperm.xlu0 %1723, %v1716
  %v1725 = vpop.permute.xlu0 %1724
  %v1727 = vmul.f32 %v1126, %v1720
  %v1728 = vmul.f32 %v1127, %v1725
  %v1729 = vsel %vm118, %v1727, 0.0
  %v1730 = vrot.slane %v1729, 4
  %v1731 = vadd.f32 %v1729, %v1730
  %v1732 = vrot.slane %v1731, 2
  %v1733 = vadd.f32 %v1731, %v1732
  %v1734 = vrot.slane %v1733, 1
  %v1735 = vadd.f32 %v1733, %v1734
  %v1736 = vsel %vm118, %v1728, 0.0
  %v1737 = vrot.slane %v1736, 4
  %v1738 = vadd.f32 %v1736, %v1737
  %v1739 = vrot.slane %v1738, 2
  %v1740 = vadd.f32 %v1738, %v1739
  %v1741 = vrot.slane %v1740, 1
  %v1742 = vadd.f32 %v1740, %v1741
  %v1745 = vsel %vm1263, %v1742, %v1735
  %1748 = vrot.lane.b32.xlu0 %v1452, 96
  %v1749 = vpop.permute.xlu0 %1748
  %v1751 = vsel %vm118, %v1745, %v1749
  %v1752 = vpack.c.bf16 %v1751, %v1751
  %v1754 = vsel %vm1379, %v1752, 0
  %1756 = vmatprep.subr.bf16.mxu0 0
  %1757 = vmatpush1.bf16.msra.mxu0 %v1371
  %1758 = vmatprep.subr.bf16.mxu0 0
  %1759 = vmatpush1.bf16.msra.mxu0 %v1372
  %1760 = vmatprep.subr.bf16.mxu0 0
  %1761 = vmatpush1.bf16.msra.mxu0 %v1373
  %1762 = vmatprep.subr.bf16.mxu0 0
  %1763 = vmatpush1.bf16.msra.mxu0 %v1374
  %1764 = vmatprep.subr.bf16.mxu0 0
  %1765 = vmatpush1.bf16.msra.mxu0 0
  %1766 = vmatprep.subr.bf16.mxu0 0
  %1767 = vmatpush1.bf16.msra.mxu0 0
  %1768 = vmatprep.subr.bf16.mxu0 0
  %1769 = vmatpush1.bf16.msra.mxu0 0
  %1770 = vmatprep.subr.bf16.mxu0 0
  %1771 = vmatpush1.bf16.msra.mxu0 0
  %1772 = vmatprep.subr.bf16.mxu0 0
  %1773 = vmatpush1.bf16.msra.mxu0 0
  %1774 = vmatprep.subr.bf16.mxu0 0
  %1775 = vmatpush1.bf16.msra.mxu0 0
  %1776 = vmatprep.subr.bf16.mxu0 0
  %1777 = vmatpush1.bf16.msra.mxu0 0
  %1778 = vmatprep.subr.bf16.mxu0 0
  %1779 = vmatpush1.bf16.msra.mxu0 0
  %1780 = vmatprep.subr.bf16.mxu0 0
  %1781 = vmatpush1.bf16.msra.mxu0 0
  %1782 = vmatprep.subr.bf16.mxu0 0
  %1783 = vmatpush1.bf16.msra.mxu0 0
  %1784 = vmatprep.subr.bf16.mxu0 0
  %1785 = vmatpush1.bf16.msra.mxu0 0
  %1786 = vmatprep.subr.bf16.mxu0 0
  %1787 = vmatpush1.bf16.msra.mxu0 0
  %1788 = vmatprep.mubr.bf16.mxu0 0
  %1789 = vmatmul.mubr.bf16.gmra.mrb[0].mxu0 %v1754
  %v1790 = vpop.f32.mrb[0].mxu0
  %v1791 = vadd.f32 0.0, %v1790
  %v1792 = vpop.f32.mrb[0].mxu0
  %v1793 = vpop.f32.mrb[0].mxu0
  %v1794 = vpop.f32.mrb[0].mxu0
  %1795 = vdwg.mxu0
  %v1798 = vunpack.c.l.b16 %v37
  %v1799 = vunpack.c.l.b16 %v38
  %v1800 = vpack.c.b16 %v1799, %v1798
  %vm1801 = vcmask 97280
  %v1803 = vsel %vm1801, %v1603, 0
  %vm1805 = vcmask 1045504
  %v1807 = vsel %vm1805, %v1800, 0
  %1809 = vmatprep.subr.bf16.mxu0 0
  %1810 = vmatpush1.bf16.msra.mxu0 %v1807
  %1811 = vmatprep.subr.bf16.mxu0 0
  %1812 = vmatpush1.bf16.msra.mxu0 0
  %1813 = vmatprep.subr.bf16.mxu0 0
  %1814 = vmatpush1.bf16.msra.mxu0 0
  %1815 = vmatprep.subr.bf16.mxu0 0
  %1816 = vmatpush1.bf16.msra.mxu0 0
  %1817 = vmatprep.subr.bf16.mxu0 0
  %1818 = vmatpush1.bf16.msra.mxu0 0
  %1819 = vmatprep.subr.bf16.mxu0 0
  %1820 = vmatpush1.bf16.msra.mxu0 0
  %1821 = vmatprep.subr.bf16.mxu0 0
  %1822 = vmatpush1.bf16.msra.mxu0 0
  %1823 = vmatprep.subr.bf16.mxu0 0
  %1824 = vmatpush1.bf16.msra.mxu0 0
  %1825 = vmatprep.subr.bf16.mxu0 0
  %1826 = vmatpush1.bf16.msra.mxu0 0
  %1827 = vmatprep.subr.bf16.mxu0 0
  %1828 = vmatpush1.bf16.msra.mxu0 0
  %1829 = vmatprep.subr.bf16.mxu0 0
  %1830 = vmatpush1.bf16.msra.mxu0 0
  %1831 = vmatprep.subr.bf16.mxu0 0
  %1832 = vmatpush1.bf16.msra.mxu0 0
  %1833 = vmatprep.subr.bf16.mxu0 0
  %1834 = vmatpush1.bf16.msra.mxu0 0
  %1835 = vmatprep.subr.bf16.mxu0 0
  %1836 = vmatpush1.bf16.msra.mxu0 0
  %1837 = vmatprep.subr.bf16.mxu0 0
  %1838 = vmatpush1.bf16.msra.mxu0 0
  %1839 = vmatprep.subr.bf16.mxu0 0
  %1840 = vmatpush1.bf16.msra.mxu0 0
  %1841 = vmatprep.mubr.bf16.mxu0 0
  %1842 = vmatmul.mubr.bf16.gmra.mrb[0].mxu0 %v1803
  %v1843 = vpop.f32.mrb[0].mxu0
  %v1844 = vadd.f32 %v1791, %v1843
  %v1845 = vpop.f32.mrb[0].mxu0
  %v1846 = vpop.f32.mrb[0].mxu0
  %v1847 = vpop.f32.mrb[0].mxu0
  %1848 = vdwg.mxu0
  %v1849 = vadd.f32 %v1844, %v1427
  %v1850 = vxor.u32 %v1849, 2147483648
  %v1851 = vmul.f32 %v1850, 1.442695
  %v1852 = vpow.pop %v1851
  %v1853 = vadd.f32 %v1852, 1.0
  %v1854 = vrcp.pop %v1853
  %v1855 = vmul.f32 1.0, %v1854
  %v1856 = vtanh.pop %v1849
  %v1857 = vmul.f32 %v1855, %v1446
  %1859 = vrot.lane.b32.xlu0 %v1856, 32
  %v1860 = vpop.permute.xlu0 %1859
  %v1862 = vmul.f32 %v1855, %v1860
  %1864 = vrot.lane.b32.xlu0 %v1862, 32
  %v1865 = vpop.permute.xlu0 %1864
  %v1867 = vadd.f32 %v1857, %v1865
  %v1868 = vtanh.pop %v1867
  %1870 = vrot.lane.b32.xlu0 %v1868, 32
  %v1871 = vpop.permute.xlu0 %1870
  %v1873 = vmul.f32 %v1855, %v1871
  %v1874 = vpack.c.bf16 %v1873, %v1873
  %1876 = vrot.lane.b32.xlu0 %v1874, 64
  %v1877 = vpop.permute.xlu0 %1876
  %v1879 = vsel %vm118, %v1877, 0
  %1881 = vmatprep.subr.bf16.mxu0 0
  %1882 = vmatpush1.bf16.msra.mxu0 %v1469
  %1883 = vmatprep.subr.bf16.mxu0 0
  %1884 = vmatpush1.bf16.msra.mxu0 %v1470
  %1885 = vmatprep.subr.bf16.mxu0 0
  %1886 = vmatpush1.bf16.msra.mxu0 0
  %1887 = vmatprep.subr.bf16.mxu0 0
  %1888 = vmatpush1.bf16.msra.mxu0 0
  %1889 = vmatprep.subr.bf16.mxu0 0
  %1890 = vmatpush1.bf16.msra.mxu0 0
  %1891 = vmatprep.subr.bf16.mxu0 0
  %1892 = vmatpush1.bf16.msra.mxu0 0
  %1893 = vmatprep.subr.bf16.mxu0 0
  %1894 = vmatpush1.bf16.msra.mxu0 0
  %1895 = vmatprep.subr.bf16.mxu0 0
  %1896 = vmatpush1.bf16.msra.mxu0 0
  %1897 = vmatprep.subr.bf16.mxu0 0
  %1898 = vmatpush1.bf16.msra.mxu0 0
  %1899 = vmatprep.subr.bf16.mxu0 0
  %1900 = vmatpush1.bf16.msra.mxu0 0
  %1901 = vmatprep.subr.bf16.mxu0 0
  %1902 = vmatpush1.bf16.msra.mxu0 0
  %1903 = vmatprep.subr.bf16.mxu0 0
  %1904 = vmatpush1.bf16.msra.mxu0 0
  %1905 = vmatprep.subr.bf16.mxu0 0
  %1906 = vmatpush1.bf16.msra.mxu0 0
  %1907 = vmatprep.subr.bf16.mxu0 0
  %1908 = vmatpush1.bf16.msra.mxu0 0
  %1909 = vmatprep.subr.bf16.mxu0 0
  %1910 = vmatpush1.bf16.msra.mxu0 0
  %1911 = vmatprep.subr.bf16.mxu0 0
  %1912 = vmatpush1.bf16.msra.mxu0 0
  %1913 = vmatprep.mubr.bf16.mxu0 0
  %1914 = vmatmul.mubr.bf16.gmra.mrb[0].mxu0 %v1879
  %v1915 = vpop.f32.mrb[0].mxu0
  %v1916 = vadd.f32 %v1457, %v1915
  %v1917 = vpop.f32.mrb[0].mxu0
  %v1918 = vpop.f32.mrb[0].mxu0
  %v1919 = vpop.f32.mrb[0].mxu0
  %1920 = vdwg.mxu0
  %v1921 = vsel %vm1516, %v1916, -inf
  %1922 = vmax.xlane.f32.xlu0 %v1921
  %v1923 = vpop.xlane.xlu0 %1922
  %v1924 = vsub.f32 %v1916, %v1923
  %v1925 = vmul.f32 %v1924, 1.442695
  %v1926 = vpow.pop %v1925
  %1928 = vrot.lane.b32.xlu0 %v1926, 96
  %v1929 = vpop.permute.xlu0 %1928
  %v1931 = vsel %vm1527, %v1929, 0.0
  %1932 = vadd.xlane.f32.xlu0 %v1931
  %v1933 = vpop.xlane.xlu0 %1932
  %v1934 = vlog2.pop %v1933
  %v1935 = vmul.f32 %v1934, 0.6931472
  %v1936 = vadd.f32 %v1923, %v1935
  %v1937 = vsub.f32 %v1916, %v1936
  %v1940 = vunpack.c.l.s4 1966171168
  %v1941 = vunpack.c.0.s8 %v1940
  %v1942 = vlaneseq
  %v1943 = vshrl.u32 %v1942, 7
  %v1944 = vsub.s32 %v1941, %v1943
  %v1945 = vrot.slane %v1937, %v1944
  %v1946 = vcombine.high %v1945, %v1945
  %v1948 = vunpack.c.l.s4 1966171168
  %v1949 = vunpack.c.0.s8 %v1948
  %v1950 = vlaneseq
  %v1951 = vshrl.u32 %v1950, 7
  %v1952 = vsub.s32 %v1949, %v1951
  %v1953 = vrot.slane %v1945, %v1952
  %v1955 = vunpack.c.l.s4 1966171168
  %v1956 = vunpack.c.0.s8 %v1955
  %v1957 = vlaneseq
  %v1958 = vshrl.u32 %v1957, 7
  %v1959 = vsub.s32 %v1956, %v1958
  %v1960 = vrot.slane %v1946, %v1959
  %v1961 = vlaneseq
  %v1962 = vshrl.u32 %v1961, 7
  %v1963 = vsub.s32 0, %v1962
  %v1964 = vrot.slane %v1953, %v1963
  %v1965 = vlaneseq
  %v1966 = vshrl.u32 %v1965, 7
  %v1967 = vsub.s32 0, %v1966
  %v1968 = vrot.slane %v1960, %v1967
  %1969 = vrot.lane.b32.xlu0 %v1964, 96
  %v1970 = vpop.permute.xlu0 %1969
  %1971 = vrot.lane.b32.xlu0 %v1968, 96
  %v1972 = vpop.permute.xlu0 %1971
  %1975 = vst.msk [vmem:[%s3 + $0x1] sm:$0x1] %vm1572, %v1970
  %1976 = vst.msk [vmem:[%s3 + $0x9] sm:$0x1] %vm1572, %v1972
  %v1977 = vlaneseq
  %v1978 = vshrl.u32 %v1977, 7
  %v1979 = vsub.s32 %v1190, %v1978
  %v1980 = vrot.slane %v1720, %v1979
  %v1981 = vlaneseq
  %v1982 = vshrl.u32 %v1981, 7
  %v1983 = vsub.s32 %v1190, %v1982
  %v1984 = vrot.slane %v1725, %v1983
  %1987 = vst.msk [vmem:[%s4 + $0x1] sm:$0x1] %vm1585, %v1980
  %1988 = vst.msk [vmem:[%s4 + $0x9] sm:$0x1] %vm1585, %v1984
  %v1989 = vsel %vm1516, %v1937, -inf
  %1990 = vmax.xlane.f32.xlu0 %v1989
  %v1991 = vpop.xlane.xlu0 %1990
  %vm1992 = vcmp.ge.f32.partialorder %v1937, %v1991
  %v1993 = vsel %vm1992, %v1594, 12.0
  %v1994 = vsel %vm1516, %v1993, inf
  %1995 = vmin.xlane.f32.xlu0 %v1994
  %v1996 = vpop.xlane.xlu0 %1995
  %vm1997 = vcmp.eq.f32.partialorder %v1191, %v1996
  %v1998 = vsel %vm1997, 1, 0
  %v1999 = vcvt.s32.f32 %v1998
  %v2000 = vpack.c.bf16 %v1999, %v1999
  %v2003 = vunpack.c.l.s4 1966171168
  %v2004 = vunpack.c.0.s8 %v2003
  %v2005 = vlaneseq
  %v2006 = vshrl.u32 %v2005, 7
  %v2007 = vsub.s32 %v2004, %v2006
  %v2008 = vrot.slane %v1916, %v2007
  %v2009 = vcombine.high %v2008, %v2008
  %v2011 = vunpack.c.l.s4 1966171168
  %v2012 = vunpack.c.0.s8 %v2011
  %v2013 = vlaneseq
  %v2014 = vshrl.u32 %v2013, 7
  %v2015 = vsub.s32 %v2012, %v2014
  %v2016 = vrot.slane %v2008, %v2015
  %v2018 = vunpack.c.l.s4 1966171168
  %v2019 = vunpack.c.0.s8 %v2018
  %v2020 = vlaneseq
  %v2021 = vshrl.u32 %v2020, 7
  %v2022 = vsub.s32 %v2019, %v2021
  %v2023 = vrot.slane %v2009, %v2022
  %v2024 = vlaneseq
  %v2025 = vshrl.u32 %v2024, 7
  %v2026 = vsub.s32 0, %v2025
  %v2027 = vrot.slane %v2016, %v2026
  %v2028 = vlaneseq
  %v2029 = vshrl.u32 %v2028, 7
  %v2030 = vsub.s32 0, %v2029
  %v2031 = vrot.slane %v2023, %v2030
  %v2034 = vadd.f32 %v1183, %v2027
  %v2035 = vadd.f32 %v1186, %v2031
  %v2036 = vtanh.pop %v2034
  %v2037 = vtanh.pop %v2035
  %v2038 = vmul.f32 %v2036, %v1244
  %v2039 = vmul.f32 %v2037, %v1244
  %v2040 = vsel %vm118, %v2038, 0.0
  %2041 = vadd.xlane.f32.xlu0 %v2040
  %v2042 = vpop.xlane.xlu0 %2041
  %v2043 = vsel %vm118, %v2039, 0.0
  %2044 = vadd.xlane.f32.xlu0 %v2043
  %v2045 = vpop.xlane.xlu0 %2044
  %v2048 = vlaneseq
  %v2049 = vshrl.u32 %v2048, 7
  %v2050 = vsub.s32 %v1190, %v2049
  %v2051 = vrot.slane %v2042, %v2050
  %v2052 = vlaneseq
  %v2053 = vshrl.u32 %v2052, 7
  %v2054 = vsub.s32 %v1190, %v2053
  %v2055 = vrot.slane %v2045, %v2054
  %v2056 = vsel %vm1263, %v2055, %v2051
  %v2058 = vsel %vm1266, %v2056, -inf
  %2059 = vmax.xlane.f32.xlu0 %v2058
  %v2060 = vpop.xlane.xlu0 %2059
  %v2062 = vlaneseq
  %v2063 = vshrl.u32 %v2062, 7
  %v2064 = vsub.s32 0, %v2063
  %v2065 = vrot.slane %v2060, %v2064
  %v2066 = vlaneseq
  %v2067 = vshrl.u32 %v2066, 7
  %v2068 = vsub.s32 1, %v2067
  %v2069 = vrot.slane %v2060, %v2068
  %v2072 = vsub.f32 %v2042, %v2065
  %v2073 = vsub.f32 %v2045, %v2069
  %v2074 = vmul.f32 %v2072, 1.442695
  %v2075 = vpow.pop %v2074
  %v2076 = vmul.f32 %v2073, 1.442695
  %v2077 = vpow.pop %v2076
  %2080 = vset.pattern.permute.xlu0 0
  %2081 = vperm.xlu0 %2080, %v2075
  %v2082 = vpop.permute.xlu0 %2081
  %2083 = vset.pattern.permute.xlu0 0
  %2084 = vperm.xlu0 %2083, %v2077
  %v2085 = vpop.permute.xlu0 %2084
  %v2086 = vlaneseq
  %v2087 = vshrl.u32 %v2086, 7
  %v2088 = vsub.s32 %v1190, %v2087
  %v2089 = vrot.slane %v2082, %v2088
  %v2090 = vlaneseq
  %v2091 = vshrl.u32 %v2090, 7
  %v2092 = vsub.s32 %v1190, %v2091
  %v2093 = vrot.slane %v2085, %v2092
  %v2094 = vsel %vm1263, %v2093, %v2089
  %v2096 = vsel %vm1266, %v2094, 0.0
  %2097 = vadd.xlane.f32.xlu0 %v2096
  %v2098 = vpop.xlane.xlu0 %2097
  %v2100 = vlaneseq
  %v2101 = vshrl.u32 %v2100, 7
  %v2102 = vsub.s32 0, %v2101
  %v2103 = vrot.slane %v2098, %v2102
  %v2104 = vlaneseq
  %v2105 = vshrl.u32 %v2104, 7
  %v2106 = vsub.s32 1, %v2105
  %v2107 = vrot.slane %v2098, %v2106
  %v2110 = vrcp.pop %v2103
  %v2111 = vmul.f32 %v2075, %v2110
  %v2112 = vrcp.pop %v2107
  %v2113 = vmul.f32 %v2077, %v2112
  %2115 = vset.pattern.permute.xlu0 0
  %2116 = vperm.xlu0 %2115, %v2111
  %v2117 = vpop.permute.xlu0 %2116
  %2120 = vset.pattern.permute.xlu0 0
  %2121 = vperm.xlu0 %2120, %v2113
  %v2122 = vpop.permute.xlu0 %2121
  %v2124 = vmul.f32 %v1126, %v2117
  %v2125 = vmul.f32 %v1127, %v2122
  %v2126 = vsel %vm118, %v2124, 0.0
  %v2127 = vrot.slane %v2126, 4
  %v2128 = vadd.f32 %v2126, %v2127
  %v2129 = vrot.slane %v2128, 2
  %v2130 = vadd.f32 %v2128, %v2129
  %v2131 = vrot.slane %v2130, 1
  %v2132 = vadd.f32 %v2130, %v2131
  %v2133 = vsel %vm118, %v2125, 0.0
  %v2134 = vrot.slane %v2133, 4
  %v2135 = vadd.f32 %v2133, %v2134
  %v2136 = vrot.slane %v2135, 2
  %v2137 = vadd.f32 %v2135, %v2136
  %v2138 = vrot.slane %v2137, 1
  %v2139 = vadd.f32 %v2137, %v2138
  %v2142 = vsel %vm1263, %v2139, %v2132
  %2145 = vrot.lane.b32.xlu0 %v1873, 96
  %v2146 = vpop.permute.xlu0 %2145
  %v2148 = vsel %vm118, %v2142, %v2146
  %v2149 = vpack.c.bf16 %v2148, %v2148
  %v2151 = vsel %vm1379, %v2149, 0
  %2153 = vmatprep.subr.bf16.mxu0 0
  %2154 = vmatpush1.bf16.msra.mxu0 %v1371
  %2155 = vmatprep.subr.bf16.mxu0 0
  %2156 = vmatpush1.bf16.msra.mxu0 %v1372
  %2157 = vmatprep.subr.bf16.mxu0 0
  %2158 = vmatpush1.bf16.msra.mxu0 %v1373
  %2159 = vmatprep.subr.bf16.mxu0 0
  %2160 = vmatpush1.bf16.msra.mxu0 %v1374
  %2161 = vmatprep.subr.bf16.mxu0 0
  %2162 = vmatpush1.bf16.msra.mxu0 0
  %2163 = vmatprep.subr.bf16.mxu0 0
  %2164 = vmatpush1.bf16.msra.mxu0 0
  %2165 = vmatprep.subr.bf16.mxu0 0
  %2166 = vmatpush1.bf16.msra.mxu0 0
  %2167 = vmatprep.subr.bf16.mxu0 0
  %2168 = vmatpush1.bf16.msra.mxu0 0
  %2169 = vmatprep.subr.bf16.mxu0 0
  %2170 = vmatpush1.bf16.msra.mxu0 0
  %2171 = vmatprep.subr.bf16.mxu0 0
  %2172 = vmatpush1.bf16.msra.mxu0 0
  %2173 = vmatprep.subr.bf16.mxu0 0
  %2174 = vmatpush1.bf16.msra.mxu0 0
  %2175 = vmatprep.subr.bf16.mxu0 0
  %2176 = vmatpush1.bf16.msra.mxu0 0
  %2177 = vmatprep.subr.bf16.mxu0 0
  %2178 = vmatpush1.bf16.msra.mxu0 0
  %2179 = vmatprep.subr.bf16.mxu0 0
  %2180 = vmatpush1.bf16.msra.mxu0 0
  %2181 = vmatprep.subr.bf16.mxu0 0
  %2182 = vmatpush1.bf16.msra.mxu0 0
  %2183 = vmatprep.subr.bf16.mxu0 0
  %2184 = vmatpush1.bf16.msra.mxu0 0
  %2185 = vmatprep.mubr.bf16.mxu0 0
  %2186 = vmatmul.mubr.bf16.gmra.mrb[0].mxu0 %v2151
  %v2187 = vpop.f32.mrb[0].mxu0
  %v2188 = vadd.f32 0.0, %v2187
  %v2189 = vpop.f32.mrb[0].mxu0
  %v2190 = vpop.f32.mrb[0].mxu0
  %v2191 = vpop.f32.mrb[0].mxu0
  %2192 = vdwg.mxu0
  %v2194 = vsel %vm1801, %v2000, 0
  %2196 = vmatprep.subr.bf16.mxu0 0
  %2197 = vmatpush1.bf16.msra.mxu0 %v1807
  %2198 = vmatprep.subr.bf16.mxu0 0
  %2199 = vmatpush1.bf16.msra.mxu0 0
  %2200 = vmatprep.subr.bf16.mxu0 0
  %2201 = vmatpush1.bf16.msra.mxu0 0
  %2202 = vmatprep.subr.bf16.mxu0 0
  %2203 = vmatpush1.bf16.msra.mxu0 0
  %2204 = vmatprep.subr.bf16.mxu0 0
  %2205 = vmatpush1.bf16.msra.mxu0 0
  %2206 = vmatprep.subr.bf16.mxu0 0
  %2207 = vmatpush1.bf16.msra.mxu0 0
  %2208 = vmatprep.subr.bf16.mxu0 0
  %2209 = vmatpush1.bf16.msra.mxu0 0
  %2210 = vmatprep.subr.bf16.mxu0 0
  %2211 = vmatpush1.bf16.msra.mxu0 0
  %2212 = vmatprep.subr.bf16.mxu0 0
  %2213 = vmatpush1.bf16.msra.mxu0 0
  %2214 = vmatprep.subr.bf16.mxu0 0
  %2215 = vmatpush1.bf16.msra.mxu0 0
  %2216 = vmatprep.subr.bf16.mxu0 0
  %2217 = vmatpush1.bf16.msra.mxu0 0
  %2218 = vmatprep.subr.bf16.mxu0 0
  %2219 = vmatpush1.bf16.msra.mxu0 0
  %2220 = vmatprep.subr.bf16.mxu0 0
  %2221 = vmatpush1.bf16.msra.mxu0 0
  %2222 = vmatprep.subr.bf16.mxu0 0
  %2223 = vmatpush1.bf16.msra.mxu0 0
  %2224 = vmatprep.subr.bf16.mxu0 0
  %2225 = vmatpush1.bf16.msra.mxu0 0
  %2226 = vmatprep.subr.bf16.mxu0 0
  %2227 = vmatpush1.bf16.msra.mxu0 0
  %2228 = vmatprep.mubr.bf16.mxu0 0
  %2229 = vmatmul.mubr.bf16.gmra.mrb[0].mxu0 %v2194
  %v2230 = vpop.f32.mrb[0].mxu0
  %v2231 = vadd.f32 %v2188, %v2230
  %v2232 = vpop.f32.mrb[0].mxu0
  %v2233 = vpop.f32.mrb[0].mxu0
  %v2234 = vpop.f32.mrb[0].mxu0
  %2235 = vdwg.mxu0
  %v2236 = vadd.f32 %v2231, %v1427
  %v2237 = vxor.u32 %v2236, 2147483648
  %v2238 = vmul.f32 %v2237, 1.442695
  %v2239 = vpow.pop %v2238
  %v2240 = vadd.f32 %v2239, 1.0
  %v2241 = vrcp.pop %v2240
  %v2242 = vmul.f32 1.0, %v2241
  %v2243 = vtanh.pop %v2236
  %v2244 = vmul.f32 %v2242, %v1867
  %2246 = vrot.lane.b32.xlu0 %v2243, 32
  %v2247 = vpop.permute.xlu0 %2246
  %v2249 = vmul.f32 %v2242, %v2247
  %2251 = vrot.lane.b32.xlu0 %v2249, 32
  %v2252 = vpop.permute.xlu0 %2251
  %v2254 = vadd.f32 %v2244, %v2252
  %v2255 = vtanh.pop %v2254
  %2257 = vrot.lane.b32.xlu0 %v2255, 32
  %v2258 = vpop.permute.xlu0 %2257
  %v2260 = vmul.f32 %v2242, %v2258
  %v2261 = vpack.c.bf16 %v2260, %v2260
  %2263 = vrot.lane.b32.xlu0 %v2261, 64
  %v2264 = vpop.permute.xlu0 %2263
  %v2266 = vsel %vm118, %v2264, 0
  %2268 = vmatprep.subr.bf16.mxu0 0
  %2269 = vmatpush1.bf16.msra.mxu0 %v1469
  %2270 = vmatprep.subr.bf16.mxu0 0
  %2271 = vmatpush1.bf16.msra.mxu0 %v1470
  %2272 = vmatprep.subr.bf16.mxu0 0
  %2273 = vmatpush1.bf16.msra.mxu0 0
  %2274 = vmatprep.subr.bf16.mxu0 0
  %2275 = vmatpush1.bf16.msra.mxu0 0
  %2276 = vmatprep.subr.bf16.mxu0 0
  %2277 = vmatpush1.bf16.msra.mxu0 0
  %2278 = vmatprep.subr.bf16.mxu0 0
  %2279 = vmatpush1.bf16.msra.mxu0 0
  %2280 = vmatprep.subr.bf16.mxu0 0
  %2281 = vmatpush1.bf16.msra.mxu0 0
  %2282 = vmatprep.subr.bf16.mxu0 0
  %2283 = vmatpush1.bf16.msra.mxu0 0
  %2284 = vmatprep.subr.bf16.mxu0 0
  %2285 = vmatpush1.bf16.msra.mxu0 0
  %2286 = vmatprep.subr.bf16.mxu0 0
  %2287 = vmatpush1.bf16.msra.mxu0 0
  %2288 = vmatprep.subr.bf16.mxu0 0
  %2289 = vmatpush1.bf16.msra.mxu0 0
  %2290 = vmatprep.subr.bf16.mxu0 0
  %2291 = vmatpush1.bf16.msra.mxu0 0
  %2292 = vmatprep.subr.bf16.mxu0 0
  %2293 = vmatpush1.bf16.msra.mxu0 0
  %2294 = vmatprep.subr.bf16.mxu0 0
  %2295 = vmatpush1.bf16.msra.mxu0 0
  %2296 = vmatprep.subr.bf16.mxu0 0
  %2297 = vmatpush1.bf16.msra.mxu0 0
  %2298 = vmatprep.subr.bf16.mxu0 0
  %2299 = vmatpush1.bf16.msra.mxu0 0
  %2300 = vmatprep.mubr.bf16.mxu0 0
  %2301 = vmatmul.mubr.bf16.gmra.mrb[0].mxu0 %v2266
  %v2302 = vpop.f32.mrb[0].mxu0
  %v2303 = vadd.f32 %v1457, %v2302
  %v2304 = vpop.f32.mrb[0].mxu0
  %v2305 = vpop.f32.mrb[0].mxu0
  %v2306 = vpop.f32.mrb[0].mxu0
  %2307 = vdwg.mxu0
  %v2308 = vsel %vm1516, %v2303, -inf
  %2309 = vmax.xlane.f32.xlu0 %v2308
  %v2310 = vpop.xlane.xlu0 %2309
  %v2311 = vsub.f32 %v2303, %v2310
  %v2312 = vmul.f32 %v2311, 1.442695
  %v2313 = vpow.pop %v2312
  %2315 = vrot.lane.b32.xlu0 %v2313, 96
  %v2316 = vpop.permute.xlu0 %2315
  %v2318 = vsel %vm1527, %v2316, 0.0
  %2319 = vadd.xlane.f32.xlu0 %v2318
  %v2320 = vpop.xlane.xlu0 %2319
  %v2321 = vlog2.pop %v2320
  %v2322 = vmul.f32 %v2321, 0.6931472
  %v2323 = vadd.f32 %v2310, %v2322
  %v2324 = vsub.f32 %v2303, %v2323
  %v2327 = vunpack.c.l.s4 1966171168
  %v2328 = vunpack.c.0.s8 %v2327
  %v2329 = vlaneseq
  %v2330 = vshrl.u32 %v2329, 7
  %v2331 = vsub.s32 %v2328, %v2330
  %v2332 = vrot.slane %v2324, %v2331
  %v2333 = vcombine.high %v2332, %v2332
  %v2335 = vunpack.c.l.s4 1966171168
  %v2336 = vunpack.c.0.s8 %v2335
  %v2337 = vlaneseq
  %v2338 = vshrl.u32 %v2337, 7
  %v2339 = vsub.s32 %v2336, %v2338
  %v2340 = vrot.slane %v2332, %v2339
  %v2342 = vunpack.c.l.s4 1966171168
  %v2343 = vunpack.c.0.s8 %v2342
  %v2344 = vlaneseq
  %v2345 = vshrl.u32 %v2344, 7
  %v2346 = vsub.s32 %v2343, %v2345
  %v2347 = vrot.slane %v2333, %v2346
  %v2348 = vlaneseq
  %v2349 = vshrl.u32 %v2348, 7
  %v2350 = vsub.s32 0, %v2349
  %v2351 = vrot.slane %v2340, %v2350
  %v2352 = vlaneseq
  %v2353 = vshrl.u32 %v2352, 7
  %v2354 = vsub.s32 0, %v2353
  %v2355 = vrot.slane %v2347, %v2354
  %2356 = vrot.lane.b32.xlu0 %v2351, 96
  %v2357 = vpop.permute.xlu0 %2356
  %2358 = vrot.lane.b32.xlu0 %v2355, 96
  %v2359 = vpop.permute.xlu0 %2358
  %2362 = vst.msk [vmem:[%s3 + $0x2] sm:$0x1] %vm1572, %v2357
  %2363 = vst.msk [vmem:[%s3 + $0xa] sm:$0x1] %vm1572, %v2359
  %v2364 = vlaneseq
  %v2365 = vshrl.u32 %v2364, 7
  %v2366 = vsub.s32 %v1190, %v2365
  %v2367 = vrot.slane %v2117, %v2366
  %v2368 = vlaneseq
  %v2369 = vshrl.u32 %v2368, 7
  %v2370 = vsub.s32 %v1190, %v2369
  %v2371 = vrot.slane %v2122, %v2370
  %2374 = vst.msk [vmem:[%s4 + $0x2] sm:$0x1] %vm1585, %v2367
  %2375 = vst.msk [vmem:[%s4 + $0xa] sm:$0x1] %vm1585, %v2371
  %v2376 = vsel %vm1516, %v2324, -inf
  %2377 = vmax.xlane.f32.xlu0 %v2376
  %v2378 = vpop.xlane.xlu0 %2377
  %vm2379 = vcmp.ge.f32.partialorder %v2324, %v2378
  %v2380 = vsel %vm2379, %v1594, 12.0
  %v2381 = vsel %vm1516, %v2380, inf
  %2382 = vmin.xlane.f32.xlu0 %v2381
  %v2383 = vpop.xlane.xlu0 %2382
  %vm2384 = vcmp.eq.f32.partialorder %v1191, %v2383
  %v2385 = vsel %vm2384, 1, 0
  %v2386 = vcvt.s32.f32 %v2385
  %v2387 = vpack.c.bf16 %v2386, %v2386
  %v2390 = vunpack.c.l.s4 1966171168
  %v2391 = vunpack.c.0.s8 %v2390
  %v2392 = vlaneseq
  %v2393 = vshrl.u32 %v2392, 7
  %v2394 = vsub.s32 %v2391, %v2393
  %v2395 = vrot.slane %v2303, %v2394
  %v2396 = vcombine.high %v2395, %v2395
  %v2398 = vunpack.c.l.s4 1966171168
  %v2399 = vunpack.c.0.s8 %v2398
  %v2400 = vlaneseq
  %v2401 = vshrl.u32 %v2400, 7
  %v2402 = vsub.s32 %v2399, %v2401
  %v2403 = vrot.slane %v2395, %v2402
  %v2405 = vunpack.c.l.s4 1966171168
  %v2406 = vunpack.c.0.s8 %v2405
  %v2407 = vlaneseq
  %v2408 = vshrl.u32 %v2407, 7
  %v2409 = vsub.s32 %v2406, %v2408
  %v2410 = vrot.slane %v2396, %v2409
  %v2411 = vlaneseq
  %v2412 = vshrl.u32 %v2411, 7
  %v2413 = vsub.s32 0, %v2412
  %v2414 = vrot.slane %v2403, %v2413
  %v2415 = vlaneseq
  %v2416 = vshrl.u32 %v2415, 7
  %v2417 = vsub.s32 0, %v2416
  %v2418 = vrot.slane %v2410, %v2417
  %v2421 = vadd.f32 %v1183, %v2414
  %v2422 = vadd.f32 %v1186, %v2418
  %v2423 = vtanh.pop %v2421
  %v2424 = vtanh.pop %v2422
  %v2425 = vmul.f32 %v2423, %v1244
  %v2426 = vmul.f32 %v2424, %v1244
  %v2427 = vsel %vm118, %v2425, 0.0
  %2428 = vadd.xlane.f32.xlu0 %v2427
  %v2429 = vpop.xlane.xlu0 %2428
  %v2430 = vsel %vm118, %v2426, 0.0
  %2431 = vadd.xlane.f32.xlu0 %v2430
  %v2432 = vpop.xlane.xlu0 %2431
  %v2435 = vlaneseq
  %v2436 = vshrl.u32 %v2435, 7
  %v2437 = vsub.s32 %v1190, %v2436
  %v2438 = vrot.slane %v2429, %v2437
  %v2439 = vlaneseq
  %v2440 = vshrl.u32 %v2439, 7
  %v2441 = vsub.s32 %v1190, %v2440
  %v2442 = vrot.slane %v2432, %v2441
  %v2443 = vsel %vm1263, %v2442, %v2438
  %v2445 = vsel %vm1266, %v2443, -inf
  %2446 = vmax.xlane.f32.xlu0 %v2445
  %v2447 = vpop.xlane.xlu0 %2446
  %v2449 = vlaneseq
  %v2450 = vshrl.u32 %v2449, 7
  %v2451 = vsub.s32 0, %v2450
  %v2452 = vrot.slane %v2447, %v2451
  %v2453 = vlaneseq
  %v2454 = vshrl.u32 %v2453, 7
  %v2455 = vsub.s32 1, %v2454
  %v2456 = vrot.slane %v2447, %v2455
  %v2459 = vsub.f32 %v2429, %v2452
  %v2460 = vsub.f32 %v2432, %v2456
  %v2461 = vmul.f32 %v2459, 1.442695
  %v2462 = vpow.pop %v2461
  %v2463 = vmul.f32 %v2460, 1.442695
  %v2464 = vpow.pop %v2463
  %2467 = vset.pattern.permute.xlu0 0
  %2468 = vperm.xlu0 %2467, %v2462
  %v2469 = vpop.permute.xlu0 %2468
  %2470 = vset.pattern.permute.xlu0 0
  %2471 = vperm.xlu0 %2470, %v2464
  %v2472 = vpop.permute.xlu0 %2471
  %v2473 = vlaneseq
  %v2474 = vshrl.u32 %v2473, 7
  %v2475 = vsub.s32 %v1190, %v2474
  %v2476 = vrot.slane %v2469, %v2475
  %v2477 = vlaneseq
  %v2478 = vshrl.u32 %v2477, 7
  %v2479 = vsub.s32 %v1190, %v2478
  %v2480 = vrot.slane %v2472, %v2479
  %v2481 = vsel %vm1263, %v2480, %v2476
  %v2483 = vsel %vm1266, %v2481, 0.0
  %2484 = vadd.xlane.f32.xlu0 %v2483
  %v2485 = vpop.xlane.xlu0 %2484
  %v2487 = vlaneseq
  %v2488 = vshrl.u32 %v2487, 7
  %v2489 = vsub.s32 0, %v2488
  %v2490 = vrot.slane %v2485, %v2489
  %v2491 = vlaneseq
  %v2492 = vshrl.u32 %v2491, 7
  %v2493 = vsub.s32 1, %v2492
  %v2494 = vrot.slane %v2485, %v2493
  %v2497 = vrcp.pop %v2490
  %v2498 = vmul.f32 %v2462, %v2497
  %v2499 = vrcp.pop %v2494
  %v2500 = vmul.f32 %v2464, %v2499
  %2502 = vset.pattern.permute.xlu0 0
  %2503 = vperm.xlu0 %2502, %v2498
  %v2504 = vpop.permute.xlu0 %2503
  %2507 = vset.pattern.permute.xlu0 0
  %2508 = vperm.xlu0 %2507, %v2500
  %v2509 = vpop.permute.xlu0 %2508
  %v2511 = vmul.f32 %v1126, %v2504
  %v2512 = vmul.f32 %v1127, %v2509
  %v2513 = vsel %vm118, %v2511, 0.0
  %v2514 = vrot.slane %v2513, 4
  %v2515 = vadd.f32 %v2513, %v2514
  %v2516 = vrot.slane %v2515, 2
  %v2517 = vadd.f32 %v2515, %v2516
  %v2518 = vrot.slane %v2517, 1
  %v2519 = vadd.f32 %v2517, %v2518
  %v2520 = vsel %vm118, %v2512, 0.0
  %v2521 = vrot.slane %v2520, 4
  %v2522 = vadd.f32 %v2520, %v2521
  %v2523 = vrot.slane %v2522, 2
  %v2524 = vadd.f32 %v2522, %v2523
  %v2525 = vrot.slane %v2524, 1
  %v2526 = vadd.f32 %v2524, %v2525
  %v2529 = vsel %vm1263, %v2526, %v2519
  %2532 = vrot.lane.b32.xlu0 %v2260, 96
  %v2533 = vpop.permute.xlu0 %2532
  %v2535 = vsel %vm118, %v2529, %v2533
  %v2536 = vpack.c.bf16 %v2535, %v2535
  %v2538 = vsel %vm1379, %v2536, 0
  %2540 = vmatprep.subr.bf16.mxu0 0
  %2541 = vmatpush1.bf16.msra.mxu0 %v1371
  %2542 = vmatprep.subr.bf16.mxu0 0
  %2543 = vmatpush1.bf16.msra.mxu0 %v1372
  %2544 = vmatprep.subr.bf16.mxu0 0
  %2545 = vmatpush1.bf16.msra.mxu0 %v1373
  %2546 = vmatprep.subr.bf16.mxu0 0
  %2547 = vmatpush1.bf16.msra.mxu0 %v1374
  %2548 = vmatprep.subr.bf16.mxu0 0
  %2549 = vmatpush1.bf16.msra.mxu0 0
  %2550 = vmatprep.subr.bf16.mxu0 0
  %2551 = vmatpush1.bf16.msra.mxu0 0
  %2552 = vmatprep.subr.bf16.mxu0 0
  %2553 = vmatpush1.bf16.msra.mxu0 0
  %2554 = vmatprep.subr.bf16.mxu0 0
  %2555 = vmatpush1.bf16.msra.mxu0 0
  %2556 = vmatprep.subr.bf16.mxu0 0
  %2557 = vmatpush1.bf16.msra.mxu0 0
  %2558 = vmatprep.subr.bf16.mxu0 0
  %2559 = vmatpush1.bf16.msra.mxu0 0
  %2560 = vmatprep.subr.bf16.mxu0 0
  %2561 = vmatpush1.bf16.msra.mxu0 0
  %2562 = vmatprep.subr.bf16.mxu0 0
  %2563 = vmatpush1.bf16.msra.mxu0 0
  %2564 = vmatprep.subr.bf16.mxu0 0
  %2565 = vmatpush1.bf16.msra.mxu0 0
  %2566 = vmatprep.subr.bf16.mxu0 0
  %2567 = vmatpush1.bf16.msra.mxu0 0
  %2568 = vmatprep.subr.bf16.mxu0 0
  %2569 = vmatpush1.bf16.msra.mxu0 0
  %2570 = vmatprep.subr.bf16.mxu0 0
  %2571 = vmatpush1.bf16.msra.mxu0 0
  %2572 = vmatprep.mubr.bf16.mxu0 0
  %2573 = vmatmul.mubr.bf16.gmra.mrb[0].mxu0 %v2538
  %v2574 = vpop.f32.mrb[0].mxu0
  %v2575 = vadd.f32 0.0, %v2574
  %v2576 = vpop.f32.mrb[0].mxu0
  %v2577 = vpop.f32.mrb[0].mxu0
  %v2578 = vpop.f32.mrb[0].mxu0
  %2579 = vdwg.mxu0
  %v2581 = vsel %vm1801, %v2387, 0
  %2583 = vmatprep.subr.bf16.mxu0 0
  %2584 = vmatpush1.bf16.msra.mxu0 %v1807
  %2585 = vmatprep.subr.bf16.mxu0 0
  %2586 = vmatpush1.bf16.msra.mxu0 0
  %2587 = vmatprep.subr.bf16.mxu0 0
  %2588 = vmatpush1.bf16.msra.mxu0 0
  %2589 = vmatprep.subr.bf16.mxu0 0
  %2590 = vmatpush1.bf16.msra.mxu0 0
  %2591 = vmatprep.subr.bf16.mxu0 0
  %2592 = vmatpush1.bf16.msra.mxu0 0
  %2593 = vmatprep.subr.bf16.mxu0 0
  %2594 = vmatpush1.bf16.msra.mxu0 0
  %2595 = vmatprep.subr.bf16.mxu0 0
  %2596 = vmatpush1.bf16.msra.mxu0 0
  %2597 = vmatprep.subr.bf16.mxu0 0
  %2598 = vmatpush1.bf16.msra.mxu0 0
  %2599 = vmatprep.subr.bf16.mxu0 0
  %2600 = vmatpush1.bf16.msra.mxu0 0
  %2601 = vmatprep.subr.bf16.mxu0 0
  %2602 = vmatpush1.bf16.msra.mxu0 0
  %2603 = vmatprep.subr.bf16.mxu0 0
  %2604 = vmatpush1.bf16.msra.mxu0 0
  %2605 = vmatprep.subr.bf16.mxu0 0
  %2606 = vmatpush1.bf16.msra.mxu0 0
  %2607 = vmatprep.subr.bf16.mxu0 0
  %2608 = vmatpush1.bf16.msra.mxu0 0
  %2609 = vmatprep.subr.bf16.mxu0 0
  %2610 = vmatpush1.bf16.msra.mxu0 0
  %2611 = vmatprep.subr.bf16.mxu0 0
  %2612 = vmatpush1.bf16.msra.mxu0 0
  %2613 = vmatprep.subr.bf16.mxu0 0
  %2614 = vmatpush1.bf16.msra.mxu0 0
  %2615 = vmatprep.mubr.bf16.mxu0 0
  %2616 = vmatmul.mubr.bf16.gmra.mrb[0].mxu0 %v2581
  %v2617 = vpop.f32.mrb[0].mxu0
  %v2618 = vadd.f32 %v2575, %v2617
  %v2619 = vpop.f32.mrb[0].mxu0
  %v2620 = vpop.f32.mrb[0].mxu0
  %v2621 = vpop.f32.mrb[0].mxu0
  %2622 = vdwg.mxu0
  %v2623 = vadd.f32 %v2618, %v1427
  %v2624 = vxor.u32 %v2623, 2147483648
  %v2625 = vmul.f32 %v2624, 1.442695
  %v2626 = vpow.pop %v2625
  %v2627 = vadd.f32 %v2626, 1.0
  %v2628 = vrcp.pop %v2627
  %v2629 = vmul.f32 1.0, %v2628
  %v2630 = vtanh.pop %v2623
  %v2631 = vmul.f32 %v2629, %v2254
  %2633 = vrot.lane.b32.xlu0 %v2630, 32
  %v2634 = vpop.permute.xlu0 %2633
  %v2636 = vmul.f32 %v2629, %v2634
  %2638 = vrot.lane.b32.xlu0 %v2636, 32
  %v2639 = vpop.permute.xlu0 %2638
  %v2641 = vadd.f32 %v2631, %v2639
  %v2642 = vtanh.pop %v2641
  %2644 = vrot.lane.b32.xlu0 %v2642, 32
  %v2645 = vpop.permute.xlu0 %2644
  %v2647 = vmul.f32 %v2629, %v2645
  %v2648 = vpack.c.bf16 %v2647, %v2647
  %2650 = vrot.lane.b32.xlu0 %v2648, 64
  %v2651 = vpop.permute.xlu0 %2650
  %v2653 = vsel %vm118, %v2651, 0
  %2655 = vmatprep.subr.bf16.mxu0 0
  %2656 = vmatpush1.bf16.msra.mxu0 %v1469
  %2657 = vmatprep.subr.bf16.mxu0 0
  %2658 = vmatpush1.bf16.msra.mxu0 %v1470
  %2659 = vmatprep.subr.bf16.mxu0 0
  %2660 = vmatpush1.bf16.msra.mxu0 0
  %2661 = vmatprep.subr.bf16.mxu0 0
  %2662 = vmatpush1.bf16.msra.mxu0 0
  %2663 = vmatprep.subr.bf16.mxu0 0
  %2664 = vmatpush1.bf16.msra.mxu0 0
  %2665 = vmatprep.subr.bf16.mxu0 0
  %2666 = vmatpush1.bf16.msra.mxu0 0
  %2667 = vmatprep.subr.bf16.mxu0 0
  %2668 = vmatpush1.bf16.msra.mxu0 0
  %2669 = vmatprep.subr.bf16.mxu0 0
  %2670 = vmatpush1.bf16.msra.mxu0 0
  %2671 = vmatprep.subr.bf16.mxu0 0
  %2672 = vmatpush1.bf16.msra.mxu0 0
  %2673 = vmatprep.subr.bf16.mxu0 0
  %2674 = vmatpush1.bf16.msra.mxu0 0
  %2675 = vmatprep.subr.bf16.mxu0 0
  %2676 = vmatpush1.bf16.msra.mxu0 0
  %2677 = vmatprep.subr.bf16.mxu0 0
  %2678 = vmatpush1.bf16.msra.mxu0 0
  %2679 = vmatprep.subr.bf16.mxu0 0
  %2680 = vmatpush1.bf16.msra.mxu0 0
  %2681 = vmatprep.subr.bf16.mxu0 0
  %2682 = vmatpush1.bf16.msra.mxu0 0
  %2683 = vmatprep.subr.bf16.mxu0 0
  %2684 = vmatpush1.bf16.msra.mxu0 0
  %2685 = vmatprep.subr.bf16.mxu0 0
  %2686 = vmatpush1.bf16.msra.mxu0 0
  %2687 = vmatprep.mubr.bf16.mxu0 0
  %2688 = vmatmul.mubr.bf16.gmra.mrb[0].mxu0 %v2653
  %v2689 = vpop.f32.mrb[0].mxu0
  %v2690 = vadd.f32 %v1457, %v2689
  %v2691 = vpop.f32.mrb[0].mxu0
  %v2692 = vpop.f32.mrb[0].mxu0
  %v2693 = vpop.f32.mrb[0].mxu0
  %2694 = vdwg.mxu0
  %v2695 = vsel %vm1516, %v2690, -inf
  %2696 = vmax.xlane.f32.xlu0 %v2695
  %v2697 = vpop.xlane.xlu0 %2696
  %v2698 = vsub.f32 %v2690, %v2697
  %v2699 = vmul.f32 %v2698, 1.442695
  %v2700 = vpow.pop %v2699
  %2702 = vrot.lane.b32.xlu0 %v2700, 96
  %v2703 = vpop.permute.xlu0 %2702
  %v2705 = vsel %vm1527, %v2703, 0.0
  %2706 = vadd.xlane.f32.xlu0 %v2705
  %v2707 = vpop.xlane.xlu0 %2706
  %v2708 = vlog2.pop %v2707
  %v2709 = vmul.f32 %v2708, 0.6931472
  %v2710 = vadd.f32 %v2697, %v2709
  %v2711 = vsub.f32 %v2690, %v2710
  %v2714 = vunpack.c.l.s4 1966171168
  %v2715 = vunpack.c.0.s8 %v2714
  %v2716 = vlaneseq
  %v2717 = vshrl.u32 %v2716, 7
  %v2718 = vsub.s32 %v2715, %v2717
  %v2719 = vrot.slane %v2711, %v2718
  %v2720 = vcombine.high %v2719, %v2719
  %v2722 = vunpack.c.l.s4 1966171168
  %v2723 = vunpack.c.0.s8 %v2722
  %v2724 = vlaneseq
  %v2725 = vshrl.u32 %v2724, 7
  %v2726 = vsub.s32 %v2723, %v2725
  %v2727 = vrot.slane %v2719, %v2726
  %v2729 = vunpack.c.l.s4 1966171168
  %v2730 = vunpack.c.0.s8 %v2729
  %v2731 = vlaneseq
  %v2732 = vshrl.u32 %v2731, 7
  %v2733 = vsub.s32 %v2730, %v2732
  %v2734 = vrot.slane %v2720, %v2733
  %v2735 = vlaneseq
  %v2736 = vshrl.u32 %v2735, 7
  %v2737 = vsub.s32 0, %v2736
  %v2738 = vrot.slane %v2727, %v2737
  %v2739 = vlaneseq
  %v2740 = vshrl.u32 %v2739, 7
  %v2741 = vsub.s32 0, %v2740
  %v2742 = vrot.slane %v2734, %v2741
  %2743 = vrot.lane.b32.xlu0 %v2738, 96
  %v2744 = vpop.permute.xlu0 %2743
  %2745 = vrot.lane.b32.xlu0 %v2742, 96
  %v2746 = vpop.permute.xlu0 %2745
  %2749 = vst.msk [vmem:[%s3 + $0x3] sm:$0x1] %vm1572, %v2744
  %2750 = vst.msk [vmem:[%s3 + $0xb] sm:$0x1] %vm1572, %v2746
  %v2751 = vlaneseq
  %v2752 = vshrl.u32 %v2751, 7
  %v2753 = vsub.s32 %v1190, %v2752
  %v2754 = vrot.slane %v2504, %v2753
  %v2755 = vlaneseq
  %v2756 = vshrl.u32 %v2755, 7
  %v2757 = vsub.s32 %v1190, %v2756
  %v2758 = vrot.slane %v2509, %v2757
  %2761 = vst.msk [vmem:[%s4 + $0x3] sm:$0x1] %vm1585, %v2754
  %2762 = vst.msk [vmem:[%s4 + $0xb] sm:$0x1] %vm1585, %v2758
  %v2763 = vsel %vm1516, %v2711, -inf
  %2764 = vmax.xlane.f32.xlu0 %v2763
  %v2765 = vpop.xlane.xlu0 %2764
  %vm2766 = vcmp.ge.f32.partialorder %v2711, %v2765
  %v2767 = vsel %vm2766, %v1594, 12.0
  %v2768 = vsel %vm1516, %v2767, inf
  %2769 = vmin.xlane.f32.xlu0 %v2768
  %v2770 = vpop.xlane.xlu0 %2769
  %vm2771 = vcmp.eq.f32.partialorder %v1191, %v2770
  %v2772 = vsel %vm2771, 1, 0
  %v2773 = vcvt.s32.f32 %v2772
  %v2774 = vpack.c.bf16 %v2773, %v2773
  %v2777 = vunpack.c.l.s4 1966171168
  %v2778 = vunpack.c.0.s8 %v2777
  %v2779 = vlaneseq
  %v2780 = vshrl.u32 %v2779, 7
  %v2781 = vsub.s32 %v2778, %v2780
  %v2782 = vrot.slane %v2690, %v2781
  %v2783 = vcombine.high %v2782, %v2782
  %v2785 = vunpack.c.l.s4 1966171168
  %v2786 = vunpack.c.0.s8 %v2785
  %v2787 = vlaneseq
  %v2788 = vshrl.u32 %v2787, 7
  %v2789 = vsub.s32 %v2786, %v2788
  %v2790 = vrot.slane %v2782, %v2789
  %v2792 = vunpack.c.l.s4 1966171168
  %v2793 = vunpack.c.0.s8 %v2792
  %v2794 = vlaneseq
  %v2795 = vshrl.u32 %v2794, 7
  %v2796 = vsub.s32 %v2793, %v2795
  %v2797 = vrot.slane %v2783, %v2796
  %v2798 = vlaneseq
  %v2799 = vshrl.u32 %v2798, 7
  %v2800 = vsub.s32 0, %v2799
  %v2801 = vrot.slane %v2790, %v2800
  %v2802 = vlaneseq
  %v2803 = vshrl.u32 %v2802, 7
  %v2804 = vsub.s32 0, %v2803
  %v2805 = vrot.slane %v2797, %v2804
  %v2808 = vadd.f32 %v1183, %v2801
  %v2809 = vadd.f32 %v1186, %v2805
  %v2810 = vtanh.pop %v2808
  %v2811 = vtanh.pop %v2809
  %v2812 = vmul.f32 %v2810, %v1244
  %v2813 = vmul.f32 %v2811, %v1244
  %v2814 = vsel %vm118, %v2812, 0.0
  %2815 = vadd.xlane.f32.xlu0 %v2814
  %v2816 = vpop.xlane.xlu0 %2815
  %v2817 = vsel %vm118, %v2813, 0.0
  %2818 = vadd.xlane.f32.xlu0 %v2817
  %v2819 = vpop.xlane.xlu0 %2818
  %v2822 = vlaneseq
  %v2823 = vshrl.u32 %v2822, 7
  %v2824 = vsub.s32 %v1190, %v2823
  %v2825 = vrot.slane %v2816, %v2824
  %v2826 = vlaneseq
  %v2827 = vshrl.u32 %v2826, 7
  %v2828 = vsub.s32 %v1190, %v2827
  %v2829 = vrot.slane %v2819, %v2828
  %v2830 = vsel %vm1263, %v2829, %v2825
  %v2832 = vsel %vm1266, %v2830, -inf
  %2833 = vmax.xlane.f32.xlu0 %v2832
  %v2834 = vpop.xlane.xlu0 %2833
  %v2836 = vlaneseq
  %v2837 = vshrl.u32 %v2836, 7
  %v2838 = vsub.s32 0, %v2837
  %v2839 = vrot.slane %v2834, %v2838
  %v2840 = vlaneseq
  %v2841 = vshrl.u32 %v2840, 7
  %v2842 = vsub.s32 1, %v2841
  %v2843 = vrot.slane %v2834, %v2842
  %v2846 = vsub.f32 %v2816, %v2839
  %v2847 = vsub.f32 %v2819, %v2843
  %v2848 = vmul.f32 %v2846, 1.442695
  %v2849 = vpow.pop %v2848
  %v2850 = vmul.f32 %v2847, 1.442695
  %v2851 = vpow.pop %v2850
  %2854 = vset.pattern.permute.xlu0 0
  %2855 = vperm.xlu0 %2854, %v2849
  %v2856 = vpop.permute.xlu0 %2855
  %2857 = vset.pattern.permute.xlu0 0
  %2858 = vperm.xlu0 %2857, %v2851
  %v2859 = vpop.permute.xlu0 %2858
  %v2860 = vlaneseq
  %v2861 = vshrl.u32 %v2860, 7
  %v2862 = vsub.s32 %v1190, %v2861
  %v2863 = vrot.slane %v2856, %v2862
  %v2864 = vlaneseq
  %v2865 = vshrl.u32 %v2864, 7
  %v2866 = vsub.s32 %v1190, %v2865
  %v2867 = vrot.slane %v2859, %v2866
  %v2868 = vsel %vm1263, %v2867, %v2863
  %v2870 = vsel %vm1266, %v2868, 0.0
  %2871 = vadd.xlane.f32.xlu0 %v2870
  %v2872 = vpop.xlane.xlu0 %2871
  %v2874 = vlaneseq
  %v2875 = vshrl.u32 %v2874, 7
  %v2876 = vsub.s32 0, %v2875
  %v2877 = vrot.slane %v2872, %v2876
  %v2878 = vlaneseq
  %v2879 = vshrl.u32 %v2878, 7
  %v2880 = vsub.s32 1, %v2879
  %v2881 = vrot.slane %v2872, %v2880
  %v2884 = vrcp.pop %v2877
  %v2885 = vmul.f32 %v2849, %v2884
  %v2886 = vrcp.pop %v2881
  %v2887 = vmul.f32 %v2851, %v2886
  %2889 = vset.pattern.permute.xlu0 0
  %2890 = vperm.xlu0 %2889, %v2885
  %v2891 = vpop.permute.xlu0 %2890
  %2894 = vset.pattern.permute.xlu0 0
  %2895 = vperm.xlu0 %2894, %v2887
  %v2896 = vpop.permute.xlu0 %2895
  %v2898 = vmul.f32 %v1126, %v2891
  %v2899 = vmul.f32 %v1127, %v2896
  %v2900 = vsel %vm118, %v2898, 0.0
  %v2901 = vrot.slane %v2900, 4
  %v2902 = vadd.f32 %v2900, %v2901
  %v2903 = vrot.slane %v2902, 2
  %v2904 = vadd.f32 %v2902, %v2903
  %v2905 = vrot.slane %v2904, 1
  %v2906 = vadd.f32 %v2904, %v2905
  %v2907 = vsel %vm118, %v2899, 0.0
  %v2908 = vrot.slane %v2907, 4
  %v2909 = vadd.f32 %v2907, %v2908
  %v2910 = vrot.slane %v2909, 2
  %v2911 = vadd.f32 %v2909, %v2910
  %v2912 = vrot.slane %v2911, 1
  %v2913 = vadd.f32 %v2911, %v2912
  %v2916 = vsel %vm1263, %v2913, %v2906
  %2919 = vrot.lane.b32.xlu0 %v2647, 96
  %v2920 = vpop.permute.xlu0 %2919
  %v2922 = vsel %vm118, %v2916, %v2920
  %v2923 = vpack.c.bf16 %v2922, %v2922
  %v2925 = vsel %vm1379, %v2923, 0
  %2927 = vmatprep.subr.bf16.mxu0 0
  %2928 = vmatpush1.bf16.msra.mxu0 %v1371
  %2929 = vmatprep.subr.bf16.mxu0 0
  %2930 = vmatpush1.bf16.msra.mxu0 %v1372
  %2931 = vmatprep.subr.bf16.mxu0 0
  %2932 = vmatpush1.bf16.msra.mxu0 %v1373
  %2933 = vmatprep.subr.bf16.mxu0 0
  %2934 = vmatpush1.bf16.msra.mxu0 %v1374
  %2935 = vmatprep.subr.bf16.mxu0 0
  %2936 = vmatpush1.bf16.msra.mxu0 0
  %2937 = vmatprep.subr.bf16.mxu0 0
  %2938 = vmatpush1.bf16.msra.mxu0 0
  %2939 = vmatprep.subr.bf16.mxu0 0
  %2940 = vmatpush1.bf16.msra.mxu0 0
  %2941 = vmatprep.subr.bf16.mxu0 0
  %2942 = vmatpush1.bf16.msra.mxu0 0
  %2943 = vmatprep.subr.bf16.mxu0 0
  %2944 = vmatpush1.bf16.msra.mxu0 0
  %2945 = vmatprep.subr.bf16.mxu0 0
  %2946 = vmatpush1.bf16.msra.mxu0 0
  %2947 = vmatprep.subr.bf16.mxu0 0
  %2948 = vmatpush1.bf16.msra.mxu0 0
  %2949 = vmatprep.subr.bf16.mxu0 0
  %2950 = vmatpush1.bf16.msra.mxu0 0
  %2951 = vmatprep.subr.bf16.mxu0 0
  %2952 = vmatpush1.bf16.msra.mxu0 0
  %2953 = vmatprep.subr.bf16.mxu0 0
  %2954 = vmatpush1.bf16.msra.mxu0 0
  %2955 = vmatprep.subr.bf16.mxu0 0
  %2956 = vmatpush1.bf16.msra.mxu0 0
  %2957 = vmatprep.subr.bf16.mxu0 0
  %2958 = vmatpush1.bf16.msra.mxu0 0
  %2959 = vmatprep.mubr.bf16.mxu0 0
  %2960 = vmatmul.mubr.bf16.gmra.mrb[0].mxu0 %v2925
  %v2961 = vpop.f32.mrb[0].mxu0
  %v2962 = vadd.f32 0.0, %v2961
  %v2963 = vpop.f32.mrb[0].mxu0
  %v2964 = vpop.f32.mrb[0].mxu0
  %v2965 = vpop.f32.mrb[0].mxu0
  %2966 = vdwg.mxu0
  %v2968 = vsel %vm1801, %v2774, 0
  %2970 = vmatprep.subr.bf16.mxu0 0
  %2971 = vmatpush1.bf16.msra.mxu0 %v1807
  %2972 = vmatprep.subr.bf16.mxu0 0
  %2973 = vmatpush1.bf16.msra.mxu0 0
  %2974 = vmatprep.subr.bf16.mxu0 0
  %2975 = vmatpush1.bf16.msra.mxu0 0
  %2976 = vmatprep.subr.bf16.mxu0 0
  %2977 = vmatpush1.bf16.msra.mxu0 0
  %2978 = vmatprep.subr.bf16.mxu0 0
  %2979 = vmatpush1.bf16.msra.mxu0 0
  %2980 = vmatprep.subr.bf16.mxu0 0
  %2981 = vmatpush1.bf16.msra.mxu0 0
  %2982 = vmatprep.subr.bf16.mxu0 0
  %2983 = vmatpush1.bf16.msra.mxu0 0
  %2984 = vmatprep.subr.bf16.mxu0 0
  %2985 = vmatpush1.bf16.msra.mxu0 0
  %2986 = vmatprep.subr.bf16.mxu0 0
  %2987 = vmatpush1.bf16.msra.mxu0 0
  %2988 = vmatprep.subr.bf16.mxu0 0
  %2989 = vmatpush1.bf16.msra.mxu0 0
  %2990 = vmatprep.subr.bf16.mxu0 0
  %2991 = vmatpush1.bf16.msra.mxu0 0
  %2992 = vmatprep.subr.bf16.mxu0 0
  %2993 = vmatpush1.bf16.msra.mxu0 0
  %2994 = vmatprep.subr.bf16.mxu0 0
  %2995 = vmatpush1.bf16.msra.mxu0 0
  %2996 = vmatprep.subr.bf16.mxu0 0
  %2997 = vmatpush1.bf16.msra.mxu0 0
  %2998 = vmatprep.subr.bf16.mxu0 0
  %2999 = vmatpush1.bf16.msra.mxu0 0
  %3000 = vmatprep.subr.bf16.mxu0 0
  %3001 = vmatpush1.bf16.msra.mxu0 0
  %3002 = vmatprep.mubr.bf16.mxu0 0
  %3003 = vmatmul.mubr.bf16.gmra.mrb[0].mxu0 %v2968
  %v3004 = vpop.f32.mrb[0].mxu0
  %v3005 = vadd.f32 %v2962, %v3004
  %v3006 = vpop.f32.mrb[0].mxu0
  %v3007 = vpop.f32.mrb[0].mxu0
  %v3008 = vpop.f32.mrb[0].mxu0
  %3009 = vdwg.mxu0
  %v3010 = vadd.f32 %v3005, %v1427
  %v3011 = vxor.u32 %v3010, 2147483648
  %v3012 = vmul.f32 %v3011, 1.442695
  %v3013 = vpow.pop %v3012
  %v3014 = vadd.f32 %v3013, 1.0
  %v3015 = vrcp.pop %v3014
  %v3016 = vmul.f32 1.0, %v3015
  %v3017 = vtanh.pop %v3010
  %v3018 = vmul.f32 %v3016, %v2641
  %3020 = vrot.lane.b32.xlu0 %v3017, 32
  %v3021 = vpop.permute.xlu0 %3020
  %v3023 = vmul.f32 %v3016, %v3021
  %3025 = vrot.lane.b32.xlu0 %v3023, 32
  %v3026 = vpop.permute.xlu0 %3025
  %v3028 = vadd.f32 %v3018, %v3026
  %v3029 = vtanh.pop %v3028
  %3031 = vrot.lane.b32.xlu0 %v3029, 32
  %v3032 = vpop.permute.xlu0 %3031
  %v3034 = vmul.f32 %v3016, %v3032
  %v3035 = vpack.c.bf16 %v3034, %v3034
  %3037 = vrot.lane.b32.xlu0 %v3035, 64
  %v3038 = vpop.permute.xlu0 %3037
  %v3040 = vsel %vm118, %v3038, 0
  %3042 = vmatprep.subr.bf16.mxu0 0
  %3043 = vmatpush1.bf16.msra.mxu0 %v1469
  %3044 = vmatprep.subr.bf16.mxu0 0
  %3045 = vmatpush1.bf16.msra.mxu0 %v1470
  %3046 = vmatprep.subr.bf16.mxu0 0
  %3047 = vmatpush1.bf16.msra.mxu0 0
  %3048 = vmatprep.subr.bf16.mxu0 0
  %3049 = vmatpush1.bf16.msra.mxu0 0
  %3050 = vmatprep.subr.bf16.mxu0 0
  %3051 = vmatpush1.bf16.msra.mxu0 0
  %3052 = vmatprep.subr.bf16.mxu0 0
  %3053 = vmatpush1.bf16.msra.mxu0 0
  %3054 = vmatprep.subr.bf16.mxu0 0
  %3055 = vmatpush1.bf16.msra.mxu0 0
  %3056 = vmatprep.subr.bf16.mxu0 0
  %3057 = vmatpush1.bf16.msra.mxu0 0
  %3058 = vmatprep.subr.bf16.mxu0 0
  %3059 = vmatpush1.bf16.msra.mxu0 0
  %3060 = vmatprep.subr.bf16.mxu0 0
  %3061 = vmatpush1.bf16.msra.mxu0 0
  %3062 = vmatprep.subr.bf16.mxu0 0
  %3063 = vmatpush1.bf16.msra.mxu0 0
  %3064 = vmatprep.subr.bf16.mxu0 0
  %3065 = vmatpush1.bf16.msra.mxu0 0
  %3066 = vmatprep.subr.bf16.mxu0 0
  %3067 = vmatpush1.bf16.msra.mxu0 0
  %3068 = vmatprep.subr.bf16.mxu0 0
  %3069 = vmatpush1.bf16.msra.mxu0 0
  %3070 = vmatprep.subr.bf16.mxu0 0
  %3071 = vmatpush1.bf16.msra.mxu0 0
  %3072 = vmatprep.subr.bf16.mxu0 0
  %3073 = vmatpush1.bf16.msra.mxu0 0
  %3074 = vmatprep.mubr.bf16.mxu0 0
  %3075 = vmatmul.mubr.bf16.gmra.mrb[0].mxu0 %v3040
  %v3076 = vpop.f32.mrb[0].mxu0
  %v3077 = vadd.f32 %v1457, %v3076
  %v3078 = vpop.f32.mrb[0].mxu0
  %v3079 = vpop.f32.mrb[0].mxu0
  %v3080 = vpop.f32.mrb[0].mxu0
  %3081 = vdwg.mxu0
  %v3082 = vsel %vm1516, %v3077, -inf
  %3083 = vmax.xlane.f32.xlu0 %v3082
  %v3084 = vpop.xlane.xlu0 %3083
  %v3085 = vsub.f32 %v3077, %v3084
  %v3086 = vmul.f32 %v3085, 1.442695
  %v3087 = vpow.pop %v3086
  %3089 = vrot.lane.b32.xlu0 %v3087, 96
  %v3090 = vpop.permute.xlu0 %3089
  %v3092 = vsel %vm1527, %v3090, 0.0
  %3093 = vadd.xlane.f32.xlu0 %v3092
  %v3094 = vpop.xlane.xlu0 %3093
  %v3095 = vlog2.pop %v3094
  %v3096 = vmul.f32 %v3095, 0.6931472
  %v3097 = vadd.f32 %v3084, %v3096
  %v3098 = vsub.f32 %v3077, %v3097
  %v3101 = vunpack.c.l.s4 1966171168
  %v3102 = vunpack.c.0.s8 %v3101
  %v3103 = vlaneseq
  %v3104 = vshrl.u32 %v3103, 7
  %v3105 = vsub.s32 %v3102, %v3104
  %v3106 = vrot.slane %v3098, %v3105
  %v3107 = vcombine.high %v3106, %v3106
  %v3109 = vunpack.c.l.s4 1966171168
  %v3110 = vunpack.c.0.s8 %v3109
  %v3111 = vlaneseq
  %v3112 = vshrl.u32 %v3111, 7
  %v3113 = vsub.s32 %v3110, %v3112
  %v3114 = vrot.slane %v3106, %v3113
  %v3116 = vunpack.c.l.s4 1966171168
  %v3117 = vunpack.c.0.s8 %v3116
  %v3118 = vlaneseq
  %v3119 = vshrl.u32 %v3118, 7
  %v3120 = vsub.s32 %v3117, %v3119
  %v3121 = vrot.slane %v3107, %v3120
  %v3122 = vlaneseq
  %v3123 = vshrl.u32 %v3122, 7
  %v3124 = vsub.s32 0, %v3123
  %v3125 = vrot.slane %v3114, %v3124
  %v3126 = vlaneseq
  %v3127 = vshrl.u32 %v3126, 7
  %v3128 = vsub.s32 0, %v3127
  %v3129 = vrot.slane %v3121, %v3128
  %3130 = vrot.lane.b32.xlu0 %v3125, 96
  %v3131 = vpop.permute.xlu0 %3130
  %3132 = vrot.lane.b32.xlu0 %v3129, 96
  %v3133 = vpop.permute.xlu0 %3132
  %3136 = vst.msk [vmem:[%s3 + $0x4] sm:$0x1] %vm1572, %v3131
  %3137 = vst.msk [vmem:[%s3 + $0xc] sm:$0x1] %vm1572, %v3133
  %v3138 = vlaneseq
  %v3139 = vshrl.u32 %v3138, 7
  %v3140 = vsub.s32 %v1190, %v3139
  %v3141 = vrot.slane %v2891, %v3140
  %v3142 = vlaneseq
  %v3143 = vshrl.u32 %v3142, 7
  %v3144 = vsub.s32 %v1190, %v3143
  %v3145 = vrot.slane %v2896, %v3144
  %3148 = vst.msk [vmem:[%s4 + $0x4] sm:$0x1] %vm1585, %v3141
  %3149 = vst.msk [vmem:[%s4 + $0xc] sm:$0x1] %vm1585, %v3145
  %v3150 = vsel %vm1516, %v3098, -inf
  %3151 = vmax.xlane.f32.xlu0 %v3150
  %v3152 = vpop.xlane.xlu0 %3151
  %vm3153 = vcmp.ge.f32.partialorder %v3098, %v3152
  %v3154 = vsel %vm3153, %v1594, 12.0
  %v3155 = vsel %vm1516, %v3154, inf
  %3156 = vmin.xlane.f32.xlu0 %v3155
  %v3157 = vpop.xlane.xlu0 %3156
  %vm3158 = vcmp.eq.f32.partialorder %v1191, %v3157
  %v3159 = vsel %vm3158, 1, 0
  %v3160 = vcvt.s32.f32 %v3159
  %v3161 = vpack.c.bf16 %v3160, %v3160
  %v3164 = vunpack.c.l.s4 1966171168
  %v3165 = vunpack.c.0.s8 %v3164
  %v3166 = vlaneseq
  %v3167 = vshrl.u32 %v3166, 7
  %v3168 = vsub.s32 %v3165, %v3167
  %v3169 = vrot.slane %v3077, %v3168
  %v3170 = vcombine.high %v3169, %v3169
  %v3172 = vunpack.c.l.s4 1966171168
  %v3173 = vunpack.c.0.s8 %v3172
  %v3174 = vlaneseq
  %v3175 = vshrl.u32 %v3174, 7
  %v3176 = vsub.s32 %v3173, %v3175
  %v3177 = vrot.slane %v3169, %v3176
  %v3179 = vunpack.c.l.s4 1966171168
  %v3180 = vunpack.c.0.s8 %v3179
  %v3181 = vlaneseq
  %v3182 = vshrl.u32 %v3181, 7
  %v3183 = vsub.s32 %v3180, %v3182
  %v3184 = vrot.slane %v3170, %v3183
  %v3185 = vlaneseq
  %v3186 = vshrl.u32 %v3185, 7
  %v3187 = vsub.s32 0, %v3186
  %v3188 = vrot.slane %v3177, %v3187
  %v3189 = vlaneseq
  %v3190 = vshrl.u32 %v3189, 7
  %v3191 = vsub.s32 0, %v3190
  %v3192 = vrot.slane %v3184, %v3191
  %v3195 = vadd.f32 %v1183, %v3188
  %v3196 = vadd.f32 %v1186, %v3192
  %v3197 = vtanh.pop %v3195
  %v3198 = vtanh.pop %v3196
  %v3199 = vmul.f32 %v3197, %v1244
  %v3200 = vmul.f32 %v3198, %v1244
  %v3201 = vsel %vm118, %v3199, 0.0
  %3202 = vadd.xlane.f32.xlu0 %v3201
  %v3203 = vpop.xlane.xlu0 %3202
  %v3204 = vsel %vm118, %v3200, 0.0
  %3205 = vadd.xlane.f32.xlu0 %v3204
  %v3206 = vpop.xlane.xlu0 %3205
  %v3209 = vlaneseq
  %v3210 = vshrl.u32 %v3209, 7
  %v3211 = vsub.s32 %v1190, %v3210
  %v3212 = vrot.slane %v3203, %v3211
  %v3213 = vlaneseq
  %v3214 = vshrl.u32 %v3213, 7
  %v3215 = vsub.s32 %v1190, %v3214
  %v3216 = vrot.slane %v3206, %v3215
  %v3217 = vsel %vm1263, %v3216, %v3212
  %v3219 = vsel %vm1266, %v3217, -inf
  %3220 = vmax.xlane.f32.xlu0 %v3219
  %v3221 = vpop.xlane.xlu0 %3220
  %v3223 = vlaneseq
  %v3224 = vshrl.u32 %v3223, 7
  %v3225 = vsub.s32 0, %v3224
  %v3226 = vrot.slane %v3221, %v3225
  %v3227 = vlaneseq
  %v3228 = vshrl.u32 %v3227, 7
  %v3229 = vsub.s32 1, %v3228
  %v3230 = vrot.slane %v3221, %v3229
  %v3233 = vsub.f32 %v3203, %v3226
  %v3234 = vsub.f32 %v3206, %v3230
  %v3235 = vmul.f32 %v3233, 1.442695
  %v3236 = vpow.pop %v3235
  %v3237 = vmul.f32 %v3234, 1.442695
  %v3238 = vpow.pop %v3237
  %3241 = vset.pattern.permute.xlu0 0
  %3242 = vperm.xlu0 %3241, %v3236
  %v3243 = vpop.permute.xlu0 %3242
  %3244 = vset.pattern.permute.xlu0 0
  %3245 = vperm.xlu0 %3244, %v3238
  %v3246 = vpop.permute.xlu0 %3245
  %v3247 = vlaneseq
  %v3248 = vshrl.u32 %v3247, 7
  %v3249 = vsub.s32 %v1190, %v3248
  %v3250 = vrot.slane %v3243, %v3249
  %v3251 = vlaneseq
  %v3252 = vshrl.u32 %v3251, 7
  %v3253 = vsub.s32 %v1190, %v3252
  %v3254 = vrot.slane %v3246, %v3253
  %v3255 = vsel %vm1263, %v3254, %v3250
  %v3257 = vsel %vm1266, %v3255, 0.0
  %3258 = vadd.xlane.f32.xlu0 %v3257
  %v3259 = vpop.xlane.xlu0 %3258
  %v3261 = vlaneseq
  %v3262 = vshrl.u32 %v3261, 7
  %v3263 = vsub.s32 0, %v3262
  %v3264 = vrot.slane %v3259, %v3263
  %v3265 = vlaneseq
  %v3266 = vshrl.u32 %v3265, 7
  %v3267 = vsub.s32 1, %v3266
  %v3268 = vrot.slane %v3259, %v3267
  %v3271 = vrcp.pop %v3264
  %v3272 = vmul.f32 %v3236, %v3271
  %v3273 = vrcp.pop %v3268
  %v3274 = vmul.f32 %v3238, %v3273
  %3276 = vset.pattern.permute.xlu0 0
  %3277 = vperm.xlu0 %3276, %v3272
  %v3278 = vpop.permute.xlu0 %3277
  %3281 = vset.pattern.permute.xlu0 0
  %3282 = vperm.xlu0 %3281, %v3274
  %v3283 = vpop.permute.xlu0 %3282
  %v3285 = vmul.f32 %v1126, %v3278
  %v3286 = vmul.f32 %v1127, %v3283
  %v3287 = vsel %vm118, %v3285, 0.0
  %v3288 = vrot.slane %v3287, 4
  %v3289 = vadd.f32 %v3287, %v3288
  %v3290 = vrot.slane %v3289, 2
  %v3291 = vadd.f32 %v3289, %v3290
  %v3292 = vrot.slane %v3291, 1
  %v3293 = vadd.f32 %v3291, %v3292
  %v3294 = vsel %vm118, %v3286, 0.0
  %v3295 = vrot.slane %v3294, 4
  %v3296 = vadd.f32 %v3294, %v3295
  %v3297 = vrot.slane %v3296, 2
  %v3298 = vadd.f32 %v3296, %v3297
  %v3299 = vrot.slane %v3298, 1
  %v3300 = vadd.f32 %v3298, %v3299
  %v3303 = vsel %vm1263, %v3300, %v3293
  %3306 = vrot.lane.b32.xlu0 %v3034, 96
  %v3307 = vpop.permute.xlu0 %3306
  %v3309 = vsel %vm118, %v3303, %v3307
  %v3310 = vpack.c.bf16 %v3309, %v3309
  %v3312 = vsel %vm1379, %v3310, 0
  %3314 = vmatprep.subr.bf16.mxu0 0
  %3315 = vmatpush1.bf16.msra.mxu0 %v1371
  %3316 = vmatprep.subr.bf16.mxu0 0
  %3317 = vmatpush1.bf16.msra.mxu0 %v1372
  %3318 = vmatprep.subr.bf16.mxu0 0
  %3319 = vmatpush1.bf16.msra.mxu0 %v1373
  %3320 = vmatprep.subr.bf16.mxu0 0
  %3321 = vmatpush1.bf16.msra.mxu0 %v1374
  %3322 = vmatprep.subr.bf16.mxu0 0
  %3323 = vmatpush1.bf16.msra.mxu0 0
  %3324 = vmatprep.subr.bf16.mxu0 0
  %3325 = vmatpush1.bf16.msra.mxu0 0
  %3326 = vmatprep.subr.bf16.mxu0 0
  %3327 = vmatpush1.bf16.msra.mxu0 0
  %3328 = vmatprep.subr.bf16.mxu0 0
  %3329 = vmatpush1.bf16.msra.mxu0 0
  %3330 = vmatprep.subr.bf16.mxu0 0
  %3331 = vmatpush1.bf16.msra.mxu0 0
  %3332 = vmatprep.subr.bf16.mxu0 0
  %3333 = vmatpush1.bf16.msra.mxu0 0
  %3334 = vmatprep.subr.bf16.mxu0 0
  %3335 = vmatpush1.bf16.msra.mxu0 0
  %3336 = vmatprep.subr.bf16.mxu0 0
  %3337 = vmatpush1.bf16.msra.mxu0 0
  %3338 = vmatprep.subr.bf16.mxu0 0
  %3339 = vmatpush1.bf16.msra.mxu0 0
  %3340 = vmatprep.subr.bf16.mxu0 0
  %3341 = vmatpush1.bf16.msra.mxu0 0
  %3342 = vmatprep.subr.bf16.mxu0 0
  %3343 = vmatpush1.bf16.msra.mxu0 0
  %3344 = vmatprep.subr.bf16.mxu0 0
  %3345 = vmatpush1.bf16.msra.mxu0 0
  %3346 = vmatprep.mubr.bf16.mxu0 0
  %3347 = vmatmul.mubr.bf16.gmra.mrb[0].mxu0 %v3312
  %v3348 = vpop.f32.mrb[0].mxu0
  %v3349 = vadd.f32 0.0, %v3348
  %v3350 = vpop.f32.mrb[0].mxu0
  %v3351 = vpop.f32.mrb[0].mxu0
  %v3352 = vpop.f32.mrb[0].mxu0
  %3353 = vdwg.mxu0
  %v3355 = vsel %vm1801, %v3161, 0
  %3357 = vmatprep.subr.bf16.mxu0 0
  %3358 = vmatpush1.bf16.msra.mxu0 %v1807
  %3359 = vmatprep.subr.bf16.mxu0 0
  %3360 = vmatpush1.bf16.msra.mxu0 0
  %3361 = vmatprep.subr.bf16.mxu0 0
  %3362 = vmatpush1.bf16.msra.mxu0 0
  %3363 = vmatprep.subr.bf16.mxu0 0
  %3364 = vmatpush1.bf16.msra.mxu0 0
  %3365 = vmatprep.subr.bf16.mxu0 0
  %3366 = vmatpush1.bf16.msra.mxu0 0
  %3367 = vmatprep.subr.bf16.mxu0 0
  %3368 = vmatpush1.bf16.msra.mxu0 0
  %3369 = vmatprep.subr.bf16.mxu0 0
  %3370 = vmatpush1.bf16.msra.mxu0 0
  %3371 = vmatprep.subr.bf16.mxu0 0
  %3372 = vmatpush1.bf16.msra.mxu0 0
  %3373 = vmatprep.subr.bf16.mxu0 0
  %3374 = vmatpush1.bf16.msra.mxu0 0
  %3375 = vmatprep.subr.bf16.mxu0 0
  %3376 = vmatpush1.bf16.msra.mxu0 0
  %3377 = vmatprep.subr.bf16.mxu0 0
  %3378 = vmatpush1.bf16.msra.mxu0 0
  %3379 = vmatprep.subr.bf16.mxu0 0
  %3380 = vmatpush1.bf16.msra.mxu0 0
  %3381 = vmatprep.subr.bf16.mxu0 0
  %3382 = vmatpush1.bf16.msra.mxu0 0
  %3383 = vmatprep.subr.bf16.mxu0 0
  %3384 = vmatpush1.bf16.msra.mxu0 0
  %3385 = vmatprep.subr.bf16.mxu0 0
  %3386 = vmatpush1.bf16.msra.mxu0 0
  %3387 = vmatprep.subr.bf16.mxu0 0
  %3388 = vmatpush1.bf16.msra.mxu0 0
  %3389 = vmatprep.mubr.bf16.mxu0 0
  %3390 = vmatmul.mubr.bf16.gmra.mrb[0].mxu0 %v3355
  %v3391 = vpop.f32.mrb[0].mxu0
  %v3392 = vadd.f32 %v3349, %v3391
  %v3393 = vpop.f32.mrb[0].mxu0
  %v3394 = vpop.f32.mrb[0].mxu0
  %v3395 = vpop.f32.mrb[0].mxu0
  %3396 = vdwg.mxu0
  %v3397 = vadd.f32 %v3392, %v1427
  %v3398 = vxor.u32 %v3397, 2147483648
  %v3399 = vmul.f32 %v3398, 1.442695
  %v3400 = vpow.pop %v3399
  %v3401 = vadd.f32 %v3400, 1.0
  %v3402 = vrcp.pop %v3401
  %v3403 = vmul.f32 1.0, %v3402
  %v3404 = vtanh.pop %v3397
  %v3405 = vmul.f32 %v3403, %v3028
  %3407 = vrot.lane.b32.xlu0 %v3404, 32
  %v3408 = vpop.permute.xlu0 %3407
  %v3410 = vmul.f32 %v3403, %v3408
  %3412 = vrot.lane.b32.xlu0 %v3410, 32
  %v3413 = vpop.permute.xlu0 %3412
  %v3415 = vadd.f32 %v3405, %v3413
  %v3416 = vtanh.pop %v3415
  %3418 = vrot.lane.b32.xlu0 %v3416, 32
  %v3419 = vpop.permute.xlu0 %3418
  %v3421 = vmul.f32 %v3403, %v3419
  %v3422 = vpack.c.bf16 %v3421, %v3421
  %3424 = vrot.lane.b32.xlu0 %v3422, 64
  %v3425 = vpop.permute.xlu0 %3424
  %v3427 = vsel %vm118, %v3425, 0
  %3429 = vmatprep.subr.bf16.mxu0 0
  %3430 = vmatpush1.bf16.msra.mxu0 %v1469
  %3431 = vmatprep.subr.bf16.mxu0 0
  %3432 = vmatpush1.bf16.msra.mxu0 %v1470
  %3433 = vmatprep.subr.bf16.mxu0 0
  %3434 = vmatpush1.bf16.msra.mxu0 0
  %3435 = vmatprep.subr.bf16.mxu0 0
  %3436 = vmatpush1.bf16.msra.mxu0 0
  %3437 = vmatprep.subr.bf16.mxu0 0
  %3438 = vmatpush1.bf16.msra.mxu0 0
  %3439 = vmatprep.subr.bf16.mxu0 0
  %3440 = vmatpush1.bf16.msra.mxu0 0
  %3441 = vmatprep.subr.bf16.mxu0 0
  %3442 = vmatpush1.bf16.msra.mxu0 0
  %3443 = vmatprep.subr.bf16.mxu0 0
  %3444 = vmatpush1.bf16.msra.mxu0 0
  %3445 = vmatprep.subr.bf16.mxu0 0
  %3446 = vmatpush1.bf16.msra.mxu0 0
  %3447 = vmatprep.subr.bf16.mxu0 0
  %3448 = vmatpush1.bf16.msra.mxu0 0
  %3449 = vmatprep.subr.bf16.mxu0 0
  %3450 = vmatpush1.bf16.msra.mxu0 0
  %3451 = vmatprep.subr.bf16.mxu0 0
  %3452 = vmatpush1.bf16.msra.mxu0 0
  %3453 = vmatprep.subr.bf16.mxu0 0
  %3454 = vmatpush1.bf16.msra.mxu0 0
  %3455 = vmatprep.subr.bf16.mxu0 0
  %3456 = vmatpush1.bf16.msra.mxu0 0
  %3457 = vmatprep.subr.bf16.mxu0 0
  %3458 = vmatpush1.bf16.msra.mxu0 0
  %3459 = vmatprep.subr.bf16.mxu0 0
  %3460 = vmatpush1.bf16.msra.mxu0 0
  %3461 = vmatprep.mubr.bf16.mxu0 0
  %3462 = vmatmul.mubr.bf16.gmra.mrb[0].mxu0 %v3427
  %v3463 = vpop.f32.mrb[0].mxu0
  %v3464 = vadd.f32 %v1457, %v3463
  %v3465 = vpop.f32.mrb[0].mxu0
  %v3466 = vpop.f32.mrb[0].mxu0
  %v3467 = vpop.f32.mrb[0].mxu0
  %3468 = vdwg.mxu0
  %v3469 = vsel %vm1516, %v3464, -inf
  %3470 = vmax.xlane.f32.xlu0 %v3469
  %v3471 = vpop.xlane.xlu0 %3470
  %v3472 = vsub.f32 %v3464, %v3471
  %v3473 = vmul.f32 %v3472, 1.442695
  %v3474 = vpow.pop %v3473
  %3476 = vrot.lane.b32.xlu0 %v3474, 96
  %v3477 = vpop.permute.xlu0 %3476
  %v3479 = vsel %vm1527, %v3477, 0.0
  %3480 = vadd.xlane.f32.xlu0 %v3479
  %v3481 = vpop.xlane.xlu0 %3480
  %v3482 = vlog2.pop %v3481
  %v3483 = vmul.f32 %v3482, 0.6931472
  %v3484 = vadd.f32 %v3471, %v3483
  %v3485 = vsub.f32 %v3464, %v3484
  %v3488 = vunpack.c.l.s4 1966171168
  %v3489 = vunpack.c.0.s8 %v3488
  %v3490 = vlaneseq
  %v3491 = vshrl.u32 %v3490, 7
  %v3492 = vsub.s32 %v3489, %v3491
  %v3493 = vrot.slane %v3485, %v3492
  %v3494 = vcombine.high %v3493, %v3493
  %v3496 = vunpack.c.l.s4 1966171168
  %v3497 = vunpack.c.0.s8 %v3496
  %v3498 = vlaneseq
  %v3499 = vshrl.u32 %v3498, 7
  %v3500 = vsub.s32 %v3497, %v3499
  %v3501 = vrot.slane %v3493, %v3500
  %v3503 = vunpack.c.l.s4 1966171168
  %v3504 = vunpack.c.0.s8 %v3503
  %v3505 = vlaneseq
  %v3506 = vshrl.u32 %v3505, 7
  %v3507 = vsub.s32 %v3504, %v3506
  %v3508 = vrot.slane %v3494, %v3507
  %v3509 = vlaneseq
  %v3510 = vshrl.u32 %v3509, 7
  %v3511 = vsub.s32 0, %v3510
  %v3512 = vrot.slane %v3501, %v3511
  %v3513 = vlaneseq
  %v3514 = vshrl.u32 %v3513, 7
  %v3515 = vsub.s32 0, %v3514
  %v3516 = vrot.slane %v3508, %v3515
  %3517 = vrot.lane.b32.xlu0 %v3512, 96
  %v3518 = vpop.permute.xlu0 %3517
  %3519 = vrot.lane.b32.xlu0 %v3516, 96
  %v3520 = vpop.permute.xlu0 %3519
  %3523 = vst.msk [vmem:[%s3 + $0x5] sm:$0x1] %vm1572, %v3518
  %3524 = vst.msk [vmem:[%s3 + $0xd] sm:$0x1] %vm1572, %v3520
  %v3525 = vlaneseq
  %v3526 = vshrl.u32 %v3525, 7
  %v3527 = vsub.s32 %v1190, %v3526
  %v3528 = vrot.slane %v3278, %v3527
  %v3529 = vlaneseq
  %v3530 = vshrl.u32 %v3529, 7
  %v3531 = vsub.s32 %v1190, %v3530
  %v3532 = vrot.slane %v3283, %v3531
  %3535 = vst.msk [vmem:[%s4 + $0x5] sm:$0x1] %vm1585, %v3528
  %3536 = vst.msk [vmem:[%s4 + $0xd] sm:$0x1] %vm1585, %v3532
  // Predicated region
  $region14: #{seq2seq_forward.1} parent=0 // pred_check
    _
  $region15: #{seq2seq_forward.1} parent=0 // pred_check_branch
    %3538 = sbr.rel (0) target = $region17
  $region16: #{seq2seq_forward.1} parent=0 // pred_region
    _
  $region17: #{seq2seq_forward.1} parent=0 // pred_fallthru
    _
  // Predicated region
  $region18: #{seq2seq_forward.1} parent=0 // pred_check
    _
  $region19: #{seq2seq_forward.1} parent=0 // pred_check_branch
    %3540 = sbr.rel (0) target = $region21
  $region20: #{seq2seq_forward.1} parent=0 // pred_region
    _
  $region21: #{seq2seq_forward.1} parent=0 // pred_fallthru
    _
  // Predicated region
  $region22: #{seq2seq_forward.1} parent=0 // pred_check
    _
  $region23: #{seq2seq_forward.1} parent=0 // pred_check_branch
    %3542 = sbr.rel (0) target = $region25
  $region24: #{seq2seq_forward.1} parent=0 // pred_region
    _
  $region25: #{seq2seq_forward.1} parent=0 // pred_fallthru
    _
  // Predicated region
  $region26: #{seq2seq_forward.1} parent=0 // pred_check
    _
  $region27: #{seq2seq_forward.1} parent=0 // pred_check_branch
    %3544 = sbr.rel (0) target = $region29
  $region28: #{seq2seq_forward.1} parent=0 // pred_region
    _
  $region29: #{seq2seq_forward.1} parent=0 // pred_fallthru
    _

</llo_original>
